<compile_context>
chip_gen: v6e
topology: v6e:2x2x1
jax: 0.10.0
libtpu: 0.0.40
codegen_flags: <defaults>
</compile_context>

<pallas_src>
import functools

import jax
import jax.numpy as jnp
from jax.experimental import pallas as pl
from jax.experimental.pallas import tpu as pltpu


# -----------------------------------------------------------------------------
# Fused kernel: all GRU layers + classifier head in one call.
#   refs layout:
#     [0]                      x2d        (T*Bp, E)      time-major embedded input
#     [1 .. 4L]                per layer: w_ih (E_in,3H), w_hh (H,3H),
#                                          b_ih (1,3H),   b_hh (1,3H)
#     [4L+1 .. 4L+4]           fc1_w (H,64), fc1_b (1,64), fc2_w (64,C), fc2_b (1,C)
#     [4L+5]                   out        (Bp, C)
#     [4L+6], [4L+7]           scratch: gi (T*Bp, 3H), seq (T*Bp, H)
# -----------------------------------------------------------------------------
def _fused_gru_kernel(num_layers, T, Bp, H, *refs):
    x_ref = refs[0]
    layer_refs = refs[1:1 + 4 * num_layers]
    w1_ref, b1_ref, w2_ref, b2_ref = refs[1 + 4 * num_layers:5 + 4 * num_layers]
    out_ref = refs[5 + 4 * num_layers]
    gi_ref = refs[6 + 4 * num_layers]
    seq_ref = refs[7 + 4 * num_layers]

    h = jnp.zeros((Bp, H), jnp.float32)

    for l in range(num_layers):
        w_ih = layer_refs[4 * l + 0][...]          # (E_in, 3H)
        w_hh = layer_refs[4 * l + 1][...]          # (H, 3H)
        b_ih = layer_refs[4 * l + 2][...]          # (1, 3H)
        b_hh = layer_refs[4 * l + 3][...]          # (1, 3H)

        # Hoisted input projection: one big lane-dense matmul over all timesteps.
        inp = x_ref[...] if l == 0 else seq_ref[...]           # (T*Bp, E_in)
        gi_ref[...] = (jnp.dot(inp, w_ih, preferred_element_type=jnp.float32)
                       + b_ih)

        last_layer = (l == num_layers - 1)

        def step(t, h_prev, *, w_hh=w_hh, b_hh=b_hh, last_layer=last_layer):
            row = pl.multiple_of(t * Bp, Bp)
            gi_t = gi_ref[pl.ds(row, Bp), :]                    # (Bp, 3H)
            gh = (jnp.dot(h_prev, w_hh, preferred_element_type=jnp.float32)
                  + b_hh)                                       # (Bp, 3H)
            r = jax.nn.sigmoid(gi_t[:, 0:H] + gh[:, 0:H])
            z = jax.nn.sigmoid(gi_t[:, H:2 * H] + gh[:, H:2 * H])
            n = jnp.tanh(gi_t[:, 2 * H:3 * H] + r * gh[:, 2 * H:3 * H])
            h_new = (1.0 - z) * n + z * h_prev
            if not last_layer:
                # Sequence stays VMEM-resident; it is only the next layer's input.
                seq_ref[pl.ds(row, Bp), :] = h_new
            return h_new

        h = jax.lax.fori_loop(0, T, step, jnp.zeros((Bp, H), jnp.float32),
                              unroll=True)

    # Classifier head on the final hidden state (== outputs[:, -1, :]).
    z1 = jnp.maximum(
        jnp.dot(h, w1_ref[...], preferred_element_type=jnp.float32) + b1_ref[...],
        0.0)
    # TODO(synk): nn.Dropout in training mode would mask/scale here; eval == identity.
    out_ref[...] = (jnp.dot(z1, w2_ref[...], preferred_element_type=jnp.float32)
                    + b2_ref[...]).astype(out_ref.dtype)


# -----------------------------------------------------------------------------
# Full forward pass.  Embedding gather + batch padding + time-major reshape are
# glue in plain JAX; everything else is one fused Pallas kernel.
# -----------------------------------------------------------------------------
def gru_rnn_forward(params, token_ids):
    B, T = token_ids.shape
    E = params["embedding"].shape[1]
    H = params["gru_layers"][0]["w_hh"].shape[0]
    C = params["fc2_w"].shape[-1]
    L = len(params["gru_layers"])

    # Pad batch to a multiple of 8 sublanes; padded rows are sliced off at the end.
    Bp = ((B + 7) // 8) * 8
    tok_p = jnp.pad(token_ids, ((0, Bp - B), (0, 0)))

    x = params["embedding"][tok_p].astype(jnp.float32)          # (Bp, T, E)
    # Time-major, flattened: rows [t*Bp : (t+1)*Bp] are timestep t.
    x2d = jnp.swapaxes(x, 0, 1).reshape(T * Bp, E)

    flat = [x2d]
    for layer in params["gru_layers"]:
        flat += [layer["w_ih"], layer["w_hh"], layer["b_ih"], layer["b_hh"]]
    flat += [params["fc1_w"], params["fc1_b"], params["fc2_w"], params["fc2_b"]]

    out_p = pl.pallas_call(
        functools.partial(_fused_gru_kernel, L, T, Bp, H),
        out_shape=jax.ShapeDtypeStruct((Bp, C), jnp.float32),
        scratch_shapes=[
            pltpu.VMEM((T * Bp, 3 * H), jnp.float32),   # hoisted input projections gi
            pltpu.VMEM((T * Bp, H), jnp.float32),       # per-layer hidden sequence
        ],
    )(*flat)
    return out_p[:B]


# -----------------------------------------------------------------------------
# Pure-JAX reference (for correctness check)
# -----------------------------------------------------------------------------
def gru_rnn_reference(params, token_ids):
    x = params["embedding"][token_ids].astype(jnp.float32)
    B = x.shape[0]
    for layer in params["gru_layers"]:
        w_ih, w_hh = layer["w_ih"], layer["w_hh"]
        b_ih, b_hh = layer["b_ih"], layer["b_hh"]
        H = w_hh.shape[0]

        def step(h, x_t):
            gi = x_t @ w_ih + b_ih
            gh = h @ w_hh + b_hh
            r = jax.nn.sigmoid(gi[:, :H] + gh[:, :H])
            z = jax.nn.sigmoid(gi[:, H:2 * H] + gh[:, H:2 * H])
            n = jnp.tanh(gi[:, 2 * H:] + r * gh[:, 2 * H:])
            h_new = (1.0 - z) * n + z * h
            return h_new, h_new

        h0 = jnp.zeros((B, H), jnp.float32)
        _, seq = jax.lax.scan(step, h0, jnp.swapaxes(x, 0, 1))
        x = jnp.swapaxes(seq, 0, 1)
    h_last = x[:, -1, :]
    z1 = jnp.maximum(h_last @ params["fc1_w"] + params["fc1_b"], 0.0)
    return z1 @ params["fc2_w"] + params["fc2_b"]


# -----------------------------------------------------------------------------
# Deterministic parameter construction (shapes from GRURNN.__init__), gate
# weights pre-concatenated along the output dim in order (r, z, n).
# -----------------------------------------------------------------------------
def make_params(key, vocab_size, embedding_dim, hidden_size, num_layers, num_classes):
    keys = jax.random.split(key, 5 + 4 * num_layers)
    k = iter(keys)
    scale = 1.0 / jnp.sqrt(hidden_size)

    def unif(kk, shape):
        return jax.random.uniform(kk, shape, jnp.float32, -scale, scale)

    params = {
        "embedding": jax.random.normal(next(k), (vocab_size, embedding_dim), jnp.float32),
        "gru_layers": [],
        "fc1_w": unif(next(k), (hidden_size, 64)),
        "fc1_b": unif(next(k), (1, 64)),
        "fc2_w": unif(next(k), (64, num_classes)),
        "fc2_b": unif(next(k), (1, num_classes)),
    }
    for l in range(num_layers):
        in_dim = embedding_dim if l == 0 else hidden_size
        params["gru_layers"].append({
            "w_ih": unif(next(k), (in_dim, 3 * hidden_size)),        # [r | z | n]
            "w_hh": unif(next(k), (hidden_size, 3 * hidden_size)),
            "b_ih": unif(next(k), (1, 3 * hidden_size)),
            "b_hh": unif(next(k), (1, 3 * hidden_size)),
        })
    return params


if __name__ == "__main__":
    # Small, forward-consistent shapes.
    vocab_size = 100
    embedding_dim = 32
    hidden_size = 32
    num_layers = 2
    num_classes = 4
    batch = 2
    seq_len = 8

    root = jax.random.PRNGKey(0)
    k_param, k_tok = jax.random.split(root, 2)
    params = make_params(k_param, vocab_size, embedding_dim, hidden_size,
                         num_layers, num_classes)

    token_ids = jax.random.randint(k_tok, (batch, seq_len), 0, vocab_size, jnp.int32)
    # seq_lengths is accepted by the PyTorch forward but unused in its body.
    seq_lengths = jnp.full((batch,), seq_len, jnp.int32)

    out = jax.block_until_ready(gru_rnn_forward(params, token_ids))
    ref = jax.block_until_ready(gru_rnn_reference(params, token_ids))

    assert out.shape == (batch, num_classes)
    assert jnp.allclose(out, ref, rtol=1e-3, atol=1e-3), (out, ref)
    print("KERNEL_OK")
</pallas_src>

<mosaic_0001>
module attributes {stable_mosaic.version = 11 : i64} {
  func.func @_fused_gru_kernel(%arg0: memref<64x32xf32, #tpu.memory_space<vmem>>, %arg1: memref<32x96xf32, #tpu.memory_space<vmem>>, %arg2: memref<32x96xf32, #tpu.memory_space<vmem>>, %arg3: memref<1x96xf32, #tpu.memory_space<vmem>>, %arg4: memref<1x96xf32, #tpu.memory_space<vmem>>, %arg5: memref<32x96xf32, #tpu.memory_space<vmem>>, %arg6: memref<32x96xf32, #tpu.memory_space<vmem>>, %arg7: memref<1x96xf32, #tpu.memory_space<vmem>>, %arg8: memref<1x96xf32, #tpu.memory_space<vmem>>, %arg9: memref<32x64xf32, #tpu.memory_space<vmem>>, %arg10: memref<1x64xf32, #tpu.memory_space<vmem>>, %arg11: memref<64x4xf32, #tpu.memory_space<vmem>>, %arg12: memref<1x4xf32, #tpu.memory_space<vmem>>, %arg13: memref<8x4xf32, #tpu.memory_space<vmem>>, %arg14: memref<64x96xf32, #tpu.memory_space<vmem>>, %arg15: memref<64x32xf32, #tpu.memory_space<vmem>>) attributes {dimension_semantics = [], scalar_prefetch = 0 : i64, scratch_operands = 2 : i64, tpu.core_type = #tpu.core_type<tc>} {
    %c0 = arith.constant 0 : index
    %c0_0 = arith.constant 0 : index
    %0 = vector.load %arg1[%c0, %c0_0] : memref<32x96xf32, #tpu.memory_space<vmem>>, vector<32x96xf32>
    %c0_1 = arith.constant 0 : index
    %c0_2 = arith.constant 0 : index
    %1 = vector.load %arg2[%c0_1, %c0_2] : memref<32x96xf32, #tpu.memory_space<vmem>>, vector<32x96xf32>
    %c0_3 = arith.constant 0 : index
    %c0_4 = arith.constant 0 : index
    %2 = vector.load %arg3[%c0_3, %c0_4] : memref<1x96xf32, #tpu.memory_space<vmem>>, vector<1x96xf32>
    %c0_5 = arith.constant 0 : index
    %c0_6 = arith.constant 0 : index
    %3 = vector.load %arg4[%c0_5, %c0_6] : memref<1x96xf32, #tpu.memory_space<vmem>>, vector<1x96xf32>
    %c0_7 = arith.constant 0 : index
    %c0_8 = arith.constant 0 : index
    %4 = vector.load %arg0[%c0_7, %c0_8] : memref<64x32xf32, #tpu.memory_space<vmem>>, vector<64x32xf32>
    %cst = arith.constant dense<0.000000e+00> : vector<64x96xf32>
    %5 = tpu.matmul %4, %0, %cst {dimension_numbers = #tpu.dot_dimension_numbers<[1], [0], [0], [1], [0, 0, 1, 1], [], []>} : vector<64x32xf32>, vector<32x96xf32>, vector<64x96xf32> -> vector<64x96xf32>
    %6 = vector.broadcast %2 : vector<1x96xf32> to vector<64x96xf32>
    %7 = arith.addf %5, %6 : vector<64x96xf32>
    %c0_9 = arith.constant 0 : index
    %c0_10 = arith.constant 0 : index
    %8 = vector.load %arg14[%c0_9, %c0_10] : memref<64x96xf32, #tpu.memory_space<vmem>>, vector<64x96xf32>
    tpu.vector_store %arg14[%c0_9, %c0_10], %7 {strides = array<i32>} : memref<64x96xf32, #tpu.memory_space<vmem>>, vector<64x96xf32>,
    %cst_11 = arith.constant 0.000000e+00 : f32
    %9 = vector.broadcast %cst_11 : f32 to vector<8x32xf32>
    %c0_i32 = arith.constant 0 : i32
    %c8_i32 = arith.constant 8 : i32
    %10 = arith.muli %c0_i32, %c8_i32 : i32
    %11 = tpu.assume_multiple %10, 8 : i32
    %12 = arith.index_cast %11 : i32 to index
    %c0_12 = arith.constant 0 : index
    %13 = vector.load %arg14[%12, %c0_12] : memref<64x96xf32, #tpu.memory_space<vmem>>, vector<8x96xf32>
    %cst_13 = arith.constant dense<0.000000e+00> : vector<8x96xf32>
    %14 = tpu.matmul %9, %1, %cst_13 {dimension_numbers = #tpu.dot_dimension_numbers<[1], [0], [0], [1], [0, 0, 1, 1], [], []>} : vector<8x32xf32>, vector<32x96xf32>, vector<8x96xf32> -> vector<8x96xf32>
    %15 = vector.broadcast %3 : vector<1x96xf32> to vector<8x96xf32>
    %16 = arith.addf %14, %15 : vector<8x96xf32>
    %17 = vector.extract_strided_slice %13 {offsets = [0, 0], sizes = [8, 32], strides = [1, 1]} : vector<8x96xf32> to vector<8x32xf32>
    %18 = vector.extract_strided_slice %16 {offsets = [0, 0], sizes = [8, 32], strides = [1, 1]} : vector<8x96xf32> to vector<8x32xf32>
    %19 = arith.addf %17, %18 : vector<8x32xf32>
    %20 = arith.negf %19 : vector<8x32xf32>
    %21 = math.exp %20 : vector<8x32xf32>
    %cst_14 = arith.constant 1.000000e+00 : f32
    %22 = vector.broadcast %cst_14 : f32 to vector<8x32xf32>
    %23 = arith.addf %22, %21 : vector<8x32xf32>
    %24 = arith.divf %22, %23 : vector<8x32xf32>
    %25 = vector.extract_strided_slice %13 {offsets = [0, 32], sizes = [8, 32], strides = [1, 1]} : vector<8x96xf32> to vector<8x32xf32>
    %26 = vector.extract_strided_slice %16 {offsets = [0, 32], sizes = [8, 32], strides = [1, 1]} : vector<8x96xf32> to vector<8x32xf32>
    %27 = arith.addf %25, %26 : vector<8x32xf32>
    %28 = arith.negf %27 : vector<8x32xf32>
    %29 = math.exp %28 : vector<8x32xf32>
    %cst_15 = arith.constant 1.000000e+00 : f32
    %30 = vector.broadcast %cst_15 : f32 to vector<8x32xf32>
    %31 = arith.addf %30, %29 : vector<8x32xf32>
    %32 = arith.divf %30, %31 : vector<8x32xf32>
    %33 = vector.extract_strided_slice %13 {offsets = [0, 64], sizes = [8, 32], strides = [1, 1]} : vector<8x96xf32> to vector<8x32xf32>
    %34 = vector.extract_strided_slice %16 {offsets = [0, 64], sizes = [8, 32], strides = [1, 1]} : vector<8x96xf32> to vector<8x32xf32>
    %35 = arith.mulf %24, %34 : vector<8x32xf32>
    %36 = arith.addf %33, %35 : vector<8x32xf32>
    %37 = math.tanh %36 : vector<8x32xf32>
    %cst_16 = arith.constant 1.000000e+00 : f32
    %38 = vector.broadcast %cst_16 : f32 to vector<8x32xf32>
    %39 = arith.subf %38, %32 : vector<8x32xf32>
    %40 = arith.mulf %39, %37 : vector<8x32xf32>
    %41 = arith.mulf %32, %9 : vector<8x32xf32>
    %42 = arith.addf %40, %41 : vector<8x32xf32>
    %43 = arith.index_cast %11 : i32 to index
    %c0_17 = arith.constant 0 : index
    %44 = vector.load %arg15[%43, %c0_17] : memref<64x32xf32, #tpu.memory_space<vmem>>, vector<8x32xf32>
    tpu.vector_store %arg15[%43, %c0_17], %42 {strides = array<i32>} : memref<64x32xf32, #tpu.memory_space<vmem>>, vector<8x32xf32>,
    %c1_i32 = arith.constant 1 : i32
    %c8_i32_18 = arith.constant 8 : i32
    %45 = arith.muli %c1_i32, %c8_i32_18 : i32
    %46 = tpu.assume_multiple %45, 8 : i32
    %47 = arith.index_cast %46 : i32 to index
    %c0_19 = arith.constant 0 : index
    %48 = vector.load %arg14[%47, %c0_19] : memref<64x96xf32, #tpu.memory_space<vmem>>, vector<8x96xf32>
    %cst_20 = arith.constant dense<0.000000e+00> : vector<8x96xf32>
    %49 = tpu.matmul %42, %1, %cst_20 {dimension_numbers = #tpu.dot_dimension_numbers<[1], [0], [0], [1], [0, 0, 1, 1], [], []>} : vector<8x32xf32>, vector<32x96xf32>, vector<8x96xf32> -> vector<8x96xf32>
    %50 = vector.broadcast %3 : vector<1x96xf32> to vector<8x96xf32>
    %51 = arith.addf %49, %50 : vector<8x96xf32>
    %52 = vector.extract_strided_slice %48 {offsets = [0, 0], sizes = [8, 32], strides = [1, 1]} : vector<8x96xf32> to vector<8x32xf32>
    %53 = vector.extract_strided_slice %51 {offsets = [0, 0], sizes = [8, 32], strides = [1, 1]} : vector<8x96xf32> to vector<8x32xf32>
    %54 = arith.addf %52, %53 : vector<8x32xf32>
    %55 = arith.negf %54 : vector<8x32xf32>
    %56 = math.exp %55 : vector<8x32xf32>
    %cst_21 = arith.constant 1.000000e+00 : f32
    %57 = vector.broadcast %cst_21 : f32 to vector<8x32xf32>
    %58 = arith.addf %57, %56 : vector<8x32xf32>
    %59 = arith.divf %57, %58 : vector<8x32xf32>
    %60 = vector.extract_strided_slice %48 {offsets = [0, 32], sizes = [8, 32], strides = [1, 1]} : vector<8x96xf32> to vector<8x32xf32>
    %61 = vector.extract_strided_slice %51 {offsets = [0, 32], sizes = [8, 32], strides = [1, 1]} : vector<8x96xf32> to vector<8x32xf32>
    %62 = arith.addf %60, %61 : vector<8x32xf32>
    %63 = arith.negf %62 : vector<8x32xf32>
    %64 = math.exp %63 : vector<8x32xf32>
    %cst_22 = arith.constant 1.000000e+00 : f32
    %65 = vector.broadcast %cst_22 : f32 to vector<8x32xf32>
    %66 = arith.addf %65, %64 : vector<8x32xf32>
    %67 = arith.divf %65, %66 : vector<8x32xf32>
    %68 = vector.extract_strided_slice %48 {offsets = [0, 64], sizes = [8, 32], strides = [1, 1]} : vector<8x96xf32> to vector<8x32xf32>
    %69 = vector.extract_strided_slice %51 {offsets = [0, 64], sizes = [8, 32], strides = [1, 1]} : vector<8x96xf32> to vector<8x32xf32>
    %70 = arith.mulf %59, %69 : vector<8x32xf32>
    %71 = arith.addf %68, %70 : vector<8x32xf32>
    %72 = math.tanh %71 : vector<8x32xf32>
    %cst_23 = arith.constant 1.000000e+00 : f32
    %73 = vector.broadcast %cst_23 : f32 to vector<8x32xf32>
    %74 = arith.subf %73, %67 : vector<8x32xf32>
    %75 = arith.mulf %74, %72 : vector<8x32xf32>
    %76 = arith.mulf %67, %42 : vector<8x32xf32>
    %77 = arith.addf %75, %76 : vector<8x32xf32>
    %78 = arith.index_cast %46 : i32 to index
    %c0_24 = arith.constant 0 : index
    %79 = vector.load %arg15[%78, %c0_24] : memref<64x32xf32, #tpu.memory_space<vmem>>, vector<8x32xf32>
    tpu.vector_store %arg15[%78, %c0_24], %77 {strides = array<i32>} : memref<64x32xf32, #tpu.memory_space<vmem>>, vector<8x32xf32>,
    %c2_i32 = arith.constant 2 : i32
    %c8_i32_25 = arith.constant 8 : i32
    %80 = arith.muli %c2_i32, %c8_i32_25 : i32
    %81 = tpu.assume_multiple %80, 8 : i32
    %82 = arith.index_cast %81 : i32 to index
    %c0_26 = arith.constant 0 : index
    %83 = vector.load %arg14[%82, %c0_26] : memref<64x96xf32, #tpu.memory_space<vmem>>, vector<8x96xf32>
    %cst_27 = arith.constant dense<0.000000e+00> : vector<8x96xf32>
    %84 = tpu.matmul %77, %1, %cst_27 {dimension_numbers = #tpu.dot_dimension_numbers<[1], [0], [0], [1], [0, 0, 1, 1], [], []>} : vector<8x32xf32>, vector<32x96xf32>, vector<8x96xf32> -> vector<8x96xf32>
    %85 = vector.broadcast %3 : vector<1x96xf32> to vector<8x96xf32>
    %86 = arith.addf %84, %85 : vector<8x96xf32>
    %87 = vector.extract_strided_slice %83 {offsets = [0, 0], sizes = [8, 32], strides = [1, 1]} : vector<8x96xf32> to vector<8x32xf32>
    %88 = vector.extract_strided_slice %86 {offsets = [0, 0], sizes = [8, 32], strides = [1, 1]} : vector<8x96xf32> to vector<8x32xf32>
    %89 = arith.addf %87, %88 : vector<8x32xf32>
    %90 = arith.negf %89 : vector<8x32xf32>
    %91 = math.exp %90 : vector<8x32xf32>
    %cst_28 = arith.constant 1.000000e+00 : f32
    %92 = vector.broadcast %cst_28 : f32 to vector<8x32xf32>
    %93 = arith.addf %92, %91 : vector<8x32xf32>
    %94 = arith.divf %92, %93 : vector<8x32xf32>
    %95 = vector.extract_strided_slice %83 {offsets = [0, 32], sizes = [8, 32], strides = [1, 1]} : vector<8x96xf32> to vector<8x32xf32>
    %96 = vector.extract_strided_slice %86 {offsets = [0, 32], sizes = [8, 32], strides = [1, 1]} : vector<8x96xf32> to vector<8x32xf32>
    %97 = arith.addf %95, %96 : vector<8x32xf32>
    %98 = arith.negf %97 : vector<8x32xf32>
    %99 = math.exp %98 : vector<8x32xf32>
    %cst_29 = arith.constant 1.000000e+00 : f32
    %100 = vector.broadcast %cst_29 : f32 to vector<8x32xf32>
    %101 = arith.addf %100, %99 : vector<8x32xf32>
    %102 = arith.divf %100, %101 : vector<8x32xf32>
    %103 = vector.extract_strided_slice %83 {offsets = [0, 64], sizes = [8, 32], strides = [1, 1]} : vector<8x96xf32> to vector<8x32xf32>
    %104 = vector.extract_strided_slice %86 {offsets = [0, 64], sizes = [8, 32], strides = [1, 1]} : vector<8x96xf32> to vector<8x32xf32>
    %105 = arith.mulf %94, %104 : vector<8x32xf32>
    %106 = arith.addf %103, %105 : vector<8x32xf32>
    %107 = math.tanh %106 : vector<8x32xf32>
    %cst_30 = arith.constant 1.000000e+00 : f32
    %108 = vector.broadcast %cst_30 : f32 to vector<8x32xf32>
    %109 = arith.subf %108, %102 : vector<8x32xf32>
    %110 = arith.mulf %109, %107 : vector<8x32xf32>
    %111 = arith.mulf %102, %77 : vector<8x32xf32>
    %112 = arith.addf %110, %111 : vector<8x32xf32>
    %113 = arith.index_cast %81 : i32 to index
    %c0_31 = arith.constant 0 : index
    %114 = vector.load %arg15[%113, %c0_31] : memref<64x32xf32, #tpu.memory_space<vmem>>, vector<8x32xf32>
    tpu.vector_store %arg15[%113, %c0_31], %112 {strides = array<i32>} : memref<64x32xf32, #tpu.memory_space<vmem>>, vector<8x32xf32>,
    %c3_i32 = arith.constant 3 : i32
    %c8_i32_32 = arith.constant 8 : i32
    %115 = arith.muli %c3_i32, %c8_i32_32 : i32
    %116 = tpu.assume_multiple %115, 8 : i32
    %117 = arith.index_cast %116 : i32 to index
    %c0_33 = arith.constant 0 : index
    %118 = vector.load %arg14[%117, %c0_33] : memref<64x96xf32, #tpu.memory_space<vmem>>, vector<8x96xf32>
    %cst_34 = arith.constant dense<0.000000e+00> : vector<8x96xf32>
    %119 = tpu.matmul %112, %1, %cst_34 {dimension_numbers = #tpu.dot_dimension_numbers<[1], [0], [0], [1], [0, 0, 1, 1], [], []>} : vector<8x32xf32>, vector<32x96xf32>, vector<8x96xf32> -> vector<8x96xf32>
    %120 = vector.broadcast %3 : vector<1x96xf32> to vector<8x96xf32>
    %121 = arith.addf %119, %120 : vector<8x96xf32>
    %122 = vector.extract_strided_slice %118 {offsets = [0, 0], sizes = [8, 32], strides = [1, 1]} : vector<8x96xf32> to vector<8x32xf32>
    %123 = vector.extract_strided_slice %121 {offsets = [0, 0], sizes = [8, 32], strides = [1, 1]} : vector<8x96xf32> to vector<8x32xf32>
    %124 = arith.addf %122, %123 : vector<8x32xf32>
    %125 = arith.negf %124 : vector<8x32xf32>
    %126 = math.exp %125 : vector<8x32xf32>
    %cst_35 = arith.constant 1.000000e+00 : f32
    %127 = vector.broadcast %cst_35 : f32 to vector<8x32xf32>
    %128 = arith.addf %127, %126 : vector<8x32xf32>
    %129 = arith.divf %127, %128 : vector<8x32xf32>
    %130 = vector.extract_strided_slice %118 {offsets = [0, 32], sizes = [8, 32], strides = [1, 1]} : vector<8x96xf32> to vector<8x32xf32>
    %131 = vector.extract_strided_slice %121 {offsets = [0, 32], sizes = [8, 32], strides = [1, 1]} : vector<8x96xf32> to vector<8x32xf32>
    %132 = arith.addf %130, %131 : vector<8x32xf32>
    %133 = arith.negf %132 : vector<8x32xf32>
    %134 = math.exp %133 : vector<8x32xf32>
    %cst_36 = arith.constant 1.000000e+00 : f32
    %135 = vector.broadcast %cst_36 : f32 to vector<8x32xf32>
    %136 = arith.addf %135, %134 : vector<8x32xf32>
    %137 = arith.divf %135, %136 : vector<8x32xf32>
    %138 = vector.extract_strided_slice %118 {offsets = [0, 64], sizes = [8, 32], strides = [1, 1]} : vector<8x96xf32> to vector<8x32xf32>
    %139 = vector.extract_strided_slice %121 {offsets = [0, 64], sizes = [8, 32], strides = [1, 1]} : vector<8x96xf32> to vector<8x32xf32>
    %140 = arith.mulf %129, %139 : vector<8x32xf32>
    %141 = arith.addf %138, %140 : vector<8x32xf32>
    %142 = math.tanh %141 : vector<8x32xf32>
    %cst_37 = arith.constant 1.000000e+00 : f32
    %143 = vector.broadcast %cst_37 : f32 to vector<8x32xf32>
    %144 = arith.subf %143, %137 : vector<8x32xf32>
    %145 = arith.mulf %144, %142 : vector<8x32xf32>
    %146 = arith.mulf %137, %112 : vector<8x32xf32>
    %147 = arith.addf %145, %146 : vector<8x32xf32>
    %148 = arith.index_cast %116 : i32 to index
    %c0_38 = arith.constant 0 : index
    %149 = vector.load %arg15[%148, %c0_38] : memref<64x32xf32, #tpu.memory_space<vmem>>, vector<8x32xf32>
    tpu.vector_store %arg15[%148, %c0_38], %147 {strides = array<i32>} : memref<64x32xf32, #tpu.memory_space<vmem>>, vector<8x32xf32>,
    %c4_i32 = arith.constant 4 : i32
    %c8_i32_39 = arith.constant 8 : i32
    %150 = arith.muli %c4_i32, %c8_i32_39 : i32
    %151 = tpu.assume_multiple %150, 8 : i32
    %152 = arith.index_cast %151 : i32 to index
    %c0_40 = arith.constant 0 : index
    %153 = vector.load %arg14[%152, %c0_40] : memref<64x96xf32, #tpu.memory_space<vmem>>, vector<8x96xf32>
    %cst_41 = arith.constant dense<0.000000e+00> : vector<8x96xf32>
    %154 = tpu.matmul %147, %1, %cst_41 {dimension_numbers = #tpu.dot_dimension_numbers<[1], [0], [0], [1], [0, 0, 1, 1], [], []>} : vector<8x32xf32>, vector<32x96xf32>, vector<8x96xf32> -> vector<8x96xf32>
    %155 = vector.broadcast %3 : vector<1x96xf32> to vector<8x96xf32>
    %156 = arith.addf %154, %155 : vector<8x96xf32>
    %157 = vector.extract_strided_slice %153 {offsets = [0, 0], sizes = [8, 32], strides = [1, 1]} : vector<8x96xf32> to vector<8x32xf32>
    %158 = vector.extract_strided_slice %156 {offsets = [0, 0], sizes = [8, 32], strides = [1, 1]} : vector<8x96xf32> to vector<8x32xf32>
    %159 = arith.addf %157, %158 : vector<8x32xf32>
    %160 = arith.negf %159 : vector<8x32xf32>
    %161 = math.exp %160 : vector<8x32xf32>
    %cst_42 = arith.constant 1.000000e+00 : f32
    %162 = vector.broadcast %cst_42 : f32 to vector<8x32xf32>
    %163 = arith.addf %162, %161 : vector<8x32xf32>
    %164 = arith.divf %162, %163 : vector<8x32xf32>
    %165 = vector.extract_strided_slice %153 {offsets = [0, 32], sizes = [8, 32], strides = [1, 1]} : vector<8x96xf32> to vector<8x32xf32>
    %166 = vector.extract_strided_slice %156 {offsets = [0, 32], sizes = [8, 32], strides = [1, 1]} : vector<8x96xf32> to vector<8x32xf32>
    %167 = arith.addf %165, %166 : vector<8x32xf32>
    %168 = arith.negf %167 : vector<8x32xf32>
    %169 = math.exp %168 : vector<8x32xf32>
    %cst_43 = arith.constant 1.000000e+00 : f32
    %170 = vector.broadcast %cst_43 : f32 to vector<8x32xf32>
    %171 = arith.addf %170, %169 : vector<8x32xf32>
    %172 = arith.divf %170, %171 : vector<8x32xf32>
    %173 = vector.extract_strided_slice %153 {offsets = [0, 64], sizes = [8, 32], strides = [1, 1]} : vector<8x96xf32> to vector<8x32xf32>
    %174 = vector.extract_strided_slice %156 {offsets = [0, 64], sizes = [8, 32], strides = [1, 1]} : vector<8x96xf32> to vector<8x32xf32>
    %175 = arith.mulf %164, %174 : vector<8x32xf32>
    %176 = arith.addf %173, %175 : vector<8x32xf32>
    %177 = math.tanh %176 : vector<8x32xf32>
    %cst_44 = arith.constant 1.000000e+00 : f32
    %178 = vector.broadcast %cst_44 : f32 to vector<8x32xf32>
    %179 = arith.subf %178, %172 : vector<8x32xf32>
    %180 = arith.mulf %179, %177 : vector<8x32xf32>
    %181 = arith.mulf %172, %147 : vector<8x32xf32>
    %182 = arith.addf %180, %181 : vector<8x32xf32>
    %183 = arith.index_cast %151 : i32 to index
    %c0_45 = arith.constant 0 : index
    %184 = vector.load %arg15[%183, %c0_45] : memref<64x32xf32, #tpu.memory_space<vmem>>, vector<8x32xf32>
    tpu.vector_store %arg15[%183, %c0_45], %182 {strides = array<i32>} : memref<64x32xf32, #tpu.memory_space<vmem>>, vector<8x32xf32>,
    %c5_i32 = arith.constant 5 : i32
    %c8_i32_46 = arith.constant 8 : i32
    %185 = arith.muli %c5_i32, %c8_i32_46 : i32
    %186 = tpu.assume_multiple %185, 8 : i32
    %187 = arith.index_cast %186 : i32 to index
    %c0_47 = arith.constant 0 : index
    %188 = vector.load %arg14[%187, %c0_47] : memref<64x96xf32, #tpu.memory_space<vmem>>, vector<8x96xf32>
    %cst_48 = arith.constant dense<0.000000e+00> : vector<8x96xf32>
    %189 = tpu.matmul %182, %1, %cst_48 {dimension_numbers = #tpu.dot_dimension_numbers<[1], [0], [0], [1], [0, 0, 1, 1], [], []>} : vector<8x32xf32>, vector<32x96xf32>, vector<8x96xf32> -> vector<8x96xf32>
    %190 = vector.broadcast %3 : vector<1x96xf32> to vector<8x96xf32>
    %191 = arith.addf %189, %190 : vector<8x96xf32>
    %192 = vector.extract_strided_slice %188 {offsets = [0, 0], sizes = [8, 32], strides = [1, 1]} : vector<8x96xf32> to vector<8x32xf32>
    %193 = vector.extract_strided_slice %191 {offsets = [0, 0], sizes = [8, 32], strides = [1, 1]} : vector<8x96xf32> to vector<8x32xf32>
    %194 = arith.addf %192, %193 : vector<8x32xf32>
    %195 = arith.negf %194 : vector<8x32xf32>
    %196 = math.exp %195 : vector<8x32xf32>
    %cst_49 = arith.constant 1.000000e+00 : f32
    %197 = vector.broadcast %cst_49 : f32 to vector<8x32xf32>
    %198 = arith.addf %197, %196 : vector<8x32xf32>
    %199 = arith.divf %197, %198 : vector<8x32xf32>
    %200 = vector.extract_strided_slice %188 {offsets = [0, 32], sizes = [8, 32], strides = [1, 1]} : vector<8x96xf32> to vector<8x32xf32>
    %201 = vector.extract_strided_slice %191 {offsets = [0, 32], sizes = [8, 32], strides = [1, 1]} : vector<8x96xf32> to vector<8x32xf32>
    %202 = arith.addf %200, %201 : vector<8x32xf32>
    %203 = arith.negf %202 : vector<8x32xf32>
    %204 = math.exp %203 : vector<8x32xf32>
    %cst_50 = arith.constant 1.000000e+00 : f32
    %205 = vector.broadcast %cst_50 : f32 to vector<8x32xf32>
    %206 = arith.addf %205, %204 : vector<8x32xf32>
    %207 = arith.divf %205, %206 : vector<8x32xf32>
    %208 = vector.extract_strided_slice %188 {offsets = [0, 64], sizes = [8, 32], strides = [1, 1]} : vector<8x96xf32> to vector<8x32xf32>
    %209 = vector.extract_strided_slice %191 {offsets = [0, 64], sizes = [8, 32], strides = [1, 1]} : vector<8x96xf32> to vector<8x32xf32>
    %210 = arith.mulf %199, %209 : vector<8x32xf32>
    %211 = arith.addf %208, %210 : vector<8x32xf32>
    %212 = math.tanh %211 : vector<8x32xf32>
    %cst_51 = arith.constant 1.000000e+00 : f32
    %213 = vector.broadcast %cst_51 : f32 to vector<8x32xf32>
    %214 = arith.subf %213, %207 : vector<8x32xf32>
    %215 = arith.mulf %214, %212 : vector<8x32xf32>
    %216 = arith.mulf %207, %182 : vector<8x32xf32>
    %217 = arith.addf %215, %216 : vector<8x32xf32>
    %218 = arith.index_cast %186 : i32 to index
    %c0_52 = arith.constant 0 : index
    %219 = vector.load %arg15[%218, %c0_52] : memref<64x32xf32, #tpu.memory_space<vmem>>, vector<8x32xf32>
    tpu.vector_store %arg15[%218, %c0_52], %217 {strides = array<i32>} : memref<64x32xf32, #tpu.memory_space<vmem>>, vector<8x32xf32>,
    %c6_i32 = arith.constant 6 : i32
    %c8_i32_53 = arith.constant 8 : i32
    %220 = arith.muli %c6_i32, %c8_i32_53 : i32
    %221 = tpu.assume_multiple %220, 8 : i32
    %222 = arith.index_cast %221 : i32 to index
    %c0_54 = arith.constant 0 : index
    %223 = vector.load %arg14[%222, %c0_54] : memref<64x96xf32, #tpu.memory_space<vmem>>, vector<8x96xf32>
    %cst_55 = arith.constant dense<0.000000e+00> : vector<8x96xf32>
    %224 = tpu.matmul %217, %1, %cst_55 {dimension_numbers = #tpu.dot_dimension_numbers<[1], [0], [0], [1], [0, 0, 1, 1], [], []>} : vector<8x32xf32>, vector<32x96xf32>, vector<8x96xf32> -> vector<8x96xf32>
    %225 = vector.broadcast %3 : vector<1x96xf32> to vector<8x96xf32>
    %226 = arith.addf %224, %225 : vector<8x96xf32>
    %227 = vector.extract_strided_slice %223 {offsets = [0, 0], sizes = [8, 32], strides = [1, 1]} : vector<8x96xf32> to vector<8x32xf32>
    %228 = vector.extract_strided_slice %226 {offsets = [0, 0], sizes = [8, 32], strides = [1, 1]} : vector<8x96xf32> to vector<8x32xf32>
    %229 = arith.addf %227, %228 : vector<8x32xf32>
    %230 = arith.negf %229 : vector<8x32xf32>
    %231 = math.exp %230 : vector<8x32xf32>
    %cst_56 = arith.constant 1.000000e+00 : f32
    %232 = vector.broadcast %cst_56 : f32 to vector<8x32xf32>
    %233 = arith.addf %232, %231 : vector<8x32xf32>
    %234 = arith.divf %232, %233 : vector<8x32xf32>
    %235 = vector.extract_strided_slice %223 {offsets = [0, 32], sizes = [8, 32], strides = [1, 1]} : vector<8x96xf32> to vector<8x32xf32>
    %236 = vector.extract_strided_slice %226 {offsets = [0, 32], sizes = [8, 32], strides = [1, 1]} : vector<8x96xf32> to vector<8x32xf32>
    %237 = arith.addf %235, %236 : vector<8x32xf32>
    %238 = arith.negf %237 : vector<8x32xf32>
    %239 = math.exp %238 : vector<8x32xf32>
    %cst_57 = arith.constant 1.000000e+00 : f32
    %240 = vector.broadcast %cst_57 : f32 to vector<8x32xf32>
    %241 = arith.addf %240, %239 : vector<8x32xf32>
    %242 = arith.divf %240, %241 : vector<8x32xf32>
    %243 = vector.extract_strided_slice %223 {offsets = [0, 64], sizes = [8, 32], strides = [1, 1]} : vector<8x96xf32> to vector<8x32xf32>
    %244 = vector.extract_strided_slice %226 {offsets = [0, 64], sizes = [8, 32], strides = [1, 1]} : vector<8x96xf32> to vector<8x32xf32>
    %245 = arith.mulf %234, %244 : vector<8x32xf32>
    %246 = arith.addf %243, %245 : vector<8x32xf32>
    %247 = math.tanh %246 : vector<8x32xf32>
    %cst_58 = arith.constant 1.000000e+00 : f32
    %248 = vector.broadcast %cst_58 : f32 to vector<8x32xf32>
    %249 = arith.subf %248, %242 : vector<8x32xf32>
    %250 = arith.mulf %249, %247 : vector<8x32xf32>
    %251 = arith.mulf %242, %217 : vector<8x32xf32>
    %252 = arith.addf %250, %251 : vector<8x32xf32>
    %253 = arith.index_cast %221 : i32 to index
    %c0_59 = arith.constant 0 : index
    %254 = vector.load %arg15[%253, %c0_59] : memref<64x32xf32, #tpu.memory_space<vmem>>, vector<8x32xf32>
    tpu.vector_store %arg15[%253, %c0_59], %252 {strides = array<i32>} : memref<64x32xf32, #tpu.memory_space<vmem>>, vector<8x32xf32>,
    %c7_i32 = arith.constant 7 : i32
    %c8_i32_60 = arith.constant 8 : i32
    %255 = arith.muli %c7_i32, %c8_i32_60 : i32
    %256 = tpu.assume_multiple %255, 8 : i32
    %257 = arith.index_cast %256 : i32 to index
    %c0_61 = arith.constant 0 : index
    %258 = vector.load %arg14[%257, %c0_61] : memref<64x96xf32, #tpu.memory_space<vmem>>, vector<8x96xf32>
    %cst_62 = arith.constant dense<0.000000e+00> : vector<8x96xf32>
    %259 = tpu.matmul %252, %1, %cst_62 {dimension_numbers = #tpu.dot_dimension_numbers<[1], [0], [0], [1], [0, 0, 1, 1], [], []>} : vector<8x32xf32>, vector<32x96xf32>, vector<8x96xf32> -> vector<8x96xf32>
    %260 = vector.broadcast %3 : vector<1x96xf32> to vector<8x96xf32>
    %261 = arith.addf %259, %260 : vector<8x96xf32>
    %262 = vector.extract_strided_slice %258 {offsets = [0, 0], sizes = [8, 32], strides = [1, 1]} : vector<8x96xf32> to vector<8x32xf32>
    %263 = vector.extract_strided_slice %261 {offsets = [0, 0], sizes = [8, 32], strides = [1, 1]} : vector<8x96xf32> to vector<8x32xf32>
    %264 = arith.addf %262, %263 : vector<8x32xf32>
    %265 = arith.negf %264 : vector<8x32xf32>
    %266 = math.exp %265 : vector<8x32xf32>
    %cst_63 = arith.constant 1.000000e+00 : f32
    %267 = vector.broadcast %cst_63 : f32 to vector<8x32xf32>
    %268 = arith.addf %267, %266 : vector<8x32xf32>
    %269 = arith.divf %267, %268 : vector<8x32xf32>
    %270 = vector.extract_strided_slice %258 {offsets = [0, 32], sizes = [8, 32], strides = [1, 1]} : vector<8x96xf32> to vector<8x32xf32>
    %271 = vector.extract_strided_slice %261 {offsets = [0, 32], sizes = [8, 32], strides = [1, 1]} : vector<8x96xf32> to vector<8x32xf32>
    %272 = arith.addf %270, %271 : vector<8x32xf32>
    %273 = arith.negf %272 : vector<8x32xf32>
    %274 = math.exp %273 : vector<8x32xf32>
    %cst_64 = arith.constant 1.000000e+00 : f32
    %275 = vector.broadcast %cst_64 : f32 to vector<8x32xf32>
    %276 = arith.addf %275, %274 : vector<8x32xf32>
    %277 = arith.divf %275, %276 : vector<8x32xf32>
    %278 = vector.extract_strided_slice %258 {offsets = [0, 64], sizes = [8, 32], strides = [1, 1]} : vector<8x96xf32> to vector<8x32xf32>
    %279 = vector.extract_strided_slice %261 {offsets = [0, 64], sizes = [8, 32], strides = [1, 1]} : vector<8x96xf32> to vector<8x32xf32>
    %280 = arith.mulf %269, %279 : vector<8x32xf32>
    %281 = arith.addf %278, %280 : vector<8x32xf32>
    %282 = math.tanh %281 : vector<8x32xf32>
    %cst_65 = arith.constant 1.000000e+00 : f32
    %283 = vector.broadcast %cst_65 : f32 to vector<8x32xf32>
    %284 = arith.subf %283, %277 : vector<8x32xf32>
    %285 = arith.mulf %284, %282 : vector<8x32xf32>
    %286 = arith.mulf %277, %252 : vector<8x32xf32>
    %287 = arith.addf %285, %286 : vector<8x32xf32>
    %288 = arith.index_cast %256 : i32 to index
    %c0_66 = arith.constant 0 : index
    %289 = vector.load %arg15[%288, %c0_66] : memref<64x32xf32, #tpu.memory_space<vmem>>, vector<8x32xf32>
    tpu.vector_store %arg15[%288, %c0_66], %287 {strides = array<i32>} : memref<64x32xf32, #tpu.memory_space<vmem>>, vector<8x32xf32>,
    %c8_i32_67 = arith.constant 8 : i32
    %c0_68 = arith.constant 0 : index
    %c0_69 = arith.constant 0 : index
    %290 = vector.load %arg5[%c0_68, %c0_69] : memref<32x96xf32, #tpu.memory_space<vmem>>, vector<32x96xf32>
    %c0_70 = arith.constant 0 : index
    %c0_71 = arith.constant 0 : index
    %291 = vector.load %arg6[%c0_70, %c0_71] : memref<32x96xf32, #tpu.memory_space<vmem>>, vector<32x96xf32>
    %c0_72 = arith.constant 0 : index
    %c0_73 = arith.constant 0 : index
    %292 = vector.load %arg7[%c0_72, %c0_73] : memref<1x96xf32, #tpu.memory_space<vmem>>, vector<1x96xf32>
    %c0_74 = arith.constant 0 : index
    %c0_75 = arith.constant 0 : index
    %293 = vector.load %arg8[%c0_74, %c0_75] : memref<1x96xf32, #tpu.memory_space<vmem>>, vector<1x96xf32>
    %c0_76 = arith.constant 0 : index
    %c0_77 = arith.constant 0 : index
    %294 = vector.load %arg15[%c0_76, %c0_77] : memref<64x32xf32, #tpu.memory_space<vmem>>, vector<64x32xf32>
    %cst_78 = arith.constant dense<0.000000e+00> : vector<64x96xf32>
    %295 = tpu.matmul %294, %290, %cst_78 {dimension_numbers = #tpu.dot_dimension_numbers<[1], [0], [0], [1], [0, 0, 1, 1], [], []>} : vector<64x32xf32>, vector<32x96xf32>, vector<64x96xf32> -> vector<64x96xf32>
    %296 = vector.broadcast %292 : vector<1x96xf32> to vector<64x96xf32>
    %297 = arith.addf %295, %296 : vector<64x96xf32>
    %c0_79 = arith.constant 0 : index
    %c0_80 = arith.constant 0 : index
    %298 = vector.load %arg14[%c0_79, %c0_80] : memref<64x96xf32, #tpu.memory_space<vmem>>, vector<64x96xf32>
    tpu.vector_store %arg14[%c0_79, %c0_80], %297 {strides = array<i32>} : memref<64x96xf32, #tpu.memory_space<vmem>>, vector<64x96xf32>,
    %cst_81 = arith.constant 0.000000e+00 : f32
    %299 = vector.broadcast %cst_81 : f32 to vector<8x32xf32>
    %c0_i32_82 = arith.constant 0 : i32
    %c8_i32_83 = arith.constant 8 : i32
    %300 = arith.muli %c0_i32_82, %c8_i32_83 : i32
    %301 = tpu.assume_multiple %300, 8 : i32
    %302 = arith.index_cast %301 : i32 to index
    %c0_84 = arith.constant 0 : index
    %303 = vector.load %arg14[%302, %c0_84] : memref<64x96xf32, #tpu.memory_space<vmem>>, vector<8x96xf32>
    %cst_85 = arith.constant dense<0.000000e+00> : vector<8x96xf32>
    %304 = tpu.matmul %299, %291, %cst_85 {dimension_numbers = #tpu.dot_dimension_numbers<[1], [0], [0], [1], [0, 0, 1, 1], [], []>} : vector<8x32xf32>, vector<32x96xf32>, vector<8x96xf32> -> vector<8x96xf32>
    %305 = vector.broadcast %293 : vector<1x96xf32> to vector<8x96xf32>
    %306 = arith.addf %304, %305 : vector<8x96xf32>
    %307 = vector.extract_strided_slice %303 {offsets = [0, 0], sizes = [8, 32], strides = [1, 1]} : vector<8x96xf32> to vector<8x32xf32>
    %308 = vector.extract_strided_slice %306 {offsets = [0, 0], sizes = [8, 32], strides = [1, 1]} : vector<8x96xf32> to vector<8x32xf32>
    %309 = arith.addf %307, %308 : vector<8x32xf32>
    %310 = arith.negf %309 : vector<8x32xf32>
    %311 = math.exp %310 : vector<8x32xf32>
    %cst_86 = arith.constant 1.000000e+00 : f32
    %312 = vector.broadcast %cst_86 : f32 to vector<8x32xf32>
    %313 = arith.addf %312, %311 : vector<8x32xf32>
    %314 = arith.divf %312, %313 : vector<8x32xf32>
    %315 = vector.extract_strided_slice %303 {offsets = [0, 32], sizes = [8, 32], strides = [1, 1]} : vector<8x96xf32> to vector<8x32xf32>
    %316 = vector.extract_strided_slice %306 {offsets = [0, 32], sizes = [8, 32], strides = [1, 1]} : vector<8x96xf32> to vector<8x32xf32>
    %317 = arith.addf %315, %316 : vector<8x32xf32>
    %318 = arith.negf %317 : vector<8x32xf32>
    %319 = math.exp %318 : vector<8x32xf32>
    %cst_87 = arith.constant 1.000000e+00 : f32
    %320 = vector.broadcast %cst_87 : f32 to vector<8x32xf32>
    %321 = arith.addf %320, %319 : vector<8x32xf32>
    %322 = arith.divf %320, %321 : vector<8x32xf32>
    %323 = vector.extract_strided_slice %303 {offsets = [0, 64], sizes = [8, 32], strides = [1, 1]} : vector<8x96xf32> to vector<8x32xf32>
    %324 = vector.extract_strided_slice %306 {offsets = [0, 64], sizes = [8, 32], strides = [1, 1]} : vector<8x96xf32> to vector<8x32xf32>
    %325 = arith.mulf %314, %324 : vector<8x32xf32>
    %326 = arith.addf %323, %325 : vector<8x32xf32>
    %327 = math.tanh %326 : vector<8x32xf32>
    %cst_88 = arith.constant 1.000000e+00 : f32
    %328 = vector.broadcast %cst_88 : f32 to vector<8x32xf32>
    %329 = arith.subf %328, %322 : vector<8x32xf32>
    %330 = arith.mulf %329, %327 : vector<8x32xf32>
    %331 = arith.mulf %322, %299 : vector<8x32xf32>
    %332 = arith.addf %330, %331 : vector<8x32xf32>
    %c1_i32_89 = arith.constant 1 : i32
    %c8_i32_90 = arith.constant 8 : i32
    %333 = arith.muli %c1_i32_89, %c8_i32_90 : i32
    %334 = tpu.assume_multiple %333, 8 : i32
    %335 = arith.index_cast %334 : i32 to index
    %c0_91 = arith.constant 0 : index
    %336 = vector.load %arg14[%335, %c0_91] : memref<64x96xf32, #tpu.memory_space<vmem>>, vector<8x96xf32>
    %cst_92 = arith.constant dense<0.000000e+00> : vector<8x96xf32>
    %337 = tpu.matmul %332, %291, %cst_92 {dimension_numbers = #tpu.dot_dimension_numbers<[1], [0], [0], [1], [0, 0, 1, 1], [], []>} : vector<8x32xf32>, vector<32x96xf32>, vector<8x96xf32> -> vector<8x96xf32>
    %338 = vector.broadcast %293 : vector<1x96xf32> to vector<8x96xf32>
    %339 = arith.addf %337, %338 : vector<8x96xf32>
    %340 = vector.extract_strided_slice %336 {offsets = [0, 0], sizes = [8, 32], strides = [1, 1]} : vector<8x96xf32> to vector<8x32xf32>
    %341 = vector.extract_strided_slice %339 {offsets = [0, 0], sizes = [8, 32], strides = [1, 1]} : vector<8x96xf32> to vector<8x32xf32>
    %342 = arith.addf %340, %341 : vector<8x32xf32>
    %343 = arith.negf %342 : vector<8x32xf32>
    %344 = math.exp %343 : vector<8x32xf32>
    %cst_93 = arith.constant 1.000000e+00 : f32
    %345 = vector.broadcast %cst_93 : f32 to vector<8x32xf32>
    %346 = arith.addf %345, %344 : vector<8x32xf32>
    %347 = arith.divf %345, %346 : vector<8x32xf32>
    %348 = vector.extract_strided_slice %336 {offsets = [0, 32], sizes = [8, 32], strides = [1, 1]} : vector<8x96xf32> to vector<8x32xf32>
    %349 = vector.extract_strided_slice %339 {offsets = [0, 32], sizes = [8, 32], strides = [1, 1]} : vector<8x96xf32> to vector<8x32xf32>
    %350 = arith.addf %348, %349 : vector<8x32xf32>
    %351 = arith.negf %350 : vector<8x32xf32>
    %352 = math.exp %351 : vector<8x32xf32>
    %cst_94 = arith.constant 1.000000e+00 : f32
    %353 = vector.broadcast %cst_94 : f32 to vector<8x32xf32>
    %354 = arith.addf %353, %352 : vector<8x32xf32>
    %355 = arith.divf %353, %354 : vector<8x32xf32>
    %356 = vector.extract_strided_slice %336 {offsets = [0, 64], sizes = [8, 32], strides = [1, 1]} : vector<8x96xf32> to vector<8x32xf32>
    %357 = vector.extract_strided_slice %339 {offsets = [0, 64], sizes = [8, 32], strides = [1, 1]} : vector<8x96xf32> to vector<8x32xf32>
    %358 = arith.mulf %347, %357 : vector<8x32xf32>
    %359 = arith.addf %356, %358 : vector<8x32xf32>
    %360 = math.tanh %359 : vector<8x32xf32>
    %cst_95 = arith.constant 1.000000e+00 : f32
    %361 = vector.broadcast %cst_95 : f32 to vector<8x32xf32>
    %362 = arith.subf %361, %355 : vector<8x32xf32>
    %363 = arith.mulf %362, %360 : vector<8x32xf32>
    %364 = arith.mulf %355, %332 : vector<8x32xf32>
    %365 = arith.addf %363, %364 : vector<8x32xf32>
    %c2_i32_96 = arith.constant 2 : i32
    %c8_i32_97 = arith.constant 8 : i32
    %366 = arith.muli %c2_i32_96, %c8_i32_97 : i32
    %367 = tpu.assume_multiple %366, 8 : i32
    %368 = arith.index_cast %367 : i32 to index
    %c0_98 = arith.constant 0 : index
    %369 = vector.load %arg14[%368, %c0_98] : memref<64x96xf32, #tpu.memory_space<vmem>>, vector<8x96xf32>
    %cst_99 = arith.constant dense<0.000000e+00> : vector<8x96xf32>
    %370 = tpu.matmul %365, %291, %cst_99 {dimension_numbers = #tpu.dot_dimension_numbers<[1], [0], [0], [1], [0, 0, 1, 1], [], []>} : vector<8x32xf32>, vector<32x96xf32>, vector<8x96xf32> -> vector<8x96xf32>
    %371 = vector.broadcast %293 : vector<1x96xf32> to vector<8x96xf32>
    %372 = arith.addf %370, %371 : vector<8x96xf32>
    %373 = vector.extract_strided_slice %369 {offsets = [0, 0], sizes = [8, 32], strides = [1, 1]} : vector<8x96xf32> to vector<8x32xf32>
    %374 = vector.extract_strided_slice %372 {offsets = [0, 0], sizes = [8, 32], strides = [1, 1]} : vector<8x96xf32> to vector<8x32xf32>
    %375 = arith.addf %373, %374 : vector<8x32xf32>
    %376 = arith.negf %375 : vector<8x32xf32>
    %377 = math.exp %376 : vector<8x32xf32>
    %cst_100 = arith.constant 1.000000e+00 : f32
    %378 = vector.broadcast %cst_100 : f32 to vector<8x32xf32>
    %379 = arith.addf %378, %377 : vector<8x32xf32>
    %380 = arith.divf %378, %379 : vector<8x32xf32>
    %381 = vector.extract_strided_slice %369 {offsets = [0, 32], sizes = [8, 32], strides = [1, 1]} : vector<8x96xf32> to vector<8x32xf32>
    %382 = vector.extract_strided_slice %372 {offsets = [0, 32], sizes = [8, 32], strides = [1, 1]} : vector<8x96xf32> to vector<8x32xf32>
    %383 = arith.addf %381, %382 : vector<8x32xf32>
    %384 = arith.negf %383 : vector<8x32xf32>
    %385 = math.exp %384 : vector<8x32xf32>
    %cst_101 = arith.constant 1.000000e+00 : f32
    %386 = vector.broadcast %cst_101 : f32 to vector<8x32xf32>
    %387 = arith.addf %386, %385 : vector<8x32xf32>
    %388 = arith.divf %386, %387 : vector<8x32xf32>
    %389 = vector.extract_strided_slice %369 {offsets = [0, 64], sizes = [8, 32], strides = [1, 1]} : vector<8x96xf32> to vector<8x32xf32>
    %390 = vector.extract_strided_slice %372 {offsets = [0, 64], sizes = [8, 32], strides = [1, 1]} : vector<8x96xf32> to vector<8x32xf32>
    %391 = arith.mulf %380, %390 : vector<8x32xf32>
    %392 = arith.addf %389, %391 : vector<8x32xf32>
    %393 = math.tanh %392 : vector<8x32xf32>
    %cst_102 = arith.constant 1.000000e+00 : f32
    %394 = vector.broadcast %cst_102 : f32 to vector<8x32xf32>
    %395 = arith.subf %394, %388 : vector<8x32xf32>
    %396 = arith.mulf %395, %393 : vector<8x32xf32>
    %397 = arith.mulf %388, %365 : vector<8x32xf32>
    %398 = arith.addf %396, %397 : vector<8x32xf32>
    %c3_i32_103 = arith.constant 3 : i32
    %c8_i32_104 = arith.constant 8 : i32
    %399 = arith.muli %c3_i32_103, %c8_i32_104 : i32
    %400 = tpu.assume_multiple %399, 8 : i32
    %401 = arith.index_cast %400 : i32 to index
    %c0_105 = arith.constant 0 : index
    %402 = vector.load %arg14[%401, %c0_105] : memref<64x96xf32, #tpu.memory_space<vmem>>, vector<8x96xf32>
    %cst_106 = arith.constant dense<0.000000e+00> : vector<8x96xf32>
    %403 = tpu.matmul %398, %291, %cst_106 {dimension_numbers = #tpu.dot_dimension_numbers<[1], [0], [0], [1], [0, 0, 1, 1], [], []>} : vector<8x32xf32>, vector<32x96xf32>, vector<8x96xf32> -> vector<8x96xf32>
    %404 = vector.broadcast %293 : vector<1x96xf32> to vector<8x96xf32>
    %405 = arith.addf %403, %404 : vector<8x96xf32>
    %406 = vector.extract_strided_slice %402 {offsets = [0, 0], sizes = [8, 32], strides = [1, 1]} : vector<8x96xf32> to vector<8x32xf32>
    %407 = vector.extract_strided_slice %405 {offsets = [0, 0], sizes = [8, 32], strides = [1, 1]} : vector<8x96xf32> to vector<8x32xf32>
    %408 = arith.addf %406, %407 : vector<8x32xf32>
    %409 = arith.negf %408 : vector<8x32xf32>
    %410 = math.exp %409 : vector<8x32xf32>
    %cst_107 = arith.constant 1.000000e+00 : f32
    %411 = vector.broadcast %cst_107 : f32 to vector<8x32xf32>
    %412 = arith.addf %411, %410 : vector<8x32xf32>
    %413 = arith.divf %411, %412 : vector<8x32xf32>
    %414 = vector.extract_strided_slice %402 {offsets = [0, 32], sizes = [8, 32], strides = [1, 1]} : vector<8x96xf32> to vector<8x32xf32>
    %415 = vector.extract_strided_slice %405 {offsets = [0, 32], sizes = [8, 32], strides = [1, 1]} : vector<8x96xf32> to vector<8x32xf32>
    %416 = arith.addf %414, %415 : vector<8x32xf32>
    %417 = arith.negf %416 : vector<8x32xf32>
    %418 = math.exp %417 : vector<8x32xf32>
    %cst_108 = arith.constant 1.000000e+00 : f32
    %419 = vector.broadcast %cst_108 : f32 to vector<8x32xf32>
    %420 = arith.addf %419, %418 : vector<8x32xf32>
    %421 = arith.divf %419, %420 : vector<8x32xf32>
    %422 = vector.extract_strided_slice %402 {offsets = [0, 64], sizes = [8, 32], strides = [1, 1]} : vector<8x96xf32> to vector<8x32xf32>
    %423 = vector.extract_strided_slice %405 {offsets = [0, 64], sizes = [8, 32], strides = [1, 1]} : vector<8x96xf32> to vector<8x32xf32>
    %424 = arith.mulf %413, %423 : vector<8x32xf32>
    %425 = arith.addf %422, %424 : vector<8x32xf32>
    %426 = math.tanh %425 : vector<8x32xf32>
    %cst_109 = arith.constant 1.000000e+00 : f32
    %427 = vector.broadcast %cst_109 : f32 to vector<8x32xf32>
    %428 = arith.subf %427, %421 : vector<8x32xf32>
    %429 = arith.mulf %428, %426 : vector<8x32xf32>
    %430 = arith.mulf %421, %398 : vector<8x32xf32>
    %431 = arith.addf %429, %430 : vector<8x32xf32>
    %c4_i32_110 = arith.constant 4 : i32
    %c8_i32_111 = arith.constant 8 : i32
    %432 = arith.muli %c4_i32_110, %c8_i32_111 : i32
    %433 = tpu.assume_multiple %432, 8 : i32
    %434 = arith.index_cast %433 : i32 to index
    %c0_112 = arith.constant 0 : index
    %435 = vector.load %arg14[%434, %c0_112] : memref<64x96xf32, #tpu.memory_space<vmem>>, vector<8x96xf32>
    %cst_113 = arith.constant dense<0.000000e+00> : vector<8x96xf32>
    %436 = tpu.matmul %431, %291, %cst_113 {dimension_numbers = #tpu.dot_dimension_numbers<[1], [0], [0], [1], [0, 0, 1, 1], [], []>} : vector<8x32xf32>, vector<32x96xf32>, vector<8x96xf32> -> vector<8x96xf32>
    %437 = vector.broadcast %293 : vector<1x96xf32> to vector<8x96xf32>
    %438 = arith.addf %436, %437 : vector<8x96xf32>
    %439 = vector.extract_strided_slice %435 {offsets = [0, 0], sizes = [8, 32], strides = [1, 1]} : vector<8x96xf32> to vector<8x32xf32>
    %440 = vector.extract_strided_slice %438 {offsets = [0, 0], sizes = [8, 32], strides = [1, 1]} : vector<8x96xf32> to vector<8x32xf32>
    %441 = arith.addf %439, %440 : vector<8x32xf32>
    %442 = arith.negf %441 : vector<8x32xf32>
    %443 = math.exp %442 : vector<8x32xf32>
    %cst_114 = arith.constant 1.000000e+00 : f32
    %444 = vector.broadcast %cst_114 : f32 to vector<8x32xf32>
    %445 = arith.addf %444, %443 : vector<8x32xf32>
    %446 = arith.divf %444, %445 : vector<8x32xf32>
    %447 = vector.extract_strided_slice %435 {offsets = [0, 32], sizes = [8, 32], strides = [1, 1]} : vector<8x96xf32> to vector<8x32xf32>
    %448 = vector.extract_strided_slice %438 {offsets = [0, 32], sizes = [8, 32], strides = [1, 1]} : vector<8x96xf32> to vector<8x32xf32>
    %449 = arith.addf %447, %448 : vector<8x32xf32>
    %450 = arith.negf %449 : vector<8x32xf32>
    %451 = math.exp %450 : vector<8x32xf32>
    %cst_115 = arith.constant 1.000000e+00 : f32
    %452 = vector.broadcast %cst_115 : f32 to vector<8x32xf32>
    %453 = arith.addf %452, %451 : vector<8x32xf32>
    %454 = arith.divf %452, %453 : vector<8x32xf32>
    %455 = vector.extract_strided_slice %435 {offsets = [0, 64], sizes = [8, 32], strides = [1, 1]} : vector<8x96xf32> to vector<8x32xf32>
    %456 = vector.extract_strided_slice %438 {offsets = [0, 64], sizes = [8, 32], strides = [1, 1]} : vector<8x96xf32> to vector<8x32xf32>
    %457 = arith.mulf %446, %456 : vector<8x32xf32>
    %458 = arith.addf %455, %457 : vector<8x32xf32>
    %459 = math.tanh %458 : vector<8x32xf32>
    %cst_116 = arith.constant 1.000000e+00 : f32
    %460 = vector.broadcast %cst_116 : f32 to vector<8x32xf32>
    %461 = arith.subf %460, %454 : vector<8x32xf32>
    %462 = arith.mulf %461, %459 : vector<8x32xf32>
    %463 = arith.mulf %454, %431 : vector<8x32xf32>
    %464 = arith.addf %462, %463 : vector<8x32xf32>
    %c5_i32_117 = arith.constant 5 : i32
    %c8_i32_118 = arith.constant 8 : i32
    %465 = arith.muli %c5_i32_117, %c8_i32_118 : i32
    %466 = tpu.assume_multiple %465, 8 : i32
    %467 = arith.index_cast %466 : i32 to index
    %c0_119 = arith.constant 0 : index
    %468 = vector.load %arg14[%467, %c0_119] : memref<64x96xf32, #tpu.memory_space<vmem>>, vector<8x96xf32>
    %cst_120 = arith.constant dense<0.000000e+00> : vector<8x96xf32>
    %469 = tpu.matmul %464, %291, %cst_120 {dimension_numbers = #tpu.dot_dimension_numbers<[1], [0], [0], [1], [0, 0, 1, 1], [], []>} : vector<8x32xf32>, vector<32x96xf32>, vector<8x96xf32> -> vector<8x96xf32>
    %470 = vector.broadcast %293 : vector<1x96xf32> to vector<8x96xf32>
    %471 = arith.addf %469, %470 : vector<8x96xf32>
    %472 = vector.extract_strided_slice %468 {offsets = [0, 0], sizes = [8, 32], strides = [1, 1]} : vector<8x96xf32> to vector<8x32xf32>
    %473 = vector.extract_strided_slice %471 {offsets = [0, 0], sizes = [8, 32], strides = [1, 1]} : vector<8x96xf32> to vector<8x32xf32>
    %474 = arith.addf %472, %473 : vector<8x32xf32>
    %475 = arith.negf %474 : vector<8x32xf32>
    %476 = math.exp %475 : vector<8x32xf32>
    %cst_121 = arith.constant 1.000000e+00 : f32
    %477 = vector.broadcast %cst_121 : f32 to vector<8x32xf32>
    %478 = arith.addf %477, %476 : vector<8x32xf32>
    %479 = arith.divf %477, %478 : vector<8x32xf32>
    %480 = vector.extract_strided_slice %468 {offsets = [0, 32], sizes = [8, 32], strides = [1, 1]} : vector<8x96xf32> to vector<8x32xf32>
    %481 = vector.extract_strided_slice %471 {offsets = [0, 32], sizes = [8, 32], strides = [1, 1]} : vector<8x96xf32> to vector<8x32xf32>
    %482 = arith.addf %480, %481 : vector<8x32xf32>
    %483 = arith.negf %482 : vector<8x32xf32>
    %484 = math.exp %483 : vector<8x32xf32>
    %cst_122 = arith.constant 1.000000e+00 : f32
    %485 = vector.broadcast %cst_122 : f32 to vector<8x32xf32>
    %486 = arith.addf %485, %484 : vector<8x32xf32>
    %487 = arith.divf %485, %486 : vector<8x32xf32>
    %488 = vector.extract_strided_slice %468 {offsets = [0, 64], sizes = [8, 32], strides = [1, 1]} : vector<8x96xf32> to vector<8x32xf32>
    %489 = vector.extract_strided_slice %471 {offsets = [0, 64], sizes = [8, 32], strides = [1, 1]} : vector<8x96xf32> to vector<8x32xf32>
    %490 = arith.mulf %479, %489 : vector<8x32xf32>
    %491 = arith.addf %488, %490 : vector<8x32xf32>
    %492 = math.tanh %491 : vector<8x32xf32>
    %cst_123 = arith.constant 1.000000e+00 : f32
    %493 = vector.broadcast %cst_123 : f32 to vector<8x32xf32>
    %494 = arith.subf %493, %487 : vector<8x32xf32>
    %495 = arith.mulf %494, %492 : vector<8x32xf32>
    %496 = arith.mulf %487, %464 : vector<8x32xf32>
    %497 = arith.addf %495, %496 : vector<8x32xf32>
    %c6_i32_124 = arith.constant 6 : i32
    %c8_i32_125 = arith.constant 8 : i32
    %498 = arith.muli %c6_i32_124, %c8_i32_125 : i32
    %499 = tpu.assume_multiple %498, 8 : i32
    %500 = arith.index_cast %499 : i32 to index
    %c0_126 = arith.constant 0 : index
    %501 = vector.load %arg14[%500, %c0_126] : memref<64x96xf32, #tpu.memory_space<vmem>>, vector<8x96xf32>
    %cst_127 = arith.constant dense<0.000000e+00> : vector<8x96xf32>
    %502 = tpu.matmul %497, %291, %cst_127 {dimension_numbers = #tpu.dot_dimension_numbers<[1], [0], [0], [1], [0, 0, 1, 1], [], []>} : vector<8x32xf32>, vector<32x96xf32>, vector<8x96xf32> -> vector<8x96xf32>
    %503 = vector.broadcast %293 : vector<1x96xf32> to vector<8x96xf32>
    %504 = arith.addf %502, %503 : vector<8x96xf32>
    %505 = vector.extract_strided_slice %501 {offsets = [0, 0], sizes = [8, 32], strides = [1, 1]} : vector<8x96xf32> to vector<8x32xf32>
    %506 = vector.extract_strided_slice %504 {offsets = [0, 0], sizes = [8, 32], strides = [1, 1]} : vector<8x96xf32> to vector<8x32xf32>
    %507 = arith.addf %505, %506 : vector<8x32xf32>
    %508 = arith.negf %507 : vector<8x32xf32>
    %509 = math.exp %508 : vector<8x32xf32>
    %cst_128 = arith.constant 1.000000e+00 : f32
    %510 = vector.broadcast %cst_128 : f32 to vector<8x32xf32>
    %511 = arith.addf %510, %509 : vector<8x32xf32>
    %512 = arith.divf %510, %511 : vector<8x32xf32>
    %513 = vector.extract_strided_slice %501 {offsets = [0, 32], sizes = [8, 32], strides = [1, 1]} : vector<8x96xf32> to vector<8x32xf32>
    %514 = vector.extract_strided_slice %504 {offsets = [0, 32], sizes = [8, 32], strides = [1, 1]} : vector<8x96xf32> to vector<8x32xf32>
    %515 = arith.addf %513, %514 : vector<8x32xf32>
    %516 = arith.negf %515 : vector<8x32xf32>
    %517 = math.exp %516 : vector<8x32xf32>
    %cst_129 = arith.constant 1.000000e+00 : f32
    %518 = vector.broadcast %cst_129 : f32 to vector<8x32xf32>
    %519 = arith.addf %518, %517 : vector<8x32xf32>
    %520 = arith.divf %518, %519 : vector<8x32xf32>
    %521 = vector.extract_strided_slice %501 {offsets = [0, 64], sizes = [8, 32], strides = [1, 1]} : vector<8x96xf32> to vector<8x32xf32>
    %522 = vector.extract_strided_slice %504 {offsets = [0, 64], sizes = [8, 32], strides = [1, 1]} : vector<8x96xf32> to vector<8x32xf32>
    %523 = arith.mulf %512, %522 : vector<8x32xf32>
    %524 = arith.addf %521, %523 : vector<8x32xf32>
    %525 = math.tanh %524 : vector<8x32xf32>
    %cst_130 = arith.constant 1.000000e+00 : f32
    %526 = vector.broadcast %cst_130 : f32 to vector<8x32xf32>
    %527 = arith.subf %526, %520 : vector<8x32xf32>
    %528 = arith.mulf %527, %525 : vector<8x32xf32>
    %529 = arith.mulf %520, %497 : vector<8x32xf32>
    %530 = arith.addf %528, %529 : vector<8x32xf32>
    %c7_i32_131 = arith.constant 7 : i32
    %c8_i32_132 = arith.constant 8 : i32
    %531 = arith.muli %c7_i32_131, %c8_i32_132 : i32
    %532 = tpu.assume_multiple %531, 8 : i32
    %533 = arith.index_cast %532 : i32 to index
    %c0_133 = arith.constant 0 : index
    %534 = vector.load %arg14[%533, %c0_133] : memref<64x96xf32, #tpu.memory_space<vmem>>, vector<8x96xf32>
    %cst_134 = arith.constant dense<0.000000e+00> : vector<8x96xf32>
    %535 = tpu.matmul %530, %291, %cst_134 {dimension_numbers = #tpu.dot_dimension_numbers<[1], [0], [0], [1], [0, 0, 1, 1], [], []>} : vector<8x32xf32>, vector<32x96xf32>, vector<8x96xf32> -> vector<8x96xf32>
    %536 = vector.broadcast %293 : vector<1x96xf32> to vector<8x96xf32>
    %537 = arith.addf %535, %536 : vector<8x96xf32>
    %538 = vector.extract_strided_slice %534 {offsets = [0, 0], sizes = [8, 32], strides = [1, 1]} : vector<8x96xf32> to vector<8x32xf32>
    %539 = vector.extract_strided_slice %537 {offsets = [0, 0], sizes = [8, 32], strides = [1, 1]} : vector<8x96xf32> to vector<8x32xf32>
    %540 = arith.addf %538, %539 : vector<8x32xf32>
    %541 = arith.negf %540 : vector<8x32xf32>
    %542 = math.exp %541 : vector<8x32xf32>
    %cst_135 = arith.constant 1.000000e+00 : f32
    %543 = vector.broadcast %cst_135 : f32 to vector<8x32xf32>
    %544 = arith.addf %543, %542 : vector<8x32xf32>
    %545 = arith.divf %543, %544 : vector<8x32xf32>
    %546 = vector.extract_strided_slice %534 {offsets = [0, 32], sizes = [8, 32], strides = [1, 1]} : vector<8x96xf32> to vector<8x32xf32>
    %547 = vector.extract_strided_slice %537 {offsets = [0, 32], sizes = [8, 32], strides = [1, 1]} : vector<8x96xf32> to vector<8x32xf32>
    %548 = arith.addf %546, %547 : vector<8x32xf32>
    %549 = arith.negf %548 : vector<8x32xf32>
    %550 = math.exp %549 : vector<8x32xf32>
    %cst_136 = arith.constant 1.000000e+00 : f32
    %551 = vector.broadcast %cst_136 : f32 to vector<8x32xf32>
    %552 = arith.addf %551, %550 : vector<8x32xf32>
    %553 = arith.divf %551, %552 : vector<8x32xf32>
    %554 = vector.extract_strided_slice %534 {offsets = [0, 64], sizes = [8, 32], strides = [1, 1]} : vector<8x96xf32> to vector<8x32xf32>
    %555 = vector.extract_strided_slice %537 {offsets = [0, 64], sizes = [8, 32], strides = [1, 1]} : vector<8x96xf32> to vector<8x32xf32>
    %556 = arith.mulf %545, %555 : vector<8x32xf32>
    %557 = arith.addf %554, %556 : vector<8x32xf32>
    %558 = math.tanh %557 : vector<8x32xf32>
    %cst_137 = arith.constant 1.000000e+00 : f32
    %559 = vector.broadcast %cst_137 : f32 to vector<8x32xf32>
    %560 = arith.subf %559, %553 : vector<8x32xf32>
    %561 = arith.mulf %560, %558 : vector<8x32xf32>
    %562 = arith.mulf %553, %530 : vector<8x32xf32>
    %563 = arith.addf %561, %562 : vector<8x32xf32>
    %c8_i32_138 = arith.constant 8 : i32
    %c0_139 = arith.constant 0 : index
    %c0_140 = arith.constant 0 : index
    %564 = vector.load %arg9[%c0_139, %c0_140] : memref<32x64xf32, #tpu.memory_space<vmem>>, vector<32x64xf32>
    %cst_141 = arith.constant dense<0.000000e+00> : vector<8x64xf32>
    %565 = tpu.matmul %563, %564, %cst_141 {dimension_numbers = #tpu.dot_dimension_numbers<[1], [0], [0], [1], [0, 0, 1, 1], [], []>} : vector<8x32xf32>, vector<32x64xf32>, vector<8x64xf32> -> vector<8x64xf32>
    %c0_142 = arith.constant 0 : index
    %c0_143 = arith.constant 0 : index
    %566 = vector.load %arg10[%c0_142, %c0_143] : memref<1x64xf32, #tpu.memory_space<vmem>>, vector<1x64xf32>
    %567 = vector.broadcast %566 : vector<1x64xf32> to vector<8x64xf32>
    %568 = arith.addf %565, %567 : vector<8x64xf32>
    %cst_144 = arith.constant 0.000000e+00 : f32
    %569 = vector.broadcast %cst_144 : f32 to vector<8x64xf32>
    %570 = arith.maximumf %568, %569 : vector<8x64xf32>
    %c0_145 = arith.constant 0 : index
    %c0_146 = arith.constant 0 : index
    %571 = vector.load %arg11[%c0_145, %c0_146] : memref<64x4xf32, #tpu.memory_space<vmem>>, vector<64x4xf32>
    %cst_147 = arith.constant dense<0.000000e+00> : vector<8x4xf32>
    %572 = tpu.matmul %570, %571, %cst_147 {dimension_numbers = #tpu.dot_dimension_numbers<[1], [0], [0], [1], [0, 0, 1, 1], [], []>} : vector<8x64xf32>, vector<64x4xf32>, vector<8x4xf32> -> vector<8x4xf32>
    %c0_148 = arith.constant 0 : index
    %c0_149 = arith.constant 0 : index
    %573 = vector.load %arg12[%c0_148, %c0_149] : memref<1x4xf32, #tpu.memory_space<vmem>>, vector<1x4xf32>
    %574 = vector.broadcast %573 : vector<1x4xf32> to vector<8x4xf32>
    %575 = arith.addf %572, %574 : vector<8x4xf32>
    %c0_150 = arith.constant 0 : index
    %c0_151 = arith.constant 0 : index
    %576 = vector.load %arg13[%c0_150, %c0_151] : memref<8x4xf32, #tpu.memory_space<vmem>>, vector<8x4xf32>
    tpu.vector_store %arg13[%c0_150, %c0_151], %575 {strides = array<i32>} : memref<8x4xf32, #tpu.memory_space<vmem>>, vector<8x4xf32>,
    return
  }
}

</mosaic_0001>

<llo_original>
// kernel: tpu_custom_call.1
$region0: #{tpu_custom_call.1}
  #allocation0 [shape = 'u32[]', space=smem, size = 0x4, offset = 0x4, fixed_abs, tag = 'smem constant byte address 0x4 - core index']
  #allocation1 [shape = 'u32[144,128]{1,0:T(1,128)}', space=vmem, size = 0x12000, scoped, tag = 'internal scratch']
  #allocation2 [shape = 'f32[64,96]{1,0:T(8,128)}', space=vmem, size = 0x8000, scoped, tag = 'scratch operand']
  #allocation3 [shape = 'f32[64,32]{1,0:T(8,128)}', space=vmem, size = 0x8000, scoped, tag = 'scratch operand']
  %s0 = inlined_call_operand.vmem [shape: f32[64,32], index: 0, kind: input, shape index: {}]
  %s1 = inlined_call_operand.vmem [shape: f32[32,96], index: 1, kind: input, shape index: {}]
  %s2 = inlined_call_operand.vmem [shape: f32[32,96], index: 2, kind: input, shape index: {}]
  %s3 = inlined_call_operand.vmem [shape: f32[1,96], index: 3, kind: input, shape index: {}]
  %s4 = inlined_call_operand.vmem [shape: f32[1,96], index: 4, kind: input, shape index: {}]
  %s5 = inlined_call_operand.vmem [shape: f32[32,96], index: 5, kind: input, shape index: {}]
  %s6 = inlined_call_operand.vmem [shape: f32[32,96], index: 6, kind: input, shape index: {}]
  %s7 = inlined_call_operand.vmem [shape: f32[1,96], index: 7, kind: input, shape index: {}]
  %s8 = inlined_call_operand.vmem [shape: f32[1,96], index: 8, kind: input, shape index: {}]
  %s9 = inlined_call_operand.vmem [shape: f32[32,64], index: 9, kind: input, shape index: {}]
  %s10 = inlined_call_operand.vmem [shape: f32[1,64], index: 10, kind: input, shape index: {}]
  %s11 = inlined_call_operand.vmem [shape: f32[64,4], index: 11, kind: input, shape index: {}]
  %s12 = inlined_call_operand.vmem [shape: f32[1,4], index: 12, kind: input, shape index: {}]
  %s13 = inlined_call_operand.vmem [shape: f32[8,4], index: 13, kind: output, shape index: {}]
  %s14 = sld [smem:[#allocation0]]
  $region62: #{tpu_custom_call.1} parent=0
    _
  %s16 = ssub.s32 1, %s14
  %s17 = scalar_select 0, %s16, %s14
  // Predicated region
  $region2: #{tpu_custom_call.1} parent=0 // pred_check
    _
  $region3: #{tpu_custom_call.1} parent=0 // pred_check_branch
    %19 = sbr.rel (0) target = $region5
  $region4: #{tpu_custom_call.1} parent=0 // pred_region
    _
  $region5: #{tpu_custom_call.1} parent=0 // pred_fallthru
    _
  // Predicated region
  $region6: #{tpu_custom_call.1} parent=0 // pred_check
    _
  $region7: #{tpu_custom_call.1} parent=0 // pred_check_branch
    %21 = sbr.rel (0) target = $region9
  $region8: #{tpu_custom_call.1} parent=0 // pred_region
    _
  $region9: #{tpu_custom_call.1} parent=0 // pred_fallthru
    _
  // Predicated region
  $region10: #{tpu_custom_call.1} parent=0 // pred_check
    _
  $region11: #{tpu_custom_call.1} parent=0 // pred_check_branch
    %23 = sbr.rel (0) target = $region13
  $region12: #{tpu_custom_call.1} parent=0 // pred_region
    _
  $region13: #{tpu_custom_call.1} parent=0 // pred_fallthru
    _
  // Predicated region
  $region14: #{tpu_custom_call.1} parent=0 // pred_check
    _
  $region15: #{tpu_custom_call.1} parent=0 // pred_check_branch
    %25 = sbr.rel (0) target = $region17
  $region16: #{tpu_custom_call.1} parent=0 // pred_region
    _
  $region17: #{tpu_custom_call.1} parent=0 // pred_fallthru
    _
  // Predicated region
  $region18: #{tpu_custom_call.1} parent=0 // pred_check
    _
  $region19: #{tpu_custom_call.1} parent=0 // pred_check_branch
    %27 = sbr.rel (0) target = $region21
  $region20: #{tpu_custom_call.1} parent=0 // pred_region
    _
  $region21: #{tpu_custom_call.1} parent=0 // pred_fallthru
    _
  // Predicated region
  $region22: #{tpu_custom_call.1} parent=0 // pred_check
    _
  $region23: #{tpu_custom_call.1} parent=0 // pred_check_branch
    %29 = sbr.rel (0) target = $region25
  $region24: #{tpu_custom_call.1} parent=0 // pred_region
    _
  $region25: #{tpu_custom_call.1} parent=0 // pred_fallthru
    _
  // Predicated region
  $region26: #{tpu_custom_call.1} parent=0 // pred_check
    _
  $region27: #{tpu_custom_call.1} parent=0 // pred_check_branch
    %31 = sbr.rel (0) target = $region29
  $region28: #{tpu_custom_call.1} parent=0 // pred_region
    _
  $region29: #{tpu_custom_call.1} parent=0 // pred_fallthru
    _
  // Predicated region
  $region30: #{tpu_custom_call.1} parent=0 // pred_check
    _
  $region31: #{tpu_custom_call.1} parent=0 // pred_check_branch
    %33 = sbr.rel (0) target = $region33
  $region32: #{tpu_custom_call.1} parent=0 // pred_region
    _
  $region33: #{tpu_custom_call.1} parent=0 // pred_fallthru
    _
  // Predicated region
  $region34: #{tpu_custom_call.1} parent=0 // pred_check
    _
  $region35: #{tpu_custom_call.1} parent=0 // pred_check_branch
    %35 = sbr.rel (0) target = $region37
  $region36: #{tpu_custom_call.1} parent=0 // pred_region
    _
  $region37: #{tpu_custom_call.1} parent=0 // pred_fallthru
    _
  // Predicated region
  $region38: #{tpu_custom_call.1} parent=0 // pred_check
    _
  $region39: #{tpu_custom_call.1} parent=0 // pred_check_branch
    %37 = sbr.rel (0) target = $region41
  $region40: #{tpu_custom_call.1} parent=0 // pred_region
    _
  $region41: #{tpu_custom_call.1} parent=0 // pred_fallthru
    _
  // Predicated region
  $region42: #{tpu_custom_call.1} parent=0 // pred_check
    _
  $region43: #{tpu_custom_call.1} parent=0 // pred_check_branch
    %39 = sbr.rel (0) target = $region45
  $region44: #{tpu_custom_call.1} parent=0 // pred_region
    _
  $region45: #{tpu_custom_call.1} parent=0 // pred_fallthru
    _
  // Predicated region
  $region46: #{tpu_custom_call.1} parent=0 // pred_check
    _
  $region47: #{tpu_custom_call.1} parent=0 // pred_check_branch
    %41 = sbr.rel (0) target = $region49
  $region48: #{tpu_custom_call.1} parent=0 // pred_region
    _
  $region49: #{tpu_custom_call.1} parent=0 // pred_fallthru
    _
  // Predicated region
  $region50: #{tpu_custom_call.1} parent=0 // pred_check
    _
  $region51: #{tpu_custom_call.1} parent=0 // pred_check_branch
    %43 = sbr.rel (0) target = $region53
  $region52: #{tpu_custom_call.1} parent=0 // pred_region
    _
  $region53: #{tpu_custom_call.1} parent=0 // pred_fallthru
    _
  %v44 = vld [vmem:[%s1] sm:$0xff]
  %v45 = vld [vmem:[%s1 + $0x8] sm:$0xff]
  %v46 = vld [vmem:[%s1 + $0x10] sm:$0xff]
  %v47 = vld [vmem:[%s1 + $0x18] sm:$0xff]
  %v48 = vld [vmem:[%s2] sm:$0xff]
  %v49 = vld [vmem:[%s2 + $0x8] sm:$0xff]
  %v50 = vld [vmem:[%s2 + $0x10] sm:$0xff]
  %v51 = vld [vmem:[%s2 + $0x18] sm:$0xff]
  %v52 = vld [vmem:[%s3] sm:$0x1]
  %v53 = vld [vmem:[%s4] sm:$0x1]
  %v54 = vld [vmem:[%s0] sm:$0xff]
  %v55 = vld [vmem:[%s0 + $0x8] sm:$0xff]
  %v56 = vld [vmem:[%s0 + $0x10] sm:$0xff]
  %v57 = vld [vmem:[%s0 + $0x18] sm:$0xff]
  %v58 = vld [vmem:[%s0 + $0x20] sm:$0xff]
  %v59 = vld [vmem:[%s0 + $0x28] sm:$0xff]
  %v60 = vld [vmem:[%s0 + $0x30] sm:$0xff]
  %v61 = vld [vmem:[%s0 + $0x38] sm:$0xff]
  %v63 = vlaneseq
  %v64 = vshrl.u32 %v63, 7
  %v65 = vsub.s32 0, %v64
  %v66 = vrot.slane %v52, %v65
  %vm68 = vcmask 261120
  %v70 = vsel %vm68, %v54, 0
  %v73 = vsel %vm68, %v55, 0
  %v76 = vsel %vm68, %v56, 0
  %v79 = vsel %vm68, %v57, 0
  %v82 = vsel %vm68, %v58, 0
  %v85 = vsel %vm68, %v59, 0
  %v88 = vsel %vm68, %v60, 0
  %v91 = vsel %vm68, %v61, 0
  %93 = vmatprep.subr.mxu0 0.0
  %94 = vmatpush1.msra.mxu0 0.0
  %95 = vmatprep.subr.mxu0 0.0
  %96 = vmatpush1.msra.mxu0 0.0
  %97 = vmatprep.subr.mxu0 0.0
  %98 = vmatpush1.msra.mxu0 0.0
  %99 = vmatprep.subr.mxu0 0.0
  %100 = vmatpush1.msra.mxu0 0.0
  %101 = vmatprep.subr.mxu0 0.0
  %102 = vmatpush1.msra.mxu0 0.0
  %103 = vmatprep.subr.mxu0 0.0
  %104 = vmatpush1.msra.mxu0 0.0
  %105 = vmatprep.subr.mxu0 0.0
  %106 = vmatpush1.msra.mxu0 0.0
  %107 = vmatprep.subr.mxu0 0.0
  %108 = vmatpush1.msra.mxu0 0.0
  %109 = vmatprep.subr.mxu0 0.0
  %110 = vmatpush1.msra.mxu0 0.0
  %111 = vmatprep.subr.mxu0 0.0
  %112 = vmatpush1.msra.mxu0 0.0
  %113 = vmatprep.subr.mxu0 0.0
  %114 = vmatpush1.msra.mxu0 0.0
  %115 = vmatprep.subr.mxu0 0.0
  %116 = vmatpush1.msra.mxu0 0.0
  %117 = vmatprep.subr.mxu0 0.0
  %118 = vmatpush1.msra.mxu0 %v47
  %119 = vmatprep.subr.mxu0 0.0
  %120 = vmatpush1.msra.mxu0 %v46
  %121 = vmatprep.subr.mxu0 0.0
  %122 = vmatpush1.msra.mxu0 %v45
  %123 = vmatprep.subr.mxu0 0.0
  %124 = vmatpush1.msra.mxu0 %v44
  %125 = vmatprep.subr.mxu0 0.0
  %126 = vmatpush2.msra.mxu0 0.0
  %127 = vmatprep.subr.mxu0 0.0
  %128 = vmatpush2.msra.mxu0 0.0
  %129 = vmatprep.subr.mxu0 0.0
  %130 = vmatpush2.msra.mxu0 0.0
  %131 = vmatprep.subr.mxu0 0.0
  %132 = vmatpush2.msra.mxu0 0.0
  %133 = vmatprep.subr.mxu0 0.0
  %134 = vmatpush2.msra.mxu0 0.0
  %135 = vmatprep.subr.mxu0 0.0
  %136 = vmatpush2.msra.mxu0 0.0
  %137 = vmatprep.subr.mxu0 0.0
  %138 = vmatpush2.msra.mxu0 0.0
  %139 = vmatprep.subr.mxu0 0.0
  %140 = vmatpush2.msra.mxu0 0.0
  %141 = vmatprep.subr.mxu0 0.0
  %142 = vmatpush2.msra.mxu0 0.0
  %143 = vmatprep.subr.mxu0 0.0
  %144 = vmatpush2.msra.mxu0 0.0
  %145 = vmatprep.subr.mxu0 0.0
  %146 = vmatpush2.msra.mxu0 0.0
  %147 = vmatprep.subr.mxu0 0.0
  %148 = vmatpush2.msra.mxu0 0.0
  %149 = vmatprep.subr.mxu0 0.0
  %150 = vmatpush2.msra.mxu0 0.0
  %151 = vmatprep.subr.mxu0 0.0
  %152 = vmatpush2.msra.mxu0 0.0
  %153 = vmatprep.subr.mxu0 0.0
  %154 = vmatpush2.msra.mxu0 0.0
  %155 = vmatprep.subr.mxu0 0.0
  %156 = vmatpush2.msra.mxu0 0.0
  %157 = vmatprep.mubr.f32.mxu0 0.0
  %158 = vmatmul.mubr.f32.gmra.mxu0 %v70
  %v159 = vpop.f32.mrf.mxu0
  %v160 = vadd.f32 %v66, %v159
  %v161 = vpop.f32.mrf.mxu0
  %162 = vmatprep.mubr.f32.mxu0 0.0
  %163 = vmatmul.mubr.f32.gmra.mxu0 %v73
  %v164 = vpop.f32.mrf.mxu0
  %v165 = vadd.f32 %v66, %v164
  %v166 = vpop.f32.mrf.mxu0
  %167 = vmatprep.mubr.f32.mxu0 0.0
  %168 = vmatmul.mubr.f32.gmra.mxu0 %v76
  %v169 = vpop.f32.mrf.mxu0
  %v170 = vadd.f32 %v66, %v169
  %v171 = vpop.f32.mrf.mxu0
  %172 = vmatprep.mubr.f32.mxu0 0.0
  %173 = vmatmul.mubr.f32.gmra.mxu0 %v79
  %v174 = vpop.f32.mrf.mxu0
  %v175 = vadd.f32 %v66, %v174
  %v176 = vpop.f32.mrf.mxu0
  %177 = vmatprep.mubr.f32.mxu0 0.0
  %178 = vmatmul.mubr.f32.gmra.mxu0 %v82
  %v179 = vpop.f32.mrf.mxu0
  %v180 = vadd.f32 %v66, %v179
  %v181 = vpop.f32.mrf.mxu0
  %182 = vmatprep.mubr.f32.mxu0 0.0
  %183 = vmatmul.mubr.f32.gmra.mxu0 %v85
  %v184 = vpop.f32.mrf.mxu0
  %v185 = vadd.f32 %v66, %v184
  %v186 = vpop.f32.mrf.mxu0
  %187 = vmatprep.mubr.f32.mxu0 0.0
  %188 = vmatmul.mubr.f32.gmra.mxu0 %v88
  %v189 = vpop.f32.mrf.mxu0
  %v190 = vadd.f32 %v66, %v189
  %v191 = vpop.f32.mrf.mxu0
  %192 = vmatprep.mubr.f32.mxu0 0.0
  %193 = vmatmul.mubr.f32.gmra.mxu0 %v91
  %v194 = vpop.f32.mrf.mxu0
  %v195 = vadd.f32 %v66, %v194
  %v196 = vpop.f32.mrf.mxu0
  %197 = vdwg.mxu0
  %vm198 = vcmask 785408
  %199 = vst.msk [vmem:[#allocation2] sm:$0xff] %vm198, %v160
  %200 = vst.msk [vmem:[#allocation2 + $0x8] sm:$0xff] %vm198, %v165
  %201 = vst.msk [vmem:[#allocation2 + $0x10] sm:$0xff] %vm198, %v170
  %202 = vst.msk [vmem:[#allocation2 + $0x18] sm:$0xff] %vm198, %v175
  %203 = vst.msk [vmem:[#allocation2 + $0x20] sm:$0xff] %vm198, %v180
  %204 = vst.msk [vmem:[#allocation2 + $0x28] sm:$0xff] %vm198, %v185
  %205 = vst.msk [vmem:[#allocation2 + $0x30] sm:$0xff] %vm198, %v190
  %206 = vst.msk [vmem:[#allocation2 + $0x38] sm:$0xff] %vm198, %v195
  %v207 = vld [vmem:[#allocation2] sm:$0xff]
  %v209 = vlaneseq
  %v210 = vshrl.u32 %v209, 7
  %v211 = vsub.s32 0, %v210
  %v212 = vrot.slane %v53, %v211
  %v215 = vsel %vm68, 0.0, 0
  %217 = vmatprep.subr.mxu0 0.0
  %218 = vmatpush1.msra.mxu0 0.0
  %219 = vmatprep.subr.mxu0 0.0
  %220 = vmatpush1.msra.mxu0 0.0
  %221 = vmatprep.subr.mxu0 0.0
  %222 = vmatpush1.msra.mxu0 0.0
  %223 = vmatprep.subr.mxu0 0.0
  %224 = vmatpush1.msra.mxu0 0.0
  %225 = vmatprep.subr.mxu0 0.0
  %226 = vmatpush1.msra.mxu0 0.0
  %227 = vmatprep.subr.mxu0 0.0
  %228 = vmatpush1.msra.mxu0 0.0
  %229 = vmatprep.subr.mxu0 0.0
  %230 = vmatpush1.msra.mxu0 0.0
  %231 = vmatprep.subr.mxu0 0.0
  %232 = vmatpush1.msra.mxu0 0.0
  %233 = vmatprep.subr.mxu0 0.0
  %234 = vmatpush1.msra.mxu0 0.0
  %235 = vmatprep.subr.mxu0 0.0
  %236 = vmatpush1.msra.mxu0 0.0
  %237 = vmatprep.subr.mxu0 0.0
  %238 = vmatpush1.msra.mxu0 0.0
  %239 = vmatprep.subr.mxu0 0.0
  %240 = vmatpush1.msra.mxu0 0.0
  %241 = vmatprep.subr.mxu0 0.0
  %242 = vmatpush1.msra.mxu0 %v51
  %243 = vmatprep.subr.mxu0 0.0
  %244 = vmatpush1.msra.mxu0 %v50
  %245 = vmatprep.subr.mxu0 0.0
  %246 = vmatpush1.msra.mxu0 %v49
  %247 = vmatprep.subr.mxu0 0.0
  %248 = vmatpush1.msra.mxu0 %v48
  %249 = vmatprep.subr.mxu0 0.0
  %250 = vmatpush2.msra.mxu0 0.0
  %251 = vmatprep.subr.mxu0 0.0
  %252 = vmatpush2.msra.mxu0 0.0
  %253 = vmatprep.subr.mxu0 0.0
  %254 = vmatpush2.msra.mxu0 0.0
  %255 = vmatprep.subr.mxu0 0.0
  %256 = vmatpush2.msra.mxu0 0.0
  %257 = vmatprep.subr.mxu0 0.0
  %258 = vmatpush2.msra.mxu0 0.0
  %259 = vmatprep.subr.mxu0 0.0
  %260 = vmatpush2.msra.mxu0 0.0
  %261 = vmatprep.subr.mxu0 0.0
  %262 = vmatpush2.msra.mxu0 0.0
  %263 = vmatprep.subr.mxu0 0.0
  %264 = vmatpush2.msra.mxu0 0.0
  %265 = vmatprep.subr.mxu0 0.0
  %266 = vmatpush2.msra.mxu0 0.0
  %267 = vmatprep.subr.mxu0 0.0
  %268 = vmatpush2.msra.mxu0 0.0
  %269 = vmatprep.subr.mxu0 0.0
  %270 = vmatpush2.msra.mxu0 0.0
  %271 = vmatprep.subr.mxu0 0.0
  %272 = vmatpush2.msra.mxu0 0.0
  %273 = vmatprep.subr.mxu0 0.0
  %274 = vmatpush2.msra.mxu0 0.0
  %275 = vmatprep.subr.mxu0 0.0
  %276 = vmatpush2.msra.mxu0 0.0
  %277 = vmatprep.subr.mxu0 0.0
  %278 = vmatpush2.msra.mxu0 0.0
  %279 = vmatprep.subr.mxu0 0.0
  %280 = vmatpush2.msra.mxu0 0.0
  %281 = vmatprep.mubr.f32.mxu0 0.0
  %282 = vmatmul.mubr.f32.gmra.mxu0 %v215
  %v283 = vpop.f32.mrf.mxu0
  %v284 = vadd.f32 %v212, %v283
  %v285 = vpop.f32.mrf.mxu0
  %286 = vdwg.mxu0
  %v287 = vadd.f32 %v207, %v284
  %v288 = vxor.u32 %v287, 2147483648
  %v289 = vmul.f32 %v288, 1.442695
  %v290 = vpow.pop %v289
  %v291 = vadd.f32 %v290, 1.0
  %v292 = vrcp.pop %v291
  %v293 = vmul.f32 1.0, %v292
  %295 = vrot.lane.b32.xlu0 %v284, 64
  %v296 = vpop.permute.xlu0 %295
  %v298 = vmul.f32 %v293, %v296
  %300 = vrot.lane.b32.xlu0 %v298, 64
  %v301 = vpop.permute.xlu0 %300
  %v303 = vadd.f32 %v207, %v301
  %v304 = vtanh.pop %v303
  %v305 = vsub.f32 1.0, %v293
  %307 = vrot.lane.b32.xlu0 %v304, 96
  %v308 = vpop.permute.xlu0 %307
  %v310 = vmul.f32 %v305, %v308
  %v311 = vmul.f32 %v293, 0.0
  %v312 = vadd.f32 %v310, %v311
  %314 = vrot.lane.b32.xlu0 %v312, 96
  %v315 = vpop.permute.xlu0 %314
  %317 = vst.msk [vmem:[#allocation3] sm:$0xff] %vm68, %v315
  %s318 = scalar_lea.vmem [#allocation2], 8
  %v319 = vld [vmem:[%s318] sm:$0xff]
  %v320 = vsel %vm68, %v315, 0
  %322 = vmatprep.subr.mxu0 0.0
  %323 = vmatpush1.msra.mxu0 0.0
  %324 = vmatprep.subr.mxu0 0.0
  %325 = vmatpush1.msra.mxu0 0.0
  %326 = vmatprep.subr.mxu0 0.0
  %327 = vmatpush1.msra.mxu0 0.0
  %328 = vmatprep.subr.mxu0 0.0
  %329 = vmatpush1.msra.mxu0 0.0
  %330 = vmatprep.subr.mxu0 0.0
  %331 = vmatpush1.msra.mxu0 0.0
  %332 = vmatprep.subr.mxu0 0.0
  %333 = vmatpush1.msra.mxu0 0.0
  %334 = vmatprep.subr.mxu0 0.0
  %335 = vmatpush1.msra.mxu0 0.0
  %336 = vmatprep.subr.mxu0 0.0
  %337 = vmatpush1.msra.mxu0 0.0
  %338 = vmatprep.subr.mxu0 0.0
  %339 = vmatpush1.msra.mxu0 0.0
  %340 = vmatprep.subr.mxu0 0.0
  %341 = vmatpush1.msra.mxu0 0.0
  %342 = vmatprep.subr.mxu0 0.0
  %343 = vmatpush1.msra.mxu0 0.0
  %344 = vmatprep.subr.mxu0 0.0
  %345 = vmatpush1.msra.mxu0 0.0
  %346 = vmatprep.subr.mxu0 0.0
  %347 = vmatpush1.msra.mxu0 %v51
  %348 = vmatprep.subr.mxu0 0.0
  %349 = vmatpush1.msra.mxu0 %v50
  %350 = vmatprep.subr.mxu0 0.0
  %351 = vmatpush1.msra.mxu0 %v49
  %352 = vmatprep.subr.mxu0 0.0
  %353 = vmatpush1.msra.mxu0 %v48
  %354 = vmatprep.subr.mxu0 0.0
  %355 = vmatpush2.msra.mxu0 0.0
  %356 = vmatprep.subr.mxu0 0.0
  %357 = vmatpush2.msra.mxu0 0.0
  %358 = vmatprep.subr.mxu0 0.0
  %359 = vmatpush2.msra.mxu0 0.0
  %360 = vmatprep.subr.mxu0 0.0
  %361 = vmatpush2.msra.mxu0 0.0
  %362 = vmatprep.subr.mxu0 0.0
  %363 = vmatpush2.msra.mxu0 0.0
  %364 = vmatprep.subr.mxu0 0.0
  %365 = vmatpush2.msra.mxu0 0.0
  %366 = vmatprep.subr.mxu0 0.0
  %367 = vmatpush2.msra.mxu0 0.0
  %368 = vmatprep.subr.mxu0 0.0
  %369 = vmatpush2.msra.mxu0 0.0
  %370 = vmatprep.subr.mxu0 0.0
  %371 = vmatpush2.msra.mxu0 0.0
  %372 = vmatprep.subr.mxu0 0.0
  %373 = vmatpush2.msra.mxu0 0.0
  %374 = vmatprep.subr.mxu0 0.0
  %375 = vmatpush2.msra.mxu0 0.0
  %376 = vmatprep.subr.mxu0 0.0
  %377 = vmatpush2.msra.mxu0 0.0
  %378 = vmatprep.subr.mxu0 0.0
  %379 = vmatpush2.msra.mxu0 0.0
  %380 = vmatprep.subr.mxu0 0.0
  %381 = vmatpush2.msra.mxu0 0.0
  %382 = vmatprep.subr.mxu0 0.0
  %383 = vmatpush2.msra.mxu0 0.0
  %384 = vmatprep.subr.mxu0 0.0
  %385 = vmatpush2.msra.mxu0 0.0
  %386 = vmatprep.mubr.f32.mxu0 0.0
  %387 = vmatmul.mubr.f32.gmra.mxu0 %v320
  %v388 = vpop.f32.mrf.mxu0
  %v389 = vadd.f32 %v212, %v388
  %v390 = vpop.f32.mrf.mxu0
  %391 = vdwg.mxu0
  %v392 = vadd.f32 %v319, %v389
  %v393 = vxor.u32 %v392, 2147483648
  %v394 = vmul.f32 %v393, 1.442695
  %v395 = vpow.pop %v394
  %v396 = vadd.f32 %v395, 1.0
  %v397 = vrcp.pop %v396
  %v398 = vmul.f32 1.0, %v397
  %400 = vrot.lane.b32.xlu0 %v389, 64
  %v401 = vpop.permute.xlu0 %400
  %v403 = vmul.f32 %v398, %v401
  %405 = vrot.lane.b32.xlu0 %v403, 64
  %v406 = vpop.permute.xlu0 %405
  %v408 = vadd.f32 %v319, %v406
  %v409 = vtanh.pop %v408
  %v410 = vsub.f32 1.0, %v398
  %412 = vrot.lane.b32.xlu0 %v409, 96
  %v413 = vpop.permute.xlu0 %412
  %v415 = vmul.f32 %v410, %v413
  %v416 = vmul.f32 %v398, %v312
  %v417 = vadd.f32 %v415, %v416
  %419 = vrot.lane.b32.xlu0 %v417, 96
  %v420 = vpop.permute.xlu0 %419
  %s422 = scalar_lea.vmem [#allocation3], 8
  %423 = vst.msk [vmem:[%s422] sm:$0xff] %vm68, %v420
  %s424 = scalar_lea.vmem [#allocation2], 16
  %v425 = vld [vmem:[%s424] sm:$0xff]
  %v426 = vsel %vm68, %v420, 0
  %428 = vmatprep.subr.mxu0 0.0
  %429 = vmatpush1.msra.mxu0 0.0
  %430 = vmatprep.subr.mxu0 0.0
  %431 = vmatpush1.msra.mxu0 0.0
  %432 = vmatprep.subr.mxu0 0.0
  %433 = vmatpush1.msra.mxu0 0.0
  %434 = vmatprep.subr.mxu0 0.0
  %435 = vmatpush1.msra.mxu0 0.0
  %436 = vmatprep.subr.mxu0 0.0
  %437 = vmatpush1.msra.mxu0 0.0
  %438 = vmatprep.subr.mxu0 0.0
  %439 = vmatpush1.msra.mxu0 0.0
  %440 = vmatprep.subr.mxu0 0.0
  %441 = vmatpush1.msra.mxu0 0.0
  %442 = vmatprep.subr.mxu0 0.0
  %443 = vmatpush1.msra.mxu0 0.0
  %444 = vmatprep.subr.mxu0 0.0
  %445 = vmatpush1.msra.mxu0 0.0
  %446 = vmatprep.subr.mxu0 0.0
  %447 = vmatpush1.msra.mxu0 0.0
  %448 = vmatprep.subr.mxu0 0.0
  %449 = vmatpush1.msra.mxu0 0.0
  %450 = vmatprep.subr.mxu0 0.0
  %451 = vmatpush1.msra.mxu0 0.0
  %452 = vmatprep.subr.mxu0 0.0
  %453 = vmatpush1.msra.mxu0 %v51
  %454 = vmatprep.subr.mxu0 0.0
  %455 = vmatpush1.msra.mxu0 %v50
  %456 = vmatprep.subr.mxu0 0.0
  %457 = vmatpush1.msra.mxu0 %v49
  %458 = vmatprep.subr.mxu0 0.0
  %459 = vmatpush1.msra.mxu0 %v48
  %460 = vmatprep.subr.mxu0 0.0
  %461 = vmatpush2.msra.mxu0 0.0
  %462 = vmatprep.subr.mxu0 0.0
  %463 = vmatpush2.msra.mxu0 0.0
  %464 = vmatprep.subr.mxu0 0.0
  %465 = vmatpush2.msra.mxu0 0.0
  %466 = vmatprep.subr.mxu0 0.0
  %467 = vmatpush2.msra.mxu0 0.0
  %468 = vmatprep.subr.mxu0 0.0
  %469 = vmatpush2.msra.mxu0 0.0
  %470 = vmatprep.subr.mxu0 0.0
  %471 = vmatpush2.msra.mxu0 0.0
  %472 = vmatprep.subr.mxu0 0.0
  %473 = vmatpush2.msra.mxu0 0.0
  %474 = vmatprep.subr.mxu0 0.0
  %475 = vmatpush2.msra.mxu0 0.0
  %476 = vmatprep.subr.mxu0 0.0
  %477 = vmatpush2.msra.mxu0 0.0
  %478 = vmatprep.subr.mxu0 0.0
  %479 = vmatpush2.msra.mxu0 0.0
  %480 = vmatprep.subr.mxu0 0.0
  %481 = vmatpush2.msra.mxu0 0.0
  %482 = vmatprep.subr.mxu0 0.0
  %483 = vmatpush2.msra.mxu0 0.0
  %484 = vmatprep.subr.mxu0 0.0
  %485 = vmatpush2.msra.mxu0 0.0
  %486 = vmatprep.subr.mxu0 0.0
  %487 = vmatpush2.msra.mxu0 0.0
  %488 = vmatprep.subr.mxu0 0.0
  %489 = vmatpush2.msra.mxu0 0.0
  %490 = vmatprep.subr.mxu0 0.0
  %491 = vmatpush2.msra.mxu0 0.0
  %492 = vmatprep.mubr.f32.mxu0 0.0
  %493 = vmatmul.mubr.f32.gmra.mxu0 %v426
  %v494 = vpop.f32.mrf.mxu0
  %v495 = vadd.f32 %v212, %v494
  %v496 = vpop.f32.mrf.mxu0
  %497 = vdwg.mxu0
  %v498 = vadd.f32 %v425, %v495
  %v499 = vxor.u32 %v498, 2147483648
  %v500 = vmul.f32 %v499, 1.442695
  %v501 = vpow.pop %v500
  %v502 = vadd.f32 %v501, 1.0
  %v503 = vrcp.pop %v502
  %v504 = vmul.f32 1.0, %v503
  %506 = vrot.lane.b32.xlu0 %v495, 64
  %v507 = vpop.permute.xlu0 %506
  %v509 = vmul.f32 %v504, %v507
  %511 = vrot.lane.b32.xlu0 %v509, 64
  %v512 = vpop.permute.xlu0 %511
  %v514 = vadd.f32 %v425, %v512
  %v515 = vtanh.pop %v514
  %v516 = vsub.f32 1.0, %v504
  %518 = vrot.lane.b32.xlu0 %v515, 96
  %v519 = vpop.permute.xlu0 %518
  %v521 = vmul.f32 %v516, %v519
  %v522 = vmul.f32 %v504, %v417
  %v523 = vadd.f32 %v521, %v522
  %525 = vrot.lane.b32.xlu0 %v523, 96
  %v526 = vpop.permute.xlu0 %525
  %s528 = scalar_lea.vmem [#allocation3], 16
  %529 = vst.msk [vmem:[%s528] sm:$0xff] %vm68, %v526
  %s530 = scalar_lea.vmem [#allocation2], 24
  %v531 = vld [vmem:[%s530] sm:$0xff]
  %v532 = vsel %vm68, %v526, 0
  %534 = vmatprep.subr.mxu0 0.0
  %535 = vmatpush1.msra.mxu0 0.0
  %536 = vmatprep.subr.mxu0 0.0
  %537 = vmatpush1.msra.mxu0 0.0
  %538 = vmatprep.subr.mxu0 0.0
  %539 = vmatpush1.msra.mxu0 0.0
  %540 = vmatprep.subr.mxu0 0.0
  %541 = vmatpush1.msra.mxu0 0.0
  %542 = vmatprep.subr.mxu0 0.0
  %543 = vmatpush1.msra.mxu0 0.0
  %544 = vmatprep.subr.mxu0 0.0
  %545 = vmatpush1.msra.mxu0 0.0
  %546 = vmatprep.subr.mxu0 0.0
  %547 = vmatpush1.msra.mxu0 0.0
  %548 = vmatprep.subr.mxu0 0.0
  %549 = vmatpush1.msra.mxu0 0.0
  %550 = vmatprep.subr.mxu0 0.0
  %551 = vmatpush1.msra.mxu0 0.0
  %552 = vmatprep.subr.mxu0 0.0
  %553 = vmatpush1.msra.mxu0 0.0
  %554 = vmatprep.subr.mxu0 0.0
  %555 = vmatpush1.msra.mxu0 0.0
  %556 = vmatprep.subr.mxu0 0.0
  %557 = vmatpush1.msra.mxu0 0.0
  %558 = vmatprep.subr.mxu0 0.0
  %559 = vmatpush1.msra.mxu0 %v51
  %560 = vmatprep.subr.mxu0 0.0
  %561 = vmatpush1.msra.mxu0 %v50
  %562 = vmatprep.subr.mxu0 0.0
  %563 = vmatpush1.msra.mxu0 %v49
  %564 = vmatprep.subr.mxu0 0.0
  %565 = vmatpush1.msra.mxu0 %v48
  %566 = vmatprep.subr.mxu0 0.0
  %567 = vmatpush2.msra.mxu0 0.0
  %568 = vmatprep.subr.mxu0 0.0
  %569 = vmatpush2.msra.mxu0 0.0
  %570 = vmatprep.subr.mxu0 0.0
  %571 = vmatpush2.msra.mxu0 0.0
  %572 = vmatprep.subr.mxu0 0.0
  %573 = vmatpush2.msra.mxu0 0.0
  %574 = vmatprep.subr.mxu0 0.0
  %575 = vmatpush2.msra.mxu0 0.0
  %576 = vmatprep.subr.mxu0 0.0
  %577 = vmatpush2.msra.mxu0 0.0
  %578 = vmatprep.subr.mxu0 0.0
  %579 = vmatpush2.msra.mxu0 0.0
  %580 = vmatprep.subr.mxu0 0.0
  %581 = vmatpush2.msra.mxu0 0.0
  %582 = vmatprep.subr.mxu0 0.0
  %583 = vmatpush2.msra.mxu0 0.0
  %584 = vmatprep.subr.mxu0 0.0
  %585 = vmatpush2.msra.mxu0 0.0
  %586 = vmatprep.subr.mxu0 0.0
  %587 = vmatpush2.msra.mxu0 0.0
  %588 = vmatprep.subr.mxu0 0.0
  %589 = vmatpush2.msra.mxu0 0.0
  %590 = vmatprep.subr.mxu0 0.0
  %591 = vmatpush2.msra.mxu0 0.0
  %592 = vmatprep.subr.mxu0 0.0
  %593 = vmatpush2.msra.mxu0 0.0
  %594 = vmatprep.subr.mxu0 0.0
  %595 = vmatpush2.msra.mxu0 0.0
  %596 = vmatprep.subr.mxu0 0.0
  %597 = vmatpush2.msra.mxu0 0.0
  %598 = vmatprep.mubr.f32.mxu0 0.0
  %599 = vmatmul.mubr.f32.gmra.mxu0 %v532
  %v600 = vpop.f32.mrf.mxu0
  %v601 = vadd.f32 %v212, %v600
  %v602 = vpop.f32.mrf.mxu0
  %603 = vdwg.mxu0
  %v604 = vadd.f32 %v531, %v601
  %v605 = vxor.u32 %v604, 2147483648
  %v606 = vmul.f32 %v605, 1.442695
  %v607 = vpow.pop %v606
  %v608 = vadd.f32 %v607, 1.0
  %v609 = vrcp.pop %v608
  %v610 = vmul.f32 1.0, %v609
  %612 = vrot.lane.b32.xlu0 %v601, 64
  %v613 = vpop.permute.xlu0 %612
  %v615 = vmul.f32 %v610, %v613
  %617 = vrot.lane.b32.xlu0 %v615, 64
  %v618 = vpop.permute.xlu0 %617
  %v620 = vadd.f32 %v531, %v618
  %v621 = vtanh.pop %v620
  %v622 = vsub.f32 1.0, %v610
  %624 = vrot.lane.b32.xlu0 %v621, 96
  %v625 = vpop.permute.xlu0 %624
  %v627 = vmul.f32 %v622, %v625
  %v628 = vmul.f32 %v610, %v523
  %v629 = vadd.f32 %v627, %v628
  %631 = vrot.lane.b32.xlu0 %v629, 96
  %v632 = vpop.permute.xlu0 %631
  %s634 = scalar_lea.vmem [#allocation3], 24
  %635 = vst.msk [vmem:[%s634] sm:$0xff] %vm68, %v632
  %s636 = scalar_lea.vmem [#allocation2], 32
  %v637 = vld [vmem:[%s636] sm:$0xff]
  %v638 = vsel %vm68, %v632, 0
  %640 = vmatprep.subr.mxu0 0.0
  %641 = vmatpush1.msra.mxu0 0.0
  %642 = vmatprep.subr.mxu0 0.0
  %643 = vmatpush1.msra.mxu0 0.0
  %644 = vmatprep.subr.mxu0 0.0
  %645 = vmatpush1.msra.mxu0 0.0
  %646 = vmatprep.subr.mxu0 0.0
  %647 = vmatpush1.msra.mxu0 0.0
  %648 = vmatprep.subr.mxu0 0.0
  %649 = vmatpush1.msra.mxu0 0.0
  %650 = vmatprep.subr.mxu0 0.0
  %651 = vmatpush1.msra.mxu0 0.0
  %652 = vmatprep.subr.mxu0 0.0
  %653 = vmatpush1.msra.mxu0 0.0
  %654 = vmatprep.subr.mxu0 0.0
  %655 = vmatpush1.msra.mxu0 0.0
  %656 = vmatprep.subr.mxu0 0.0
  %657 = vmatpush1.msra.mxu0 0.0
  %658 = vmatprep.subr.mxu0 0.0
  %659 = vmatpush1.msra.mxu0 0.0
  %660 = vmatprep.subr.mxu0 0.0
  %661 = vmatpush1.msra.mxu0 0.0
  %662 = vmatprep.subr.mxu0 0.0
  %663 = vmatpush1.msra.mxu0 0.0
  %664 = vmatprep.subr.mxu0 0.0
  %665 = vmatpush1.msra.mxu0 %v51
  %666 = vmatprep.subr.mxu0 0.0
  %667 = vmatpush1.msra.mxu0 %v50
  %668 = vmatprep.subr.mxu0 0.0
  %669 = vmatpush1.msra.mxu0 %v49
  %670 = vmatprep.subr.mxu0 0.0
  %671 = vmatpush1.msra.mxu0 %v48
  %672 = vmatprep.subr.mxu0 0.0
  %673 = vmatpush2.msra.mxu0 0.0
  %674 = vmatprep.subr.mxu0 0.0
  %675 = vmatpush2.msra.mxu0 0.0
  %676 = vmatprep.subr.mxu0 0.0
  %677 = vmatpush2.msra.mxu0 0.0
  %678 = vmatprep.subr.mxu0 0.0
  %679 = vmatpush2.msra.mxu0 0.0
  %680 = vmatprep.subr.mxu0 0.0
  %681 = vmatpush2.msra.mxu0 0.0
  %682 = vmatprep.subr.mxu0 0.0
  %683 = vmatpush2.msra.mxu0 0.0
  %684 = vmatprep.subr.mxu0 0.0
  %685 = vmatpush2.msra.mxu0 0.0
  %686 = vmatprep.subr.mxu0 0.0
  %687 = vmatpush2.msra.mxu0 0.0
  %688 = vmatprep.subr.mxu0 0.0
  %689 = vmatpush2.msra.mxu0 0.0
  %690 = vmatprep.subr.mxu0 0.0
  %691 = vmatpush2.msra.mxu0 0.0
  %692 = vmatprep.subr.mxu0 0.0
  %693 = vmatpush2.msra.mxu0 0.0
  %694 = vmatprep.subr.mxu0 0.0
  %695 = vmatpush2.msra.mxu0 0.0
  %696 = vmatprep.subr.mxu0 0.0
  %697 = vmatpush2.msra.mxu0 0.0
  %698 = vmatprep.subr.mxu0 0.0
  %699 = vmatpush2.msra.mxu0 0.0
  %700 = vmatprep.subr.mxu0 0.0
  %701 = vmatpush2.msra.mxu0 0.0
  %702 = vmatprep.subr.mxu0 0.0
  %703 = vmatpush2.msra.mxu0 0.0
  %704 = vmatprep.mubr.f32.mxu0 0.0
  %705 = vmatmul.mubr.f32.gmra.mxu0 %v638
  %v706 = vpop.f32.mrf.mxu0
  %v707 = vadd.f32 %v212, %v706
  %v708 = vpop.f32.mrf.mxu0
  %709 = vdwg.mxu0
  %v710 = vadd.f32 %v637, %v707
  %v711 = vxor.u32 %v710, 2147483648
  %v712 = vmul.f32 %v711, 1.442695
  %v713 = vpow.pop %v712
  %v714 = vadd.f32 %v713, 1.0
  %v715 = vrcp.pop %v714
  %v716 = vmul.f32 1.0, %v715
  %718 = vrot.lane.b32.xlu0 %v707, 64
  %v719 = vpop.permute.xlu0 %718
  %v721 = vmul.f32 %v716, %v719
  %723 = vrot.lane.b32.xlu0 %v721, 64
  %v724 = vpop.permute.xlu0 %723
  %v726 = vadd.f32 %v637, %v724
  %v727 = vtanh.pop %v726
  %v728 = vsub.f32 1.0, %v716
  %730 = vrot.lane.b32.xlu0 %v727, 96
  %v731 = vpop.permute.xlu0 %730
  %v733 = vmul.f32 %v728, %v731
  %v734 = vmul.f32 %v716, %v629
  %v735 = vadd.f32 %v733, %v734
  %737 = vrot.lane.b32.xlu0 %v735, 96
  %v738 = vpop.permute.xlu0 %737
  %s740 = scalar_lea.vmem [#allocation3], 32
  %741 = vst.msk [vmem:[%s740] sm:$0xff] %vm68, %v738
  %s742 = scalar_lea.vmem [#allocation2], 40
  %v743 = vld [vmem:[%s742] sm:$0xff]
  %v744 = vsel %vm68, %v738, 0
  %746 = vmatprep.subr.mxu0 0.0
  %747 = vmatpush1.msra.mxu0 0.0
  %748 = vmatprep.subr.mxu0 0.0
  %749 = vmatpush1.msra.mxu0 0.0
  %750 = vmatprep.subr.mxu0 0.0
  %751 = vmatpush1.msra.mxu0 0.0
  %752 = vmatprep.subr.mxu0 0.0
  %753 = vmatpush1.msra.mxu0 0.0
  %754 = vmatprep.subr.mxu0 0.0
  %755 = vmatpush1.msra.mxu0 0.0
  %756 = vmatprep.subr.mxu0 0.0
  %757 = vmatpush1.msra.mxu0 0.0
  %758 = vmatprep.subr.mxu0 0.0
  %759 = vmatpush1.msra.mxu0 0.0
  %760 = vmatprep.subr.mxu0 0.0
  %761 = vmatpush1.msra.mxu0 0.0
  %762 = vmatprep.subr.mxu0 0.0
  %763 = vmatpush1.msra.mxu0 0.0
  %764 = vmatprep.subr.mxu0 0.0
  %765 = vmatpush1.msra.mxu0 0.0
  %766 = vmatprep.subr.mxu0 0.0
  %767 = vmatpush1.msra.mxu0 0.0
  %768 = vmatprep.subr.mxu0 0.0
  %769 = vmatpush1.msra.mxu0 0.0
  %770 = vmatprep.subr.mxu0 0.0
  %771 = vmatpush1.msra.mxu0 %v51
  %772 = vmatprep.subr.mxu0 0.0
  %773 = vmatpush1.msra.mxu0 %v50
  %774 = vmatprep.subr.mxu0 0.0
  %775 = vmatpush1.msra.mxu0 %v49
  %776 = vmatprep.subr.mxu0 0.0
  %777 = vmatpush1.msra.mxu0 %v48
  %778 = vmatprep.subr.mxu0 0.0
  %779 = vmatpush2.msra.mxu0 0.0
  %780 = vmatprep.subr.mxu0 0.0
  %781 = vmatpush2.msra.mxu0 0.0
  %782 = vmatprep.subr.mxu0 0.0
  %783 = vmatpush2.msra.mxu0 0.0
  %784 = vmatprep.subr.mxu0 0.0
  %785 = vmatpush2.msra.mxu0 0.0
  %786 = vmatprep.subr.mxu0 0.0
  %787 = vmatpush2.msra.mxu0 0.0
  %788 = vmatprep.subr.mxu0 0.0
  %789 = vmatpush2.msra.mxu0 0.0
  %790 = vmatprep.subr.mxu0 0.0
  %791 = vmatpush2.msra.mxu0 0.0
  %792 = vmatprep.subr.mxu0 0.0
  %793 = vmatpush2.msra.mxu0 0.0
  %794 = vmatprep.subr.mxu0 0.0
  %795 = vmatpush2.msra.mxu0 0.0
  %796 = vmatprep.subr.mxu0 0.0
  %797 = vmatpush2.msra.mxu0 0.0
  %798 = vmatprep.subr.mxu0 0.0
  %799 = vmatpush2.msra.mxu0 0.0
  %800 = vmatprep.subr.mxu0 0.0
  %801 = vmatpush2.msra.mxu0 0.0
  %802 = vmatprep.subr.mxu0 0.0
  %803 = vmatpush2.msra.mxu0 0.0
  %804 = vmatprep.subr.mxu0 0.0
  %805 = vmatpush2.msra.mxu0 0.0
  %806 = vmatprep.subr.mxu0 0.0
  %807 = vmatpush2.msra.mxu0 0.0
  %808 = vmatprep.subr.mxu0 0.0
  %809 = vmatpush2.msra.mxu0 0.0
  %810 = vmatprep.mubr.f32.mxu0 0.0
  %811 = vmatmul.mubr.f32.gmra.mxu0 %v744
  %v812 = vpop.f32.mrf.mxu0
  %v813 = vadd.f32 %v212, %v812
  %v814 = vpop.f32.mrf.mxu0
  %815 = vdwg.mxu0
  %v816 = vadd.f32 %v743, %v813
  %v817 = vxor.u32 %v816, 2147483648
  %v818 = vmul.f32 %v817, 1.442695
  %v819 = vpow.pop %v818
  %v820 = vadd.f32 %v819, 1.0
  %v821 = vrcp.pop %v820
  %v822 = vmul.f32 1.0, %v821
  %824 = vrot.lane.b32.xlu0 %v813, 64
  %v825 = vpop.permute.xlu0 %824
  %v827 = vmul.f32 %v822, %v825
  %829 = vrot.lane.b32.xlu0 %v827, 64
  %v830 = vpop.permute.xlu0 %829
  %v832 = vadd.f32 %v743, %v830
  %v833 = vtanh.pop %v832
  %v834 = vsub.f32 1.0, %v822
  %836 = vrot.lane.b32.xlu0 %v833, 96
  %v837 = vpop.permute.xlu0 %836
  %v839 = vmul.f32 %v834, %v837
  %v840 = vmul.f32 %v822, %v735
  %v841 = vadd.f32 %v839, %v840
  %843 = vrot.lane.b32.xlu0 %v841, 96
  %v844 = vpop.permute.xlu0 %843
  %s846 = scalar_lea.vmem [#allocation3], 40
  %847 = vst.msk [vmem:[%s846] sm:$0xff] %vm68, %v844
  %s848 = scalar_lea.vmem [#allocation2], 48
  %v849 = vld [vmem:[%s848] sm:$0xff]
  %v850 = vsel %vm68, %v844, 0
  %852 = vmatprep.subr.mxu0 0.0
  %853 = vmatpush1.msra.mxu0 0.0
  %854 = vmatprep.subr.mxu0 0.0
  %855 = vmatpush1.msra.mxu0 0.0
  %856 = vmatprep.subr.mxu0 0.0
  %857 = vmatpush1.msra.mxu0 0.0
  %858 = vmatprep.subr.mxu0 0.0
  %859 = vmatpush1.msra.mxu0 0.0
  %860 = vmatprep.subr.mxu0 0.0
  %861 = vmatpush1.msra.mxu0 0.0
  %862 = vmatprep.subr.mxu0 0.0
  %863 = vmatpush1.msra.mxu0 0.0
  %864 = vmatprep.subr.mxu0 0.0
  %865 = vmatpush1.msra.mxu0 0.0
  %866 = vmatprep.subr.mxu0 0.0
  %867 = vmatpush1.msra.mxu0 0.0
  %868 = vmatprep.subr.mxu0 0.0
  %869 = vmatpush1.msra.mxu0 0.0
  %870 = vmatprep.subr.mxu0 0.0
  %871 = vmatpush1.msra.mxu0 0.0
  %872 = vmatprep.subr.mxu0 0.0
  %873 = vmatpush1.msra.mxu0 0.0
  %874 = vmatprep.subr.mxu0 0.0
  %875 = vmatpush1.msra.mxu0 0.0
  %876 = vmatprep.subr.mxu0 0.0
  %877 = vmatpush1.msra.mxu0 %v51
  %878 = vmatprep.subr.mxu0 0.0
  %879 = vmatpush1.msra.mxu0 %v50
  %880 = vmatprep.subr.mxu0 0.0
  %881 = vmatpush1.msra.mxu0 %v49
  %882 = vmatprep.subr.mxu0 0.0
  %883 = vmatpush1.msra.mxu0 %v48
  %884 = vmatprep.subr.mxu0 0.0
  %885 = vmatpush2.msra.mxu0 0.0
  %886 = vmatprep.subr.mxu0 0.0
  %887 = vmatpush2.msra.mxu0 0.0
  %888 = vmatprep.subr.mxu0 0.0
  %889 = vmatpush2.msra.mxu0 0.0
  %890 = vmatprep.subr.mxu0 0.0
  %891 = vmatpush2.msra.mxu0 0.0
  %892 = vmatprep.subr.mxu0 0.0
  %893 = vmatpush2.msra.mxu0 0.0
  %894 = vmatprep.subr.mxu0 0.0
  %895 = vmatpush2.msra.mxu0 0.0
  %896 = vmatprep.subr.mxu0 0.0
  %897 = vmatpush2.msra.mxu0 0.0
  %898 = vmatprep.subr.mxu0 0.0
  %899 = vmatpush2.msra.mxu0 0.0
  %900 = vmatprep.subr.mxu0 0.0
  %901 = vmatpush2.msra.mxu0 0.0
  %902 = vmatprep.subr.mxu0 0.0
  %903 = vmatpush2.msra.mxu0 0.0
  %904 = vmatprep.subr.mxu0 0.0
  %905 = vmatpush2.msra.mxu0 0.0
  %906 = vmatprep.subr.mxu0 0.0
  %907 = vmatpush2.msra.mxu0 0.0
  %908 = vmatprep.subr.mxu0 0.0
  %909 = vmatpush2.msra.mxu0 0.0
  %910 = vmatprep.subr.mxu0 0.0
  %911 = vmatpush2.msra.mxu0 0.0
  %912 = vmatprep.subr.mxu0 0.0
  %913 = vmatpush2.msra.mxu0 0.0
  %914 = vmatprep.subr.mxu0 0.0
  %915 = vmatpush2.msra.mxu0 0.0
  %916 = vmatprep.mubr.f32.mxu0 0.0
  %917 = vmatmul.mubr.f32.gmra.mxu0 %v850
  %v918 = vpop.f32.mrf.mxu0
  %v919 = vadd.f32 %v212, %v918
  %v920 = vpop.f32.mrf.mxu0
  %921 = vdwg.mxu0
  %v922 = vadd.f32 %v849, %v919
  %v923 = vxor.u32 %v922, 2147483648
  %v924 = vmul.f32 %v923, 1.442695
  %v925 = vpow.pop %v924
  %v926 = vadd.f32 %v925, 1.0
  %v927 = vrcp.pop %v926
  %v928 = vmul.f32 1.0, %v927
  %930 = vrot.lane.b32.xlu0 %v919, 64
  %v931 = vpop.permute.xlu0 %930
  %v933 = vmul.f32 %v928, %v931
  %935 = vrot.lane.b32.xlu0 %v933, 64
  %v936 = vpop.permute.xlu0 %935
  %v938 = vadd.f32 %v849, %v936
  %v939 = vtanh.pop %v938
  %v940 = vsub.f32 1.0, %v928
  %942 = vrot.lane.b32.xlu0 %v939, 96
  %v943 = vpop.permute.xlu0 %942
  %v945 = vmul.f32 %v940, %v943
  %v946 = vmul.f32 %v928, %v841
  %v947 = vadd.f32 %v945, %v946
  %949 = vrot.lane.b32.xlu0 %v947, 96
  %v950 = vpop.permute.xlu0 %949
  %s952 = scalar_lea.vmem [#allocation3], 48
  %953 = vst.msk [vmem:[%s952] sm:$0xff] %vm68, %v950
  %s954 = scalar_lea.vmem [#allocation2], 56
  %v955 = vld [vmem:[%s954] sm:$0xff]
  %v956 = vsel %vm68, %v950, 0
  %958 = vmatprep.subr.mxu0 0.0
  %959 = vmatpush1.msra.mxu0 0.0
  %960 = vmatprep.subr.mxu0 0.0
  %961 = vmatpush1.msra.mxu0 0.0
  %962 = vmatprep.subr.mxu0 0.0
  %963 = vmatpush1.msra.mxu0 0.0
  %964 = vmatprep.subr.mxu0 0.0
  %965 = vmatpush1.msra.mxu0 0.0
  %966 = vmatprep.subr.mxu0 0.0
  %967 = vmatpush1.msra.mxu0 0.0
  %968 = vmatprep.subr.mxu0 0.0
  %969 = vmatpush1.msra.mxu0 0.0
  %970 = vmatprep.subr.mxu0 0.0
  %971 = vmatpush1.msra.mxu0 0.0
  %972 = vmatprep.subr.mxu0 0.0
  %973 = vmatpush1.msra.mxu0 0.0
  %974 = vmatprep.subr.mxu0 0.0
  %975 = vmatpush1.msra.mxu0 0.0
  %976 = vmatprep.subr.mxu0 0.0
  %977 = vmatpush1.msra.mxu0 0.0
  %978 = vmatprep.subr.mxu0 0.0
  %979 = vmatpush1.msra.mxu0 0.0
  %980 = vmatprep.subr.mxu0 0.0
  %981 = vmatpush1.msra.mxu0 0.0
  %982 = vmatprep.subr.mxu0 0.0
  %983 = vmatpush1.msra.mxu0 %v51
  %984 = vmatprep.subr.mxu0 0.0
  %985 = vmatpush1.msra.mxu0 %v50
  %986 = vmatprep.subr.mxu0 0.0
  %987 = vmatpush1.msra.mxu0 %v49
  %988 = vmatprep.subr.mxu0 0.0
  %989 = vmatpush1.msra.mxu0 %v48
  %990 = vmatprep.subr.mxu0 0.0
  %991 = vmatpush2.msra.mxu0 0.0
  %992 = vmatprep.subr.mxu0 0.0
  %993 = vmatpush2.msra.mxu0 0.0
  %994 = vmatprep.subr.mxu0 0.0
  %995 = vmatpush2.msra.mxu0 0.0
  %996 = vmatprep.subr.mxu0 0.0
  %997 = vmatpush2.msra.mxu0 0.0
  %998 = vmatprep.subr.mxu0 0.0
  %999 = vmatpush2.msra.mxu0 0.0
  %1000 = vmatprep.subr.mxu0 0.0
  %1001 = vmatpush2.msra.mxu0 0.0
  %1002 = vmatprep.subr.mxu0 0.0
  %1003 = vmatpush2.msra.mxu0 0.0
  %1004 = vmatprep.subr.mxu0 0.0
  %1005 = vmatpush2.msra.mxu0 0.0
  %1006 = vmatprep.subr.mxu0 0.0
  %1007 = vmatpush2.msra.mxu0 0.0
  %1008 = vmatprep.subr.mxu0 0.0
  %1009 = vmatpush2.msra.mxu0 0.0
  %1010 = vmatprep.subr.mxu0 0.0
  %1011 = vmatpush2.msra.mxu0 0.0
  %1012 = vmatprep.subr.mxu0 0.0
  %1013 = vmatpush2.msra.mxu0 0.0
  %1014 = vmatprep.subr.mxu0 0.0
  %1015 = vmatpush2.msra.mxu0 0.0
  %1016 = vmatprep.subr.mxu0 0.0
  %1017 = vmatpush2.msra.mxu0 0.0
  %1018 = vmatprep.subr.mxu0 0.0
  %1019 = vmatpush2.msra.mxu0 0.0
  %1020 = vmatprep.subr.mxu0 0.0
  %1021 = vmatpush2.msra.mxu0 0.0
  %1022 = vmatprep.mubr.f32.mxu0 0.0
  %1023 = vmatmul.mubr.f32.gmra.mxu0 %v956
  %v1024 = vpop.f32.mrf.mxu0
  %v1025 = vadd.f32 %v212, %v1024
  %v1026 = vpop.f32.mrf.mxu0
  %1027 = vdwg.mxu0
  %v1028 = vadd.f32 %v955, %v1025
  %v1029 = vxor.u32 %v1028, 2147483648
  %v1030 = vmul.f32 %v1029, 1.442695
  %v1031 = vpow.pop %v1030
  %v1032 = vadd.f32 %v1031, 1.0
  %v1033 = vrcp.pop %v1032
  %v1034 = vmul.f32 1.0, %v1033
  %1036 = vrot.lane.b32.xlu0 %v1025, 64
  %v1037 = vpop.permute.xlu0 %1036
  %v1039 = vmul.f32 %v1034, %v1037
  %1041 = vrot.lane.b32.xlu0 %v1039, 64
  %v1042 = vpop.permute.xlu0 %1041
  %v1044 = vadd.f32 %v955, %v1042
  %v1045 = vtanh.pop %v1044
  %v1046 = vsub.f32 1.0, %v1034
  %1048 = vrot.lane.b32.xlu0 %v1045, 96
  %v1049 = vpop.permute.xlu0 %1048
  %v1051 = vmul.f32 %v1046, %v1049
  %v1052 = vmul.f32 %v1034, %v947
  %v1053 = vadd.f32 %v1051, %v1052
  %1055 = vrot.lane.b32.xlu0 %v1053, 96
  %v1056 = vpop.permute.xlu0 %1055
  %s1058 = scalar_lea.vmem [#allocation3], 56
  %1059 = vst.msk [vmem:[%s1058] sm:$0xff] %vm68, %v1056
  %v1060 = vld [vmem:[%s5] sm:$0xff]
  %v1061 = vld [vmem:[%s5 + $0x8] sm:$0xff]
  %v1062 = vld [vmem:[%s5 + $0x10] sm:$0xff]
  %v1063 = vld [vmem:[%s5 + $0x18] sm:$0xff]
  %v1064 = vld [vmem:[%s6] sm:$0xff]
  %v1065 = vld [vmem:[%s6 + $0x8] sm:$0xff]
  %v1066 = vld [vmem:[%s6 + $0x10] sm:$0xff]
  %v1067 = vld [vmem:[%s6 + $0x18] sm:$0xff]
  %v1068 = vld [vmem:[%s7] sm:$0x1]
  %v1069 = vld [vmem:[%s8] sm:$0x1]
  %v1070 = vld [vmem:[#allocation3] sm:$0xff]
  %v1071 = vld [vmem:[#allocation3 + $0x8] sm:$0xff]
  %v1072 = vld [vmem:[#allocation3 + $0x10] sm:$0xff]
  %v1073 = vld [vmem:[#allocation3 + $0x18] sm:$0xff]
  %v1074 = vld [vmem:[#allocation3 + $0x20] sm:$0xff]
  %v1075 = vld [vmem:[#allocation3 + $0x28] sm:$0xff]
  %v1076 = vld [vmem:[#allocation3 + $0x30] sm:$0xff]
  %v1077 = vld [vmem:[#allocation3 + $0x38] sm:$0xff]
  %v1079 = vlaneseq
  %v1080 = vshrl.u32 %v1079, 7
  %v1081 = vsub.s32 0, %v1080
  %v1082 = vrot.slane %v1068, %v1081
  %v1085 = vsel %vm68, %v1070, 0
  %v1088 = vsel %vm68, %v1071, 0
  %v1091 = vsel %vm68, %v1072, 0
  %v1094 = vsel %vm68, %v1073, 0
  %v1097 = vsel %vm68, %v1074, 0
  %v1100 = vsel %vm68, %v1075, 0
  %v1103 = vsel %vm68, %v1076, 0
  %v1106 = vsel %vm68, %v1077, 0
  %1108 = vmatprep.subr.mxu0 0.0
  %1109 = vmatpush1.msra.mxu0 0.0
  %1110 = vmatprep.subr.mxu0 0.0
  %1111 = vmatpush1.msra.mxu0 0.0
  %1112 = vmatprep.subr.mxu0 0.0
  %1113 = vmatpush1.msra.mxu0 0.0
  %1114 = vmatprep.subr.mxu0 0.0
  %1115 = vmatpush1.msra.mxu0 0.0
  %1116 = vmatprep.subr.mxu0 0.0
  %1117 = vmatpush1.msra.mxu0 0.0
  %1118 = vmatprep.subr.mxu0 0.0
  %1119 = vmatpush1.msra.mxu0 0.0
  %1120 = vmatprep.subr.mxu0 0.0
  %1121 = vmatpush1.msra.mxu0 0.0
  %1122 = vmatprep.subr.mxu0 0.0
  %1123 = vmatpush1.msra.mxu0 0.0
  %1124 = vmatprep.subr.mxu0 0.0
  %1125 = vmatpush1.msra.mxu0 0.0
  %1126 = vmatprep.subr.mxu0 0.0
  %1127 = vmatpush1.msra.mxu0 0.0
  %1128 = vmatprep.subr.mxu0 0.0
  %1129 = vmatpush1.msra.mxu0 0.0
  %1130 = vmatprep.subr.mxu0 0.0
  %1131 = vmatpush1.msra.mxu0 0.0
  %1132 = vmatprep.subr.mxu0 0.0
  %1133 = vmatpush1.msra.mxu0 %v1063
  %1134 = vmatprep.subr.mxu0 0.0
  %1135 = vmatpush1.msra.mxu0 %v1062
  %1136 = vmatprep.subr.mxu0 0.0
  %1137 = vmatpush1.msra.mxu0 %v1061
  %1138 = vmatprep.subr.mxu0 0.0
  %1139 = vmatpush1.msra.mxu0 %v1060
  %1140 = vmatprep.subr.mxu0 0.0
  %1141 = vmatpush2.msra.mxu0 0.0
  %1142 = vmatprep.subr.mxu0 0.0
  %1143 = vmatpush2.msra.mxu0 0.0
  %1144 = vmatprep.subr.mxu0 0.0
  %1145 = vmatpush2.msra.mxu0 0.0
  %1146 = vmatprep.subr.mxu0 0.0
  %1147 = vmatpush2.msra.mxu0 0.0
  %1148 = vmatprep.subr.mxu0 0.0
  %1149 = vmatpush2.msra.mxu0 0.0
  %1150 = vmatprep.subr.mxu0 0.0
  %1151 = vmatpush2.msra.mxu0 0.0
  %1152 = vmatprep.subr.mxu0 0.0
  %1153 = vmatpush2.msra.mxu0 0.0
  %1154 = vmatprep.subr.mxu0 0.0
  %1155 = vmatpush2.msra.mxu0 0.0
  %1156 = vmatprep.subr.mxu0 0.0
  %1157 = vmatpush2.msra.mxu0 0.0
  %1158 = vmatprep.subr.mxu0 0.0
  %1159 = vmatpush2.msra.mxu0 0.0
  %1160 = vmatprep.subr.mxu0 0.0
  %1161 = vmatpush2.msra.mxu0 0.0
  %1162 = vmatprep.subr.mxu0 0.0
  %1163 = vmatpush2.msra.mxu0 0.0
  %1164 = vmatprep.subr.mxu0 0.0
  %1165 = vmatpush2.msra.mxu0 0.0
  %1166 = vmatprep.subr.mxu0 0.0
  %1167 = vmatpush2.msra.mxu0 0.0
  %1168 = vmatprep.subr.mxu0 0.0
  %1169 = vmatpush2.msra.mxu0 0.0
  %1170 = vmatprep.subr.mxu0 0.0
  %1171 = vmatpush2.msra.mxu0 0.0
  %1172 = vmatprep.mubr.f32.mxu0 0.0
  %1173 = vmatmul.mubr.f32.gmra.mxu0 %v1085
  %v1174 = vpop.f32.mrf.mxu0
  %v1175 = vadd.f32 %v1082, %v1174
  %v1176 = vpop.f32.mrf.mxu0
  %1177 = vmatprep.mubr.f32.mxu0 0.0
  %1178 = vmatmul.mubr.f32.gmra.mxu0 %v1088
  %v1179 = vpop.f32.mrf.mxu0
  %v1180 = vadd.f32 %v1082, %v1179
  %v1181 = vpop.f32.mrf.mxu0
  %1182 = vmatprep.mubr.f32.mxu0 0.0
  %1183 = vmatmul.mubr.f32.gmra.mxu0 %v1091
  %v1184 = vpop.f32.mrf.mxu0
  %v1185 = vadd.f32 %v1082, %v1184
  %v1186 = vpop.f32.mrf.mxu0
  %1187 = vmatprep.mubr.f32.mxu0 0.0
  %1188 = vmatmul.mubr.f32.gmra.mxu0 %v1094
  %v1189 = vpop.f32.mrf.mxu0
  %v1190 = vadd.f32 %v1082, %v1189
  %v1191 = vpop.f32.mrf.mxu0
  %1192 = vmatprep.mubr.f32.mxu0 0.0
  %1193 = vmatmul.mubr.f32.gmra.mxu0 %v1097
  %v1194 = vpop.f32.mrf.mxu0
  %v1195 = vadd.f32 %v1082, %v1194
  %v1196 = vpop.f32.mrf.mxu0
  %1197 = vmatprep.mubr.f32.mxu0 0.0
  %1198 = vmatmul.mubr.f32.gmra.mxu0 %v1100
  %v1199 = vpop.f32.mrf.mxu0
  %v1200 = vadd.f32 %v1082, %v1199
  %v1201 = vpop.f32.mrf.mxu0
  %1202 = vmatprep.mubr.f32.mxu0 0.0
  %1203 = vmatmul.mubr.f32.gmra.mxu0 %v1103
  %v1204 = vpop.f32.mrf.mxu0
  %v1205 = vadd.f32 %v1082, %v1204
  %v1206 = vpop.f32.mrf.mxu0
  %1207 = vmatprep.mubr.f32.mxu0 0.0
  %1208 = vmatmul.mubr.f32.gmra.mxu0 %v1106
  %v1209 = vpop.f32.mrf.mxu0
  %v1210 = vadd.f32 %v1082, %v1209
  %v1211 = vpop.f32.mrf.mxu0
  %1212 = vdwg.mxu0
  %1213 = vst.msk [vmem:[#allocation2] sm:$0xff] %vm198, %v1175
  %1214 = vst.msk [vmem:[#allocation2 + $0x8] sm:$0xff] %vm198, %v1180
  %1215 = vst.msk [vmem:[#allocation2 + $0x10] sm:$0xff] %vm198, %v1185
  %1216 = vst.msk [vmem:[#allocation2 + $0x18] sm:$0xff] %vm198, %v1190
  %1217 = vst.msk [vmem:[#allocation2 + $0x20] sm:$0xff] %vm198, %v1195
  %1218 = vst.msk [vmem:[#allocation2 + $0x28] sm:$0xff] %vm198, %v1200
  %1219 = vst.msk [vmem:[#allocation2 + $0x30] sm:$0xff] %vm198, %v1205
  %1220 = vst.msk [vmem:[#allocation2 + $0x38] sm:$0xff] %vm198, %v1210
  %v1221 = vld [vmem:[#allocation2] sm:$0xff]
  %v1223 = vlaneseq
  %v1224 = vshrl.u32 %v1223, 7
  %v1225 = vsub.s32 0, %v1224
  %v1226 = vrot.slane %v1069, %v1225
  %1228 = vmatprep.subr.mxu0 0.0
  %1229 = vmatpush1.msra.mxu0 0.0
  %1230 = vmatprep.subr.mxu0 0.0
  %1231 = vmatpush1.msra.mxu0 0.0
  %1232 = vmatprep.subr.mxu0 0.0
  %1233 = vmatpush1.msra.mxu0 0.0
  %1234 = vmatprep.subr.mxu0 0.0
  %1235 = vmatpush1.msra.mxu0 0.0
  %1236 = vmatprep.subr.mxu0 0.0
  %1237 = vmatpush1.msra.mxu0 0.0
  %1238 = vmatprep.subr.mxu0 0.0
  %1239 = vmatpush1.msra.mxu0 0.0
  %1240 = vmatprep.subr.mxu0 0.0
  %1241 = vmatpush1.msra.mxu0 0.0
  %1242 = vmatprep.subr.mxu0 0.0
  %1243 = vmatpush1.msra.mxu0 0.0
  %1244 = vmatprep.subr.mxu0 0.0
  %1245 = vmatpush1.msra.mxu0 0.0
  %1246 = vmatprep.subr.mxu0 0.0
  %1247 = vmatpush1.msra.mxu0 0.0
  %1248 = vmatprep.subr.mxu0 0.0
  %1249 = vmatpush1.msra.mxu0 0.0
  %1250 = vmatprep.subr.mxu0 0.0
  %1251 = vmatpush1.msra.mxu0 0.0
  %1252 = vmatprep.subr.mxu0 0.0
  %1253 = vmatpush1.msra.mxu0 %v1067
  %1254 = vmatprep.subr.mxu0 0.0
  %1255 = vmatpush1.msra.mxu0 %v1066
  %1256 = vmatprep.subr.mxu0 0.0
  %1257 = vmatpush1.msra.mxu0 %v1065
  %1258 = vmatprep.subr.mxu0 0.0
  %1259 = vmatpush1.msra.mxu0 %v1064
  %1260 = vmatprep.subr.mxu0 0.0
  %1261 = vmatpush2.msra.mxu0 0.0
  %1262 = vmatprep.subr.mxu0 0.0
  %1263 = vmatpush2.msra.mxu0 0.0
  %1264 = vmatprep.subr.mxu0 0.0
  %1265 = vmatpush2.msra.mxu0 0.0
  %1266 = vmatprep.subr.mxu0 0.0
  %1267 = vmatpush2.msra.mxu0 0.0
  %1268 = vmatprep.subr.mxu0 0.0
  %1269 = vmatpush2.msra.mxu0 0.0
  %1270 = vmatprep.subr.mxu0 0.0
  %1271 = vmatpush2.msra.mxu0 0.0
  %1272 = vmatprep.subr.mxu0 0.0
  %1273 = vmatpush2.msra.mxu0 0.0
  %1274 = vmatprep.subr.mxu0 0.0
  %1275 = vmatpush2.msra.mxu0 0.0
  %1276 = vmatprep.subr.mxu0 0.0
  %1277 = vmatpush2.msra.mxu0 0.0
  %1278 = vmatprep.subr.mxu0 0.0
  %1279 = vmatpush2.msra.mxu0 0.0
  %1280 = vmatprep.subr.mxu0 0.0
  %1281 = vmatpush2.msra.mxu0 0.0
  %1282 = vmatprep.subr.mxu0 0.0
  %1283 = vmatpush2.msra.mxu0 0.0
  %1284 = vmatprep.subr.mxu0 0.0
  %1285 = vmatpush2.msra.mxu0 0.0
  %1286 = vmatprep.subr.mxu0 0.0
  %1287 = vmatpush2.msra.mxu0 0.0
  %1288 = vmatprep.subr.mxu0 0.0
  %1289 = vmatpush2.msra.mxu0 0.0
  %1290 = vmatprep.subr.mxu0 0.0
  %1291 = vmatpush2.msra.mxu0 0.0
  %1292 = vmatprep.mubr.f32.mxu0 0.0
  %1293 = vmatmul.mubr.f32.gmra.mxu0 %v215
  %v1294 = vpop.f32.mrf.mxu0
  %v1295 = vadd.f32 %v1226, %v1294
  %v1296 = vpop.f32.mrf.mxu0
  %1297 = vdwg.mxu0
  %v1298 = vadd.f32 %v1221, %v1295
  %v1299 = vxor.u32 %v1298, 2147483648
  %v1300 = vmul.f32 %v1299, 1.442695
  %v1301 = vpow.pop %v1300
  %v1302 = vadd.f32 %v1301, 1.0
  %v1303 = vrcp.pop %v1302
  %v1304 = vmul.f32 1.0, %v1303
  %1306 = vrot.lane.b32.xlu0 %v1295, 64
  %v1307 = vpop.permute.xlu0 %1306
  %v1309 = vmul.f32 %v1304, %v1307
  %1311 = vrot.lane.b32.xlu0 %v1309, 64
  %v1312 = vpop.permute.xlu0 %1311
  %v1314 = vadd.f32 %v1221, %v1312
  %v1315 = vtanh.pop %v1314
  %v1316 = vsub.f32 1.0, %v1304
  %1318 = vrot.lane.b32.xlu0 %v1315, 96
  %v1319 = vpop.permute.xlu0 %1318
  %v1321 = vmul.f32 %v1316, %v1319
  %v1322 = vmul.f32 %v1304, 0.0
  %v1323 = vadd.f32 %v1321, %v1322
  %v1324 = vld [vmem:[%s318] sm:$0xff]
  %1326 = vrot.lane.b32.xlu0 %v1323, 96
  %v1327 = vpop.permute.xlu0 %1326
  %v1328 = vsel %vm68, %v1327, 0
  %1330 = vmatprep.subr.mxu0 0.0
  %1331 = vmatpush1.msra.mxu0 0.0
  %1332 = vmatprep.subr.mxu0 0.0
  %1333 = vmatpush1.msra.mxu0 0.0
  %1334 = vmatprep.subr.mxu0 0.0
  %1335 = vmatpush1.msra.mxu0 0.0
  %1336 = vmatprep.subr.mxu0 0.0
  %1337 = vmatpush1.msra.mxu0 0.0
  %1338 = vmatprep.subr.mxu0 0.0
  %1339 = vmatpush1.msra.mxu0 0.0
  %1340 = vmatprep.subr.mxu0 0.0
  %1341 = vmatpush1.msra.mxu0 0.0
  %1342 = vmatprep.subr.mxu0 0.0
  %1343 = vmatpush1.msra.mxu0 0.0
  %1344 = vmatprep.subr.mxu0 0.0
  %1345 = vmatpush1.msra.mxu0 0.0
  %1346 = vmatprep.subr.mxu0 0.0
  %1347 = vmatpush1.msra.mxu0 0.0
  %1348 = vmatprep.subr.mxu0 0.0
  %1349 = vmatpush1.msra.mxu0 0.0
  %1350 = vmatprep.subr.mxu0 0.0
  %1351 = vmatpush1.msra.mxu0 0.0
  %1352 = vmatprep.subr.mxu0 0.0
  %1353 = vmatpush1.msra.mxu0 0.0
  %1354 = vmatprep.subr.mxu0 0.0
  %1355 = vmatpush1.msra.mxu0 %v1067
  %1356 = vmatprep.subr.mxu0 0.0
  %1357 = vmatpush1.msra.mxu0 %v1066
  %1358 = vmatprep.subr.mxu0 0.0
  %1359 = vmatpush1.msra.mxu0 %v1065
  %1360 = vmatprep.subr.mxu0 0.0
  %1361 = vmatpush1.msra.mxu0 %v1064
  %1362 = vmatprep.subr.mxu0 0.0
  %1363 = vmatpush2.msra.mxu0 0.0
  %1364 = vmatprep.subr.mxu0 0.0
  %1365 = vmatpush2.msra.mxu0 0.0
  %1366 = vmatprep.subr.mxu0 0.0
  %1367 = vmatpush2.msra.mxu0 0.0
  %1368 = vmatprep.subr.mxu0 0.0
  %1369 = vmatpush2.msra.mxu0 0.0
  %1370 = vmatprep.subr.mxu0 0.0
  %1371 = vmatpush2.msra.mxu0 0.0
  %1372 = vmatprep.subr.mxu0 0.0
  %1373 = vmatpush2.msra.mxu0 0.0
  %1374 = vmatprep.subr.mxu0 0.0
  %1375 = vmatpush2.msra.mxu0 0.0
  %1376 = vmatprep.subr.mxu0 0.0
  %1377 = vmatpush2.msra.mxu0 0.0
  %1378 = vmatprep.subr.mxu0 0.0
  %1379 = vmatpush2.msra.mxu0 0.0
  %1380 = vmatprep.subr.mxu0 0.0
  %1381 = vmatpush2.msra.mxu0 0.0
  %1382 = vmatprep.subr.mxu0 0.0
  %1383 = vmatpush2.msra.mxu0 0.0
  %1384 = vmatprep.subr.mxu0 0.0
  %1385 = vmatpush2.msra.mxu0 0.0
  %1386 = vmatprep.subr.mxu0 0.0
  %1387 = vmatpush2.msra.mxu0 0.0
  %1388 = vmatprep.subr.mxu0 0.0
  %1389 = vmatpush2.msra.mxu0 0.0
  %1390 = vmatprep.subr.mxu0 0.0
  %1391 = vmatpush2.msra.mxu0 0.0
  %1392 = vmatprep.subr.mxu0 0.0
  %1393 = vmatpush2.msra.mxu0 0.0
  %1394 = vmatprep.mubr.f32.mxu0 0.0
  %1395 = vmatmul.mubr.f32.gmra.mxu0 %v1328
  %v1396 = vpop.f32.mrf.mxu0
  %v1397 = vadd.f32 %v1226, %v1396
  %v1398 = vpop.f32.mrf.mxu0
  %1399 = vdwg.mxu0
  %v1400 = vadd.f32 %v1324, %v1397
  %v1401 = vxor.u32 %v1400, 2147483648
  %v1402 = vmul.f32 %v1401, 1.442695
  %v1403 = vpow.pop %v1402
  %v1404 = vadd.f32 %v1403, 1.0
  %v1405 = vrcp.pop %v1404
  %v1406 = vmul.f32 1.0, %v1405
  %1408 = vrot.lane.b32.xlu0 %v1397, 64
  %v1409 = vpop.permute.xlu0 %1408
  %v1411 = vmul.f32 %v1406, %v1409
  %1413 = vrot.lane.b32.xlu0 %v1411, 64
  %v1414 = vpop.permute.xlu0 %1413
  %v1416 = vadd.f32 %v1324, %v1414
  %v1417 = vtanh.pop %v1416
  %v1418 = vsub.f32 1.0, %v1406
  %1420 = vrot.lane.b32.xlu0 %v1417, 96
  %v1421 = vpop.permute.xlu0 %1420
  %v1423 = vmul.f32 %v1418, %v1421
  %v1424 = vmul.f32 %v1406, %v1323
  %v1425 = vadd.f32 %v1423, %v1424
  %v1426 = vld [vmem:[%s424] sm:$0xff]
  %1428 = vrot.lane.b32.xlu0 %v1425, 96
  %v1429 = vpop.permute.xlu0 %1428
  %v1430 = vsel %vm68, %v1429, 0
  %1432 = vmatprep.subr.mxu0 0.0
  %1433 = vmatpush1.msra.mxu0 0.0
  %1434 = vmatprep.subr.mxu0 0.0
  %1435 = vmatpush1.msra.mxu0 0.0
  %1436 = vmatprep.subr.mxu0 0.0
  %1437 = vmatpush1.msra.mxu0 0.0
  %1438 = vmatprep.subr.mxu0 0.0
  %1439 = vmatpush1.msra.mxu0 0.0
  %1440 = vmatprep.subr.mxu0 0.0
  %1441 = vmatpush1.msra.mxu0 0.0
  %1442 = vmatprep.subr.mxu0 0.0
  %1443 = vmatpush1.msra.mxu0 0.0
  %1444 = vmatprep.subr.mxu0 0.0
  %1445 = vmatpush1.msra.mxu0 0.0
  %1446 = vmatprep.subr.mxu0 0.0
  %1447 = vmatpush1.msra.mxu0 0.0
  %1448 = vmatprep.subr.mxu0 0.0
  %1449 = vmatpush1.msra.mxu0 0.0
  %1450 = vmatprep.subr.mxu0 0.0
  %1451 = vmatpush1.msra.mxu0 0.0
  %1452 = vmatprep.subr.mxu0 0.0
  %1453 = vmatpush1.msra.mxu0 0.0
  %1454 = vmatprep.subr.mxu0 0.0
  %1455 = vmatpush1.msra.mxu0 0.0
  %1456 = vmatprep.subr.mxu0 0.0
  %1457 = vmatpush1.msra.mxu0 %v1067
  %1458 = vmatprep.subr.mxu0 0.0
  %1459 = vmatpush1.msra.mxu0 %v1066
  %1460 = vmatprep.subr.mxu0 0.0
  %1461 = vmatpush1.msra.mxu0 %v1065
  %1462 = vmatprep.subr.mxu0 0.0
  %1463 = vmatpush1.msra.mxu0 %v1064
  %1464 = vmatprep.subr.mxu0 0.0
  %1465 = vmatpush2.msra.mxu0 0.0
  %1466 = vmatprep.subr.mxu0 0.0
  %1467 = vmatpush2.msra.mxu0 0.0
  %1468 = vmatprep.subr.mxu0 0.0
  %1469 = vmatpush2.msra.mxu0 0.0
  %1470 = vmatprep.subr.mxu0 0.0
  %1471 = vmatpush2.msra.mxu0 0.0
  %1472 = vmatprep.subr.mxu0 0.0
  %1473 = vmatpush2.msra.mxu0 0.0
  %1474 = vmatprep.subr.mxu0 0.0
  %1475 = vmatpush2.msra.mxu0 0.0
  %1476 = vmatprep.subr.mxu0 0.0
  %1477 = vmatpush2.msra.mxu0 0.0
  %1478 = vmatprep.subr.mxu0 0.0
  %1479 = vmatpush2.msra.mxu0 0.0
  %1480 = vmatprep.subr.mxu0 0.0
  %1481 = vmatpush2.msra.mxu0 0.0
  %1482 = vmatprep.subr.mxu0 0.0
  %1483 = vmatpush2.msra.mxu0 0.0
  %1484 = vmatprep.subr.mxu0 0.0
  %1485 = vmatpush2.msra.mxu0 0.0
  %1486 = vmatprep.subr.mxu0 0.0
  %1487 = vmatpush2.msra.mxu0 0.0
  %1488 = vmatprep.subr.mxu0 0.0
  %1489 = vmatpush2.msra.mxu0 0.0
  %1490 = vmatprep.subr.mxu0 0.0
  %1491 = vmatpush2.msra.mxu0 0.0
  %1492 = vmatprep.subr.mxu0 0.0
  %1493 = vmatpush2.msra.mxu0 0.0
  %1494 = vmatprep.subr.mxu0 0.0
  %1495 = vmatpush2.msra.mxu0 0.0
  %1496 = vmatprep.mubr.f32.mxu0 0.0
  %1497 = vmatmul.mubr.f32.gmra.mxu0 %v1430
  %v1498 = vpop.f32.mrf.mxu0
  %v1499 = vadd.f32 %v1226, %v1498
  %v1500 = vpop.f32.mrf.mxu0
  %1501 = vdwg.mxu0
  %v1502 = vadd.f32 %v1426, %v1499
  %v1503 = vxor.u32 %v1502, 2147483648
  %v1504 = vmul.f32 %v1503, 1.442695
  %v1505 = vpow.pop %v1504
  %v1506 = vadd.f32 %v1505, 1.0
  %v1507 = vrcp.pop %v1506
  %v1508 = vmul.f32 1.0, %v1507
  %1510 = vrot.lane.b32.xlu0 %v1499, 64
  %v1511 = vpop.permute.xlu0 %1510
  %v1513 = vmul.f32 %v1508, %v1511
  %1515 = vrot.lane.b32.xlu0 %v1513, 64
  %v1516 = vpop.permute.xlu0 %1515
  %v1518 = vadd.f32 %v1426, %v1516
  %v1519 = vtanh.pop %v1518
  %v1520 = vsub.f32 1.0, %v1508
  %1522 = vrot.lane.b32.xlu0 %v1519, 96
  %v1523 = vpop.permute.xlu0 %1522
  %v1525 = vmul.f32 %v1520, %v1523
  %v1526 = vmul.f32 %v1508, %v1425
  %v1527 = vadd.f32 %v1525, %v1526
  %v1528 = vld [vmem:[%s530] sm:$0xff]
  %1530 = vrot.lane.b32.xlu0 %v1527, 96
  %v1531 = vpop.permute.xlu0 %1530
  %v1532 = vsel %vm68, %v1531, 0
  %1534 = vmatprep.subr.mxu0 0.0
  %1535 = vmatpush1.msra.mxu0 0.0
  %1536 = vmatprep.subr.mxu0 0.0
  %1537 = vmatpush1.msra.mxu0 0.0
  %1538 = vmatprep.subr.mxu0 0.0
  %1539 = vmatpush1.msra.mxu0 0.0
  %1540 = vmatprep.subr.mxu0 0.0
  %1541 = vmatpush1.msra.mxu0 0.0
  %1542 = vmatprep.subr.mxu0 0.0
  %1543 = vmatpush1.msra.mxu0 0.0
  %1544 = vmatprep.subr.mxu0 0.0
  %1545 = vmatpush1.msra.mxu0 0.0
  %1546 = vmatprep.subr.mxu0 0.0
  %1547 = vmatpush1.msra.mxu0 0.0
  %1548 = vmatprep.subr.mxu0 0.0
  %1549 = vmatpush1.msra.mxu0 0.0
  %1550 = vmatprep.subr.mxu0 0.0
  %1551 = vmatpush1.msra.mxu0 0.0
  %1552 = vmatprep.subr.mxu0 0.0
  %1553 = vmatpush1.msra.mxu0 0.0
  %1554 = vmatprep.subr.mxu0 0.0
  %1555 = vmatpush1.msra.mxu0 0.0
  %1556 = vmatprep.subr.mxu0 0.0
  %1557 = vmatpush1.msra.mxu0 0.0
  %1558 = vmatprep.subr.mxu0 0.0
  %1559 = vmatpush1.msra.mxu0 %v1067
  %1560 = vmatprep.subr.mxu0 0.0
  %1561 = vmatpush1.msra.mxu0 %v1066
  %1562 = vmatprep.subr.mxu0 0.0
  %1563 = vmatpush1.msra.mxu0 %v1065
  %1564 = vmatprep.subr.mxu0 0.0
  %1565 = vmatpush1.msra.mxu0 %v1064
  %1566 = vmatprep.subr.mxu0 0.0
  %1567 = vmatpush2.msra.mxu0 0.0
  %1568 = vmatprep.subr.mxu0 0.0
  %1569 = vmatpush2.msra.mxu0 0.0
  %1570 = vmatprep.subr.mxu0 0.0
  %1571 = vmatpush2.msra.mxu0 0.0
  %1572 = vmatprep.subr.mxu0 0.0
  %1573 = vmatpush2.msra.mxu0 0.0
  %1574 = vmatprep.subr.mxu0 0.0
  %1575 = vmatpush2.msra.mxu0 0.0
  %1576 = vmatprep.subr.mxu0 0.0
  %1577 = vmatpush2.msra.mxu0 0.0
  %1578 = vmatprep.subr.mxu0 0.0
  %1579 = vmatpush2.msra.mxu0 0.0
  %1580 = vmatprep.subr.mxu0 0.0
  %1581 = vmatpush2.msra.mxu0 0.0
  %1582 = vmatprep.subr.mxu0 0.0
  %1583 = vmatpush2.msra.mxu0 0.0
  %1584 = vmatprep.subr.mxu0 0.0
  %1585 = vmatpush2.msra.mxu0 0.0
  %1586 = vmatprep.subr.mxu0 0.0
  %1587 = vmatpush2.msra.mxu0 0.0
  %1588 = vmatprep.subr.mxu0 0.0
  %1589 = vmatpush2.msra.mxu0 0.0
  %1590 = vmatprep.subr.mxu0 0.0
  %1591 = vmatpush2.msra.mxu0 0.0
  %1592 = vmatprep.subr.mxu0 0.0
  %1593 = vmatpush2.msra.mxu0 0.0
  %1594 = vmatprep.subr.mxu0 0.0
  %1595 = vmatpush2.msra.mxu0 0.0
  %1596 = vmatprep.subr.mxu0 0.0
  %1597 = vmatpush2.msra.mxu0 0.0
  %1598 = vmatprep.mubr.f32.mxu0 0.0
  %1599 = vmatmul.mubr.f32.gmra.mxu0 %v1532
  %v1600 = vpop.f32.mrf.mxu0
  %v1601 = vadd.f32 %v1226, %v1600
  %v1602 = vpop.f32.mrf.mxu0
  %1603 = vdwg.mxu0
  %v1604 = vadd.f32 %v1528, %v1601
  %v1605 = vxor.u32 %v1604, 2147483648
  %v1606 = vmul.f32 %v1605, 1.442695
  %v1607 = vpow.pop %v1606
  %v1608 = vadd.f32 %v1607, 1.0
  %v1609 = vrcp.pop %v1608
  %v1610 = vmul.f32 1.0, %v1609
  %1612 = vrot.lane.b32.xlu0 %v1601, 64
  %v1613 = vpop.permute.xlu0 %1612
  %v1615 = vmul.f32 %v1610, %v1613
  %1617 = vrot.lane.b32.xlu0 %v1615, 64
  %v1618 = vpop.permute.xlu0 %1617
  %v1620 = vadd.f32 %v1528, %v1618
  %v1621 = vtanh.pop %v1620
  %v1622 = vsub.f32 1.0, %v1610
  %1624 = vrot.lane.b32.xlu0 %v1621, 96
  %v1625 = vpop.permute.xlu0 %1624
  %v1627 = vmul.f32 %v1622, %v1625
  %v1628 = vmul.f32 %v1610, %v1527
  %v1629 = vadd.f32 %v1627, %v1628
  %v1630 = vld [vmem:[%s636] sm:$0xff]
  %1632 = vrot.lane.b32.xlu0 %v1629, 96
  %v1633 = vpop.permute.xlu0 %1632
  %v1634 = vsel %vm68, %v1633, 0
  %1636 = vmatprep.subr.mxu0 0.0
  %1637 = vmatpush1.msra.mxu0 0.0
  %1638 = vmatprep.subr.mxu0 0.0
  %1639 = vmatpush1.msra.mxu0 0.0
  %1640 = vmatprep.subr.mxu0 0.0
  %1641 = vmatpush1.msra.mxu0 0.0
  %1642 = vmatprep.subr.mxu0 0.0
  %1643 = vmatpush1.msra.mxu0 0.0
  %1644 = vmatprep.subr.mxu0 0.0
  %1645 = vmatpush1.msra.mxu0 0.0
  %1646 = vmatprep.subr.mxu0 0.0
  %1647 = vmatpush1.msra.mxu0 0.0
  %1648 = vmatprep.subr.mxu0 0.0
  %1649 = vmatpush1.msra.mxu0 0.0
  %1650 = vmatprep.subr.mxu0 0.0
  %1651 = vmatpush1.msra.mxu0 0.0
  %1652 = vmatprep.subr.mxu0 0.0
  %1653 = vmatpush1.msra.mxu0 0.0
  %1654 = vmatprep.subr.mxu0 0.0
  %1655 = vmatpush1.msra.mxu0 0.0
  %1656 = vmatprep.subr.mxu0 0.0
  %1657 = vmatpush1.msra.mxu0 0.0
  %1658 = vmatprep.subr.mxu0 0.0
  %1659 = vmatpush1.msra.mxu0 0.0
  %1660 = vmatprep.subr.mxu0 0.0
  %1661 = vmatpush1.msra.mxu0 %v1067
  %1662 = vmatprep.subr.mxu0 0.0
  %1663 = vmatpush1.msra.mxu0 %v1066
  %1664 = vmatprep.subr.mxu0 0.0
  %1665 = vmatpush1.msra.mxu0 %v1065
  %1666 = vmatprep.subr.mxu0 0.0
  %1667 = vmatpush1.msra.mxu0 %v1064
  %1668 = vmatprep.subr.mxu0 0.0
  %1669 = vmatpush2.msra.mxu0 0.0
  %1670 = vmatprep.subr.mxu0 0.0
  %1671 = vmatpush2.msra.mxu0 0.0
  %1672 = vmatprep.subr.mxu0 0.0
  %1673 = vmatpush2.msra.mxu0 0.0
  %1674 = vmatprep.subr.mxu0 0.0
  %1675 = vmatpush2.msra.mxu0 0.0
  %1676 = vmatprep.subr.mxu0 0.0
  %1677 = vmatpush2.msra.mxu0 0.0
  %1678 = vmatprep.subr.mxu0 0.0
  %1679 = vmatpush2.msra.mxu0 0.0
  %1680 = vmatprep.subr.mxu0 0.0
  %1681 = vmatpush2.msra.mxu0 0.0
  %1682 = vmatprep.subr.mxu0 0.0
  %1683 = vmatpush2.msra.mxu0 0.0
  %1684 = vmatprep.subr.mxu0 0.0
  %1685 = vmatpush2.msra.mxu0 0.0
  %1686 = vmatprep.subr.mxu0 0.0
  %1687 = vmatpush2.msra.mxu0 0.0
  %1688 = vmatprep.subr.mxu0 0.0
  %1689 = vmatpush2.msra.mxu0 0.0
  %1690 = vmatprep.subr.mxu0 0.0
  %1691 = vmatpush2.msra.mxu0 0.0
  %1692 = vmatprep.subr.mxu0 0.0
  %1693 = vmatpush2.msra.mxu0 0.0
  %1694 = vmatprep.subr.mxu0 0.0
  %1695 = vmatpush2.msra.mxu0 0.0
  %1696 = vmatprep.subr.mxu0 0.0
  %1697 = vmatpush2.msra.mxu0 0.0
  %1698 = vmatprep.subr.mxu0 0.0
  %1699 = vmatpush2.msra.mxu0 0.0
  %1700 = vmatprep.mubr.f32.mxu0 0.0
  %1701 = vmatmul.mubr.f32.gmra.mxu0 %v1634
  %v1702 = vpop.f32.mrf.mxu0
  %v1703 = vadd.f32 %v1226, %v1702
  %v1704 = vpop.f32.mrf.mxu0
  %1705 = vdwg.mxu0
  %v1706 = vadd.f32 %v1630, %v1703
  %v1707 = vxor.u32 %v1706, 2147483648
  %v1708 = vmul.f32 %v1707, 1.442695
  %v1709 = vpow.pop %v1708
  %v1710 = vadd.f32 %v1709, 1.0
  %v1711 = vrcp.pop %v1710
  %v1712 = vmul.f32 1.0, %v1711
  %1714 = vrot.lane.b32.xlu0 %v1703, 64
  %v1715 = vpop.permute.xlu0 %1714
  %v1717 = vmul.f32 %v1712, %v1715
  %1719 = vrot.lane.b32.xlu0 %v1717, 64
  %v1720 = vpop.permute.xlu0 %1719
  %v1722 = vadd.f32 %v1630, %v1720
  %v1723 = vtanh.pop %v1722
  %v1724 = vsub.f32 1.0, %v1712
  %1726 = vrot.lane.b32.xlu0 %v1723, 96
  %v1727 = vpop.permute.xlu0 %1726
  %v1729 = vmul.f32 %v1724, %v1727
  %v1730 = vmul.f32 %v1712, %v1629
  %v1731 = vadd.f32 %v1729, %v1730
  %v1732 = vld [vmem:[%s742] sm:$0xff]
  %1734 = vrot.lane.b32.xlu0 %v1731, 96
  %v1735 = vpop.permute.xlu0 %1734
  %v1736 = vsel %vm68, %v1735, 0
  %1738 = vmatprep.subr.mxu0 0.0
  %1739 = vmatpush1.msra.mxu0 0.0
  %1740 = vmatprep.subr.mxu0 0.0
  %1741 = vmatpush1.msra.mxu0 0.0
  %1742 = vmatprep.subr.mxu0 0.0
  %1743 = vmatpush1.msra.mxu0 0.0
  %1744 = vmatprep.subr.mxu0 0.0
  %1745 = vmatpush1.msra.mxu0 0.0
  %1746 = vmatprep.subr.mxu0 0.0
  %1747 = vmatpush1.msra.mxu0 0.0
  %1748 = vmatprep.subr.mxu0 0.0
  %1749 = vmatpush1.msra.mxu0 0.0
  %1750 = vmatprep.subr.mxu0 0.0
  %1751 = vmatpush1.msra.mxu0 0.0
  %1752 = vmatprep.subr.mxu0 0.0
  %1753 = vmatpush1.msra.mxu0 0.0
  %1754 = vmatprep.subr.mxu0 0.0
  %1755 = vmatpush1.msra.mxu0 0.0
  %1756 = vmatprep.subr.mxu0 0.0
  %1757 = vmatpush1.msra.mxu0 0.0
  %1758 = vmatprep.subr.mxu0 0.0
  %1759 = vmatpush1.msra.mxu0 0.0
  %1760 = vmatprep.subr.mxu0 0.0
  %1761 = vmatpush1.msra.mxu0 0.0
  %1762 = vmatprep.subr.mxu0 0.0
  %1763 = vmatpush1.msra.mxu0 %v1067
  %1764 = vmatprep.subr.mxu0 0.0
  %1765 = vmatpush1.msra.mxu0 %v1066
  %1766 = vmatprep.subr.mxu0 0.0
  %1767 = vmatpush1.msra.mxu0 %v1065
  %1768 = vmatprep.subr.mxu0 0.0
  %1769 = vmatpush1.msra.mxu0 %v1064
  %1770 = vmatprep.subr.mxu0 0.0
  %1771 = vmatpush2.msra.mxu0 0.0
  %1772 = vmatprep.subr.mxu0 0.0
  %1773 = vmatpush2.msra.mxu0 0.0
  %1774 = vmatprep.subr.mxu0 0.0
  %1775 = vmatpush2.msra.mxu0 0.0
  %1776 = vmatprep.subr.mxu0 0.0
  %1777 = vmatpush2.msra.mxu0 0.0
  %1778 = vmatprep.subr.mxu0 0.0
  %1779 = vmatpush2.msra.mxu0 0.0
  %1780 = vmatprep.subr.mxu0 0.0
  %1781 = vmatpush2.msra.mxu0 0.0
  %1782 = vmatprep.subr.mxu0 0.0
  %1783 = vmatpush2.msra.mxu0 0.0
  %1784 = vmatprep.subr.mxu0 0.0
  %1785 = vmatpush2.msra.mxu0 0.0
  %1786 = vmatprep.subr.mxu0 0.0
  %1787 = vmatpush2.msra.mxu0 0.0
  %1788 = vmatprep.subr.mxu0 0.0
  %1789 = vmatpush2.msra.mxu0 0.0
  %1790 = vmatprep.subr.mxu0 0.0
  %1791 = vmatpush2.msra.mxu0 0.0
  %1792 = vmatprep.subr.mxu0 0.0
  %1793 = vmatpush2.msra.mxu0 0.0
  %1794 = vmatprep.subr.mxu0 0.0
  %1795 = vmatpush2.msra.mxu0 0.0
  %1796 = vmatprep.subr.mxu0 0.0
  %1797 = vmatpush2.msra.mxu0 0.0
  %1798 = vmatprep.subr.mxu0 0.0
  %1799 = vmatpush2.msra.mxu0 0.0
  %1800 = vmatprep.subr.mxu0 0.0
  %1801 = vmatpush2.msra.mxu0 0.0
  %1802 = vmatprep.mubr.f32.mxu0 0.0
  %1803 = vmatmul.mubr.f32.gmra.mxu0 %v1736
  %v1804 = vpop.f32.mrf.mxu0
  %v1805 = vadd.f32 %v1226, %v1804
  %v1806 = vpop.f32.mrf.mxu0
  %1807 = vdwg.mxu0
  %v1808 = vadd.f32 %v1732, %v1805
  %v1809 = vxor.u32 %v1808, 2147483648
  %v1810 = vmul.f32 %v1809, 1.442695
  %v1811 = vpow.pop %v1810
  %v1812 = vadd.f32 %v1811, 1.0
  %v1813 = vrcp.pop %v1812
  %v1814 = vmul.f32 1.0, %v1813
  %1816 = vrot.lane.b32.xlu0 %v1805, 64
  %v1817 = vpop.permute.xlu0 %1816
  %v1819 = vmul.f32 %v1814, %v1817
  %1821 = vrot.lane.b32.xlu0 %v1819, 64
  %v1822 = vpop.permute.xlu0 %1821
  %v1824 = vadd.f32 %v1732, %v1822
  %v1825 = vtanh.pop %v1824
  %v1826 = vsub.f32 1.0, %v1814
  %1828 = vrot.lane.b32.xlu0 %v1825, 96
  %v1829 = vpop.permute.xlu0 %1828
  %v1831 = vmul.f32 %v1826, %v1829
  %v1832 = vmul.f32 %v1814, %v1731
  %v1833 = vadd.f32 %v1831, %v1832
  %v1834 = vld [vmem:[%s848] sm:$0xff]
  %1836 = vrot.lane.b32.xlu0 %v1833, 96
  %v1837 = vpop.permute.xlu0 %1836
  %v1838 = vsel %vm68, %v1837, 0
  %1840 = vmatprep.subr.mxu0 0.0
  %1841 = vmatpush1.msra.mxu0 0.0
  %1842 = vmatprep.subr.mxu0 0.0
  %1843 = vmatpush1.msra.mxu0 0.0
  %1844 = vmatprep.subr.mxu0 0.0
  %1845 = vmatpush1.msra.mxu0 0.0
  %1846 = vmatprep.subr.mxu0 0.0
  %1847 = vmatpush1.msra.mxu0 0.0
  %1848 = vmatprep.subr.mxu0 0.0
  %1849 = vmatpush1.msra.mxu0 0.0
  %1850 = vmatprep.subr.mxu0 0.0
  %1851 = vmatpush1.msra.mxu0 0.0
  %1852 = vmatprep.subr.mxu0 0.0
  %1853 = vmatpush1.msra.mxu0 0.0
  %1854 = vmatprep.subr.mxu0 0.0
  %1855 = vmatpush1.msra.mxu0 0.0
  %1856 = vmatprep.subr.mxu0 0.0
  %1857 = vmatpush1.msra.mxu0 0.0
  %1858 = vmatprep.subr.mxu0 0.0
  %1859 = vmatpush1.msra.mxu0 0.0
  %1860 = vmatprep.subr.mxu0 0.0
  %1861 = vmatpush1.msra.mxu0 0.0
  %1862 = vmatprep.subr.mxu0 0.0
  %1863 = vmatpush1.msra.mxu0 0.0
  %1864 = vmatprep.subr.mxu0 0.0
  %1865 = vmatpush1.msra.mxu0 %v1067
  %1866 = vmatprep.subr.mxu0 0.0
  %1867 = vmatpush1.msra.mxu0 %v1066
  %1868 = vmatprep.subr.mxu0 0.0
  %1869 = vmatpush1.msra.mxu0 %v1065
  %1870 = vmatprep.subr.mxu0 0.0
  %1871 = vmatpush1.msra.mxu0 %v1064
  %1872 = vmatprep.subr.mxu0 0.0
  %1873 = vmatpush2.msra.mxu0 0.0
  %1874 = vmatprep.subr.mxu0 0.0
  %1875 = vmatpush2.msra.mxu0 0.0
  %1876 = vmatprep.subr.mxu0 0.0
  %1877 = vmatpush2.msra.mxu0 0.0
  %1878 = vmatprep.subr.mxu0 0.0
  %1879 = vmatpush2.msra.mxu0 0.0
  %1880 = vmatprep.subr.mxu0 0.0
  %1881 = vmatpush2.msra.mxu0 0.0
  %1882 = vmatprep.subr.mxu0 0.0
  %1883 = vmatpush2.msra.mxu0 0.0
  %1884 = vmatprep.subr.mxu0 0.0
  %1885 = vmatpush2.msra.mxu0 0.0
  %1886 = vmatprep.subr.mxu0 0.0
  %1887 = vmatpush2.msra.mxu0 0.0
  %1888 = vmatprep.subr.mxu0 0.0
  %1889 = vmatpush2.msra.mxu0 0.0
  %1890 = vmatprep.subr.mxu0 0.0
  %1891 = vmatpush2.msra.mxu0 0.0
  %1892 = vmatprep.subr.mxu0 0.0
  %1893 = vmatpush2.msra.mxu0 0.0
  %1894 = vmatprep.subr.mxu0 0.0
  %1895 = vmatpush2.msra.mxu0 0.0
  %1896 = vmatprep.subr.mxu0 0.0
  %1897 = vmatpush2.msra.mxu0 0.0
  %1898 = vmatprep.subr.mxu0 0.0
  %1899 = vmatpush2.msra.mxu0 0.0
  %1900 = vmatprep.subr.mxu0 0.0
  %1901 = vmatpush2.msra.mxu0 0.0
  %1902 = vmatprep.subr.mxu0 0.0
  %1903 = vmatpush2.msra.mxu0 0.0
  %1904 = vmatprep.mubr.f32.mxu0 0.0
  %1905 = vmatmul.mubr.f32.gmra.mxu0 %v1838
  %v1906 = vpop.f32.mrf.mxu0
  %v1907 = vadd.f32 %v1226, %v1906
  %v1908 = vpop.f32.mrf.mxu0
  %1909 = vdwg.mxu0
  %v1910 = vadd.f32 %v1834, %v1907
  %v1911 = vxor.u32 %v1910, 2147483648
  %v1912 = vmul.f32 %v1911, 1.442695
  %v1913 = vpow.pop %v1912
  %v1914 = vadd.f32 %v1913, 1.0
  %v1915 = vrcp.pop %v1914
  %v1916 = vmul.f32 1.0, %v1915
  %1918 = vrot.lane.b32.xlu0 %v1907, 64
  %v1919 = vpop.permute.xlu0 %1918
  %v1921 = vmul.f32 %v1916, %v1919
  %1923 = vrot.lane.b32.xlu0 %v1921, 64
  %v1924 = vpop.permute.xlu0 %1923
  %v1926 = vadd.f32 %v1834, %v1924
  %v1927 = vtanh.pop %v1926
  %v1928 = vsub.f32 1.0, %v1916
  %1930 = vrot.lane.b32.xlu0 %v1927, 96
  %v1931 = vpop.permute.xlu0 %1930
  %v1933 = vmul.f32 %v1928, %v1931
  %v1934 = vmul.f32 %v1916, %v1833
  %v1935 = vadd.f32 %v1933, %v1934
  %v1936 = vld [vmem:[%s954] sm:$0xff]
  %1938 = vrot.lane.b32.xlu0 %v1935, 96
  %v1939 = vpop.permute.xlu0 %1938
  %v1940 = vsel %vm68, %v1939, 0
  %1942 = vmatprep.subr.mxu0 0.0
  %1943 = vmatpush1.msra.mxu0 0.0
  %1944 = vmatprep.subr.mxu0 0.0
  %1945 = vmatpush1.msra.mxu0 0.0
  %1946 = vmatprep.subr.mxu0 0.0
  %1947 = vmatpush1.msra.mxu0 0.0
  %1948 = vmatprep.subr.mxu0 0.0
  %1949 = vmatpush1.msra.mxu0 0.0
  %1950 = vmatprep.subr.mxu0 0.0
  %1951 = vmatpush1.msra.mxu0 0.0
  %1952 = vmatprep.subr.mxu0 0.0
  %1953 = vmatpush1.msra.mxu0 0.0
  %1954 = vmatprep.subr.mxu0 0.0
  %1955 = vmatpush1.msra.mxu0 0.0
  %1956 = vmatprep.subr.mxu0 0.0
  %1957 = vmatpush1.msra.mxu0 0.0
  %1958 = vmatprep.subr.mxu0 0.0
  %1959 = vmatpush1.msra.mxu0 0.0
  %1960 = vmatprep.subr.mxu0 0.0
  %1961 = vmatpush1.msra.mxu0 0.0
  %1962 = vmatprep.subr.mxu0 0.0
  %1963 = vmatpush1.msra.mxu0 0.0
  %1964 = vmatprep.subr.mxu0 0.0
  %1965 = vmatpush1.msra.mxu0 0.0
  %1966 = vmatprep.subr.mxu0 0.0
  %1967 = vmatpush1.msra.mxu0 %v1067
  %1968 = vmatprep.subr.mxu0 0.0
  %1969 = vmatpush1.msra.mxu0 %v1066
  %1970 = vmatprep.subr.mxu0 0.0
  %1971 = vmatpush1.msra.mxu0 %v1065
  %1972 = vmatprep.subr.mxu0 0.0
  %1973 = vmatpush1.msra.mxu0 %v1064
  %1974 = vmatprep.subr.mxu0 0.0
  %1975 = vmatpush2.msra.mxu0 0.0
  %1976 = vmatprep.subr.mxu0 0.0
  %1977 = vmatpush2.msra.mxu0 0.0
  %1978 = vmatprep.subr.mxu0 0.0
  %1979 = vmatpush2.msra.mxu0 0.0
  %1980 = vmatprep.subr.mxu0 0.0
  %1981 = vmatpush2.msra.mxu0 0.0
  %1982 = vmatprep.subr.mxu0 0.0
  %1983 = vmatpush2.msra.mxu0 0.0
  %1984 = vmatprep.subr.mxu0 0.0
  %1985 = vmatpush2.msra.mxu0 0.0
  %1986 = vmatprep.subr.mxu0 0.0
  %1987 = vmatpush2.msra.mxu0 0.0
  %1988 = vmatprep.subr.mxu0 0.0
  %1989 = vmatpush2.msra.mxu0 0.0
  %1990 = vmatprep.subr.mxu0 0.0
  %1991 = vmatpush2.msra.mxu0 0.0
  %1992 = vmatprep.subr.mxu0 0.0
  %1993 = vmatpush2.msra.mxu0 0.0
  %1994 = vmatprep.subr.mxu0 0.0
  %1995 = vmatpush2.msra.mxu0 0.0
  %1996 = vmatprep.subr.mxu0 0.0
  %1997 = vmatpush2.msra.mxu0 0.0
  %1998 = vmatprep.subr.mxu0 0.0
  %1999 = vmatpush2.msra.mxu0 0.0
  %2000 = vmatprep.subr.mxu0 0.0
  %2001 = vmatpush2.msra.mxu0 0.0
  %2002 = vmatprep.subr.mxu0 0.0
  %2003 = vmatpush2.msra.mxu0 0.0
  %2004 = vmatprep.subr.mxu0 0.0
  %2005 = vmatpush2.msra.mxu0 0.0
  %2006 = vmatprep.mubr.f32.mxu0 0.0
  %2007 = vmatmul.mubr.f32.gmra.mxu0 %v1940
  %v2008 = vpop.f32.mrf.mxu0
  %v2009 = vadd.f32 %v1226, %v2008
  %v2010 = vpop.f32.mrf.mxu0
  %2011 = vdwg.mxu0
  %v2012 = vadd.f32 %v1936, %v2009
  %v2013 = vxor.u32 %v2012, 2147483648
  %v2014 = vmul.f32 %v2013, 1.442695
  %v2015 = vpow.pop %v2014
  %v2016 = vadd.f32 %v2015, 1.0
  %v2017 = vrcp.pop %v2016
  %v2018 = vmul.f32 1.0, %v2017
  %2020 = vrot.lane.b32.xlu0 %v2009, 64
  %v2021 = vpop.permute.xlu0 %2020
  %v2023 = vmul.f32 %v2018, %v2021
  %2025 = vrot.lane.b32.xlu0 %v2023, 64
  %v2026 = vpop.permute.xlu0 %2025
  %v2028 = vadd.f32 %v1936, %v2026
  %v2029 = vtanh.pop %v2028
  %v2030 = vsub.f32 1.0, %v2018
  %2032 = vrot.lane.b32.xlu0 %v2029, 96
  %v2033 = vpop.permute.xlu0 %2032
  %v2035 = vmul.f32 %v2030, %v2033
  %v2036 = vmul.f32 %v2018, %v1935
  %v2037 = vadd.f32 %v2035, %v2036
  %v2038 = vld [vmem:[%s9] sm:$0xff]
  %v2039 = vld [vmem:[%s9 + $0x8] sm:$0xff]
  %v2040 = vld [vmem:[%s9 + $0x10] sm:$0xff]
  %v2041 = vld [vmem:[%s9 + $0x18] sm:$0xff]
  %v2042 = vld [vmem:[%s10] sm:$0x1]
  %v2044 = vlaneseq
  %v2045 = vshrl.u32 %v2044, 7
  %v2046 = vsub.s32 0, %v2045
  %v2047 = vrot.slane %v2042, %v2046
  %2050 = vrot.lane.b32.xlu0 %v2037, 96
  %v2051 = vpop.permute.xlu0 %2050
  %v2052 = vsel %vm68, %v2051, 0
  %2054 = vmatprep.subr.mxu0 0.0
  %2055 = vmatpush1.msra.mxu0 0.0
  %2056 = vmatprep.subr.mxu0 0.0
  %2057 = vmatpush1.msra.mxu0 0.0
  %2058 = vmatprep.subr.mxu0 0.0
  %2059 = vmatpush1.msra.mxu0 0.0
  %2060 = vmatprep.subr.mxu0 0.0
  %2061 = vmatpush1.msra.mxu0 0.0
  %2062 = vmatprep.subr.mxu0 0.0
  %2063 = vmatpush1.msra.mxu0 0.0
  %2064 = vmatprep.subr.mxu0 0.0
  %2065 = vmatpush1.msra.mxu0 0.0
  %2066 = vmatprep.subr.mxu0 0.0
  %2067 = vmatpush1.msra.mxu0 0.0
  %2068 = vmatprep.subr.mxu0 0.0
  %2069 = vmatpush1.msra.mxu0 0.0
  %2070 = vmatprep.subr.mxu0 0.0
  %2071 = vmatpush1.msra.mxu0 0.0
  %2072 = vmatprep.subr.mxu0 0.0
  %2073 = vmatpush1.msra.mxu0 0.0
  %2074 = vmatprep.subr.mxu0 0.0
  %2075 = vmatpush1.msra.mxu0 0.0
  %2076 = vmatprep.subr.mxu0 0.0
  %2077 = vmatpush1.msra.mxu0 0.0
  %2078 = vmatprep.subr.mxu0 0.0
  %2079 = vmatpush1.msra.mxu0 %v2041
  %2080 = vmatprep.subr.mxu0 0.0
  %2081 = vmatpush1.msra.mxu0 %v2040
  %2082 = vmatprep.subr.mxu0 0.0
  %2083 = vmatpush1.msra.mxu0 %v2039
  %2084 = vmatprep.subr.mxu0 0.0
  %2085 = vmatpush1.msra.mxu0 %v2038
  %2086 = vmatprep.subr.mxu0 0.0
  %2087 = vmatpush2.msra.mxu0 0.0
  %2088 = vmatprep.subr.mxu0 0.0
  %2089 = vmatpush2.msra.mxu0 0.0
  %2090 = vmatprep.subr.mxu0 0.0
  %2091 = vmatpush2.msra.mxu0 0.0
  %2092 = vmatprep.subr.mxu0 0.0
  %2093 = vmatpush2.msra.mxu0 0.0
  %2094 = vmatprep.subr.mxu0 0.0
  %2095 = vmatpush2.msra.mxu0 0.0
  %2096 = vmatprep.subr.mxu0 0.0
  %2097 = vmatpush2.msra.mxu0 0.0
  %2098 = vmatprep.subr.mxu0 0.0
  %2099 = vmatpush2.msra.mxu0 0.0
  %2100 = vmatprep.subr.mxu0 0.0
  %2101 = vmatpush2.msra.mxu0 0.0
  %2102 = vmatprep.subr.mxu0 0.0
  %2103 = vmatpush2.msra.mxu0 0.0
  %2104 = vmatprep.subr.mxu0 0.0
  %2105 = vmatpush2.msra.mxu0 0.0
  %2106 = vmatprep.subr.mxu0 0.0
  %2107 = vmatpush2.msra.mxu0 0.0
  %2108 = vmatprep.subr.mxu0 0.0
  %2109 = vmatpush2.msra.mxu0 0.0
  %2110 = vmatprep.subr.mxu0 0.0
  %2111 = vmatpush2.msra.mxu0 0.0
  %2112 = vmatprep.subr.mxu0 0.0
  %2113 = vmatpush2.msra.mxu0 0.0
  %2114 = vmatprep.subr.mxu0 0.0
  %2115 = vmatpush2.msra.mxu0 0.0
  %2116 = vmatprep.subr.mxu0 0.0
  %2117 = vmatpush2.msra.mxu0 0.0
  %2118 = vmatprep.mubr.f32.mxu0 0.0
  %2119 = vmatmul.mubr.f32.gmra.mxu0 %v2052
  %v2120 = vpop.f32.mrf.mxu0
  %v2121 = vadd.f32 %v2047, %v2120
  %v2122 = vpop.f32.mrf.mxu0
  %2123 = vdwg.mxu0
  %v2124 = vmax.f32 %v2121, 0.0
  %v2125 = vld [vmem:[%s11] sm:$0xff]
  %v2126 = vld [vmem:[%s11 + $0x8] sm:$0xff]
  %v2127 = vld [vmem:[%s11 + $0x10] sm:$0xff]
  %v2128 = vld [vmem:[%s11 + $0x18] sm:$0xff]
  %v2129 = vld [vmem:[%s11 + $0x20] sm:$0xff]
  %v2130 = vld [vmem:[%s11 + $0x28] sm:$0xff]
  %v2131 = vld [vmem:[%s11 + $0x30] sm:$0xff]
  %v2132 = vld [vmem:[%s11 + $0x38] sm:$0xff]
  %v2133 = vld [vmem:[%s12] sm:$0x1]
  %v2135 = vlaneseq
  %v2136 = vshrl.u32 %v2135, 7
  %v2137 = vsub.s32 0, %v2136
  %v2138 = vrot.slane %v2133, %v2137
  %vm2140 = vcmask 523264
  %v2142 = vsel %vm2140, %v2124, 0
  %2144 = vmatprep.subr.mxu0 0.0
  %2145 = vmatpush1.msra.mxu0 0.0
  %2146 = vmatprep.subr.mxu0 0.0
  %2147 = vmatpush1.msra.mxu0 0.0
  %2148 = vmatprep.subr.mxu0 0.0
  %2149 = vmatpush1.msra.mxu0 0.0
  %2150 = vmatprep.subr.mxu0 0.0
  %2151 = vmatpush1.msra.mxu0 0.0
  %2152 = vmatprep.subr.mxu0 0.0
  %2153 = vmatpush1.msra.mxu0 0.0
  %2154 = vmatprep.subr.mxu0 0.0
  %2155 = vmatpush1.msra.mxu0 0.0
  %2156 = vmatprep.subr.mxu0 0.0
  %2157 = vmatpush1.msra.mxu0 0.0
  %2158 = vmatprep.subr.mxu0 0.0
  %2159 = vmatpush1.msra.mxu0 0.0
  %2160 = vmatprep.subr.mxu0 0.0
  %2161 = vmatpush1.msra.mxu0 %v2132
  %2162 = vmatprep.subr.mxu0 0.0
  %2163 = vmatpush1.msra.mxu0 %v2131
  %2164 = vmatprep.subr.mxu0 0.0
  %2165 = vmatpush1.msra.mxu0 %v2130
  %2166 = vmatprep.subr.mxu0 0.0
  %2167 = vmatpush1.msra.mxu0 %v2129
  %2168 = vmatprep.subr.mxu0 0.0
  %2169 = vmatpush1.msra.mxu0 %v2128
  %2170 = vmatprep.subr.mxu0 0.0
  %2171 = vmatpush1.msra.mxu0 %v2127
  %2172 = vmatprep.subr.mxu0 0.0
  %2173 = vmatpush1.msra.mxu0 %v2126
  %2174 = vmatprep.subr.mxu0 0.0
  %2175 = vmatpush1.msra.mxu0 %v2125
  %2176 = vmatprep.subr.mxu0 0.0
  %2177 = vmatpush2.msra.mxu0 0.0
  %2178 = vmatprep.subr.mxu0 0.0
  %2179 = vmatpush2.msra.mxu0 0.0
  %2180 = vmatprep.subr.mxu0 0.0
  %2181 = vmatpush2.msra.mxu0 0.0
  %2182 = vmatprep.subr.mxu0 0.0
  %2183 = vmatpush2.msra.mxu0 0.0
  %2184 = vmatprep.subr.mxu0 0.0
  %2185 = vmatpush2.msra.mxu0 0.0
  %2186 = vmatprep.subr.mxu0 0.0
  %2187 = vmatpush2.msra.mxu0 0.0
  %2188 = vmatprep.subr.mxu0 0.0
  %2189 = vmatpush2.msra.mxu0 0.0
  %2190 = vmatprep.subr.mxu0 0.0
  %2191 = vmatpush2.msra.mxu0 0.0
  %2192 = vmatprep.subr.mxu0 0.0
  %2193 = vmatpush2.msra.mxu0 0.0
  %2194 = vmatprep.subr.mxu0 0.0
  %2195 = vmatpush2.msra.mxu0 0.0
  %2196 = vmatprep.subr.mxu0 0.0
  %2197 = vmatpush2.msra.mxu0 0.0
  %2198 = vmatprep.subr.mxu0 0.0
  %2199 = vmatpush2.msra.mxu0 0.0
  %2200 = vmatprep.subr.mxu0 0.0
  %2201 = vmatpush2.msra.mxu0 0.0
  %2202 = vmatprep.subr.mxu0 0.0
  %2203 = vmatpush2.msra.mxu0 0.0
  %2204 = vmatprep.subr.mxu0 0.0
  %2205 = vmatpush2.msra.mxu0 0.0
  %2206 = vmatprep.subr.mxu0 0.0
  %2207 = vmatpush2.msra.mxu0 0.0
  %2208 = vmatprep.mubr.f32.mxu0 0.0
  %2209 = vmatmul.mubr.f32.gmra.mxu0 %v2142
  %v2210 = vpop.f32.mrf.mxu0
  %v2211 = vadd.f32 %v2138, %v2210
  %v2212 = vpop.f32.mrf.mxu0
  %2213 = vdwg.mxu0
  %vm2214 = vcmask 31744
  %2215 = vst.msk [vmem:[%s13] sm:$0xff] %vm2214, %v2211
  // Predicated region
  $region54: #{tpu_custom_call.1} parent=0 // pred_check
    _
  $region55: #{tpu_custom_call.1} parent=0 // pred_check_branch
    %2217 = sbr.rel (0) target = $region57
  $region56: #{tpu_custom_call.1} parent=0 // pred_region
    _
  $region57: #{tpu_custom_call.1} parent=0 // pred_fallthru
    _
  // Predicated region
  $region58: #{tpu_custom_call.1} parent=0 // pred_check
    _
  $region59: #{tpu_custom_call.1} parent=0 // pred_check_branch
    %2219 = sbr.rel (0) target = $region61
  $region60: #{tpu_custom_call.1} parent=0 // pred_region
    _
  $region61: #{tpu_custom_call.1} parent=0 // pred_fallthru
    _

</llo_original>
